<compile_context>
chip_gen: v7x
topology: tpu7x:2x2x1
jax: 0.10.0
libtpu: 0.0.40
codegen_flags: <defaults>
</compile_context>

<pallas_src>
import functools

import jax
import jax.numpy as jnp
from jax.experimental import pallas as pl
from jax.experimental.pallas import tpu as pltpu

_PAD = 128  # lane-dense padding for narrow head outputs


# ---------------------------------------------------------------------------
# in-kernel helpers (pure value functions)
# ---------------------------------------------------------------------------
def _mxu(a, b):
    """bf16 MXU matmul with f32 accumulation (elementwise epilogues stay f32)."""
    return jnp.dot(a.astype(jnp.bfloat16), b.astype(jnp.bfloat16),
                   preferred_element_type=jnp.float32)


def _conv3_relu(x, sm1, sp1, w_flat, b):
    """Conv1d(k=3, padding=1) + ReLU on (B*T, C) rows as one deep-K matmul.

    sm1/sp1 are constant shift matrices encoding zero padding and batch boundaries.
    w_flat is (3C, C) with row ordering (tap k, cin) matching the concat below.
    """
    x_m1 = _mxu(sm1, x)                              # row i <- x[t-1] (0 at t==0)
    x_p1 = _mxu(sp1, x)                              # row i <- x[t+1] (0 at t==T-1)
    xcat = jnp.concatenate([x_m1, x, x_p1], axis=1)  # (B*T, 3C)
    return jnp.maximum(_mxu(xcat, w_flat) + b, 0.0)


# ---------------------------------------------------------------------------
# Pallas kernels
# ---------------------------------------------------------------------------
def _backbone_kernel(x_ref, sm1_ref, sp1_ref,
                     fw0_ref, fb0_ref, fw1_ref, fb1_ref,
                     tw0_ref, tb0_ref, tw1_ref, tb1_ref,
                     feat_ref, tem_ref):
    sm1 = sm1_ref[...]
    sp1 = sp1_ref[...]
    # ---- Feature module (temporal enhance) ----
    # TODO(synk): feature_module source not provided; modeled as 1x1 conv + ReLU then
    # a k=3 conv + ReLU projecting in_channels -> 256.
    f0 = jnp.maximum(_mxu(x_ref[...], fw0_ref[...]) + fb0_ref[...], 0.0)
    feat = _conv3_relu(f0, sm1, sp1, fw1_ref[...], fb1_ref[...])       # (B*T, 256)
    feat_ref[...] = feat
    # ---- Temporal evaluation module ----
    t = _conv3_relu(feat, sm1, sp1, tw0_ref[...], tb0_ref[...])        # grouped conv (block-diag dense)
    tem_ref[...] = jax.nn.sigmoid(_mxu(t, tw1_ref[...]) + tb1_ref[...])  # (B*T, 128) slab, cols 0:2 valid


def _stage_kernel(feat_ref, smat_ref, sm1_ref, sp1_ref,
                  sw_ref, sb_ref, pw1_ref, pb1_ref, pwo_ref, pbo_ref,
                  out_ref):
    x = feat_ref[...]                                                  # (B*T, C)
    # residual grouped conv: x + relu(conv3(x))
    xs = x + _conv3_relu(x, sm1_ref[...], sp1_ref[...], sw_ref[...], sb_ref[...])
    # ROI sampling for all (ratio, batch, proposal) rows in ONE matmul
    samp = _mxu(smat_ref[...], xs)                                     # (R*B*N, C)
    bn = out_ref.shape[0]                                              # B*N
    r_size = samp.shape[0] // bn
    # regroup R sample points onto the lane axis -> ONE deep-K matmul against w1
    sc = jnp.concatenate([samp[r * bn:(r + 1) * bn, :] for r in range(r_size)],
                         axis=1)                                       # (B*N, R*C)
    h = jnp.maximum(_mxu(sc, pw1_ref[...]) + pb1_ref[...], 0.0)        # (B*N, H)
    out = _mxu(h, pwo_ref[...]) + pbo_ref[...]                         # (B*N, 128) slab
    col = jax.lax.broadcasted_iota(jnp.int32, out.shape, 1)
    out_ref[...] = jnp.where(col == 0, jax.nn.sigmoid(out), out)       # col0=IoU, col1:3=reg


# ---------------------------------------------------------------------------
# pallas_call wrappers
# ---------------------------------------------------------------------------
def _vmem_specs(n):
    return [pl.BlockSpec(memory_space=pltpu.MemorySpace.VMEM) for _ in range(n)]


def backbone_forward(x_flat, sm1, sp1, p):
    bt = x_flat.shape[0]
    c = p["feat_b0"].shape[1]
    return pl.pallas_call(
        _backbone_kernel,
        out_shape=(jax.ShapeDtypeStruct((bt, c), jnp.float32),
                   jax.ShapeDtypeStruct((bt, _PAD), jnp.float32)),
        in_specs=_vmem_specs(11),
        out_specs=(pl.BlockSpec(memory_space=pltpu.MemorySpace.VMEM),
                   pl.BlockSpec(memory_space=pltpu.MemorySpace.VMEM)),
    )(x_flat, sm1, sp1,
      p["feat_w0"], p["feat_b0"], p["feat_w1"], p["feat_b1"],
      p["tem_w0"], p["tem_b0"], p["tem_w1p"], p["tem_b1p"])


def stage_forward(feat, smat, sm1, sp1, sw, sb, pw1, pb1, pwo, pbo, n_prop_rows):
    return pl.pallas_call(
        _stage_kernel,
        out_shape=jax.ShapeDtypeStruct((n_prop_rows, _PAD), jnp.float32),
        in_specs=_vmem_specs(10),
        out_specs=pl.BlockSpec(memory_space=pltpu.MemorySpace.VMEM),
    )(feat, smat, sm1, sp1, sw, sb, pw1, pb1, pwo, pbo)


# ---------------------------------------------------------------------------
# plain-JAX glue (tiny, fused by jit between kernel launches)
# ---------------------------------------------------------------------------
def build_shift_matrices(batch, tscale, dtype=jnp.float32):
    """S_m1 @ x gives x[t-1] (0 at t=0); S_p1 @ x gives x[t+1] (0 at t=T-1), per batch."""
    n = batch * tscale
    idx = jnp.arange(n)
    keep_m1 = ((idx % tscale) >= 1).astype(dtype)[:, None]
    keep_p1 = ((idx % tscale) <= tscale - 2).astype(dtype)[:, None]
    sm1 = jnp.eye(n, k=-1, dtype=dtype) * keep_m1
    sp1 = jnp.eye(n, k=1, dtype=dtype) * keep_p1
    return sm1, sp1


def build_sampling_matrix(anchors, tscale, roi_size):
    # TODO(synk): pem_module source not provided; ROI linear-interp sampling is expressed
    # as a dense batch-block-diagonal matrix so the gather becomes one MXU matmul.
    B, N, _ = anchors.shape
    s = anchors[..., 0] * (tscale - 1.0)                    # (B, N)
    e = anchors[..., 1] * (tscale - 1.0)
    ratio = jnp.linspace(0.0, 1.0, roi_size)                # (R,)
    pos = s[None] + ratio[:, None, None] * (e - s)[None]    # (R, B, N)
    lo = jnp.floor(pos)
    frac = pos - lo
    lo_i = jnp.clip(lo.astype(jnp.int32), 0, tscale - 1)
    hi_i = jnp.clip(lo_i + 1, 0, tscale - 1)
    w_t = ((1.0 - frac)[..., None] * jax.nn.one_hot(lo_i, tscale, dtype=jnp.float32)
           + frac[..., None] * jax.nn.one_hot(hi_i, tscale, dtype=jnp.float32))  # (R,B,N,T)
    eye_b = jnp.eye(B, dtype=jnp.float32)
    smat = jnp.einsum("rbnt,bc->rbnct", w_t, eye_b)         # batch-block-diagonal
    return smat.reshape(roi_size * B * N, B * tscale)       # rows: (r, b, n); cols: (b, t)


def reg_to_anchors(anchors, reg):
    # TODO(synk): reg_to_anchors source not provided; standard center/width decode used.
    xc = 0.5 * (anchors[..., 0] + anchors[..., 1])
    w = jnp.maximum(anchors[..., 1] - anchors[..., 0], 1e-4)
    xc2 = xc + reg[..., 0] * w
    w2 = w * jnp.exp(reg[..., 1])
    new = jnp.stack([xc2 - 0.5 * w2, xc2 + 0.5 * w2], axis=-1)
    return jnp.clip(new, 0.0, 1.0)


@functools.partial(jax.jit, static_argnames=("roi_size", "stage_num"))
def detector_forward(params, x_nct, anchors, *, roi_size, stage_num):
    B, _, T = x_nct.shape
    N = anchors.shape[1]
    x_flat = jnp.transpose(x_nct, (0, 2, 1)).reshape(B * T, -1).astype(jnp.float32)
    sm1, sp1 = build_shift_matrices(B, T)

    feat, tem_pad = backbone_forward(x_flat, sm1, sp1, params)
    tem_out = jnp.transpose(tem_pad[:, :2].reshape(B, T, 2), (0, 2, 1))   # (B, 2, T)

    stage_out = []
    for i in range(stage_num):
        smat = build_sampling_matrix(anchors, T, roi_size)
        out_pad = stage_forward(feat, smat, sm1, sp1,
                                params["stage_w"][i], params["stage_b"][i],
                                params["pem_w1"][i], params["pem_b1"][i],
                                params["pem_wop"][i], params["pem_bop"][i],
                                B * N)
        iou = out_pad[:, 0].reshape(B, N)
        reg = out_pad[:, 1:3].reshape(B, N, 2)
        stage_out.append((anchors, iou, reg))
        anchors = reg_to_anchors(anchors, reg)
    return tem_out, stage_out


# ---------------------------------------------------------------------------
# deterministic parameter init (Xavier-uniform-like, synthetic)
# ---------------------------------------------------------------------------
def _xavier(key, shape, fan_in, fan_out):
    bound = float((6.0 / (fan_in + fan_out)) ** 0.5)
    return jax.random.uniform(key, shape, jnp.float32, -bound, bound)


def _grouped_conv3_flat(key, channels, groups):
    gc = channels // groups
    wg = _xavier(key, (groups, 3, gc, gc), fan_in=gc * 3, fan_out=gc * 3)
    dense = jnp.zeros((3, channels, channels), jnp.float32)
    for g in range(groups):
        dense = dense.at[:, g * gc:(g + 1) * gc, g * gc:(g + 1) * gc].set(wg[g])
    return dense.reshape(3 * channels, channels)            # rows: (tap k, cin); cols: cout


def init_params(key, in_channels, roi_size, stage_num, hidden=128, channels=256):
    keys = jax.random.split(key, 8 + 4 * stage_num)
    p = {}
    p["feat_w0"] = _xavier(keys[0], (in_channels, channels), in_channels, channels)
    p["feat_b0"] = jnp.zeros((1, channels), jnp.float32)
    p["feat_w1"] = _xavier(keys[1], (3 * channels, channels), channels * 3, channels)
    p["feat_b1"] = jnp.zeros((1, channels), jnp.float32)
    p["tem_w0"] = _grouped_conv3_flat(keys[2], channels, groups=4)
    p["tem_b0"] = jnp.zeros((1, channels), jnp.float32)
    tem_w1 = _xavier(keys[3], (channels, 2), channels, 2)
    p["tem_w1p"] = jnp.zeros((channels, _PAD), jnp.float32).at[:, :2].set(tem_w1)
    p["tem_b1p"] = jnp.zeros((1, _PAD), jnp.float32)
    p["stage_w"], p["stage_b"] = [], []
    p["pem_w1"], p["pem_b1"], p["pem_wop"], p["pem_bop"] = [], [], [], []
    for i in range(stage_num):
        k = keys[4 + 4 * i: 8 + 4 * i]
        p["stage_w"].append(_grouped_conv3_flat(k[0], channels, groups=4))
        p["stage_b"].append(jnp.zeros((1, channels), jnp.float32))
        p["pem_w1"].append(_xavier(k[1], (roi_size * channels, hidden),
                                   roi_size * channels, hidden))
        p["pem_b1"].append(jnp.zeros((1, hidden), jnp.float32))
        wo = _xavier(k[2], (hidden, 3), hidden, 3)
        p["pem_wop"].append(jnp.zeros((hidden, _PAD), jnp.float32).at[:, :3].set(wo))
        p["pem_bop"].append(jnp.zeros((1, _PAD), jnp.float32))
    return p


if __name__ == "__main__":
    B, in_channels, T = 2, 32, 32          # cfg.MODEL.in_channels=32, cfg.DATASET.tscale=32
    roi_size, stage_num, n_anchors = 8, 2, 16

    key = jax.random.PRNGKey(0)
    k_param, k_x = jax.random.split(key)
    params = init_params(k_param, in_channels, roi_size, stage_num)

    # PyTorch-convention input: (B, C_in, T)
    x = jax.random.normal(k_x, (B, in_channels, T), jnp.float32)
    starts = jnp.linspace(0.05, 0.55, n_anchors, dtype=jnp.float32)
    lengths = jnp.linspace(0.15, 0.35, n_anchors, dtype=jnp.float32)
    anchors = jnp.stack([starts, jnp.clip(starts + lengths, 0.0, 1.0)], axis=-1)
    anchors = jnp.broadcast_to(anchors[None], (B, n_anchors, 2))

    tem_out, stage_out = detector_forward(params, x, anchors,
                                          roi_size=roi_size, stage_num=stage_num)
    jax.block_until_ready(tem_out)
    for a, iou, reg in stage_out:
        jax.block_until_ready((a, iou, reg))

    assert tem_out.shape == (B, 2, T)
    assert stage_out[0][1].shape == (B, n_anchors)
    assert stage_out[0][2].shape == (B, n_anchors, 2)
    print("KERNEL_OK")
</pallas_src>

<mosaic_0001>
module attributes {stable_mosaic.version = 11 : i64} {
  func.func @_backbone_kernel(%arg0: memref<64x32xf32, #tpu.memory_space<vmem>>, %arg1: memref<64x64xf32, #tpu.memory_space<vmem>>, %arg2: memref<64x64xf32, #tpu.memory_space<vmem>>, %arg3: memref<32x256xf32, #tpu.memory_space<vmem>>, %arg4: memref<1x256xf32, #tpu.memory_space<vmem>>, %arg5: memref<768x256xf32, #tpu.memory_space<vmem>>, %arg6: memref<1x256xf32, #tpu.memory_space<vmem>>, %arg7: memref<768x256xf32, #tpu.memory_space<vmem>>, %arg8: memref<1x256xf32, #tpu.memory_space<vmem>>, %arg9: memref<256x128xf32, #tpu.memory_space<vmem>>, %arg10: memref<1x128xf32, #tpu.memory_space<vmem>>, %arg11: memref<64x256xf32, #tpu.memory_space<vmem>>, %arg12: memref<64x128xf32, #tpu.memory_space<vmem>>) attributes {dimension_semantics = [], scalar_prefetch = 0 : i64, scratch_operands = 0 : i64, tpu.core_type = #tpu.core_type<tc>} {
    %c0 = arith.constant 0 : index
    %c0_0 = arith.constant 0 : index
    %0 = vector.load %arg1[%c0, %c0_0] : memref<64x64xf32, #tpu.memory_space<vmem>>, vector<64x64xf32>
    %c0_1 = arith.constant 0 : index
    %c0_2 = arith.constant 0 : index
    %1 = vector.load %arg2[%c0_1, %c0_2] : memref<64x64xf32, #tpu.memory_space<vmem>>, vector<64x64xf32>
    %c0_3 = arith.constant 0 : index
    %c0_4 = arith.constant 0 : index
    %2 = vector.load %arg0[%c0_3, %c0_4] : memref<64x32xf32, #tpu.memory_space<vmem>>, vector<64x32xf32>
    %c0_5 = arith.constant 0 : index
    %c0_6 = arith.constant 0 : index
    %3 = vector.load %arg3[%c0_5, %c0_6] : memref<32x256xf32, #tpu.memory_space<vmem>>, vector<32x256xf32>
    %4 = arith.truncf %2 : vector<64x32xf32> to vector<64x32xbf16>
    %5 = arith.truncf %3 : vector<32x256xf32> to vector<32x256xbf16>
    %cst = arith.constant dense<0.000000e+00> : vector<64x256xf32>
    %6 = tpu.matmul %4, %5, %cst {dimension_numbers = #tpu.dot_dimension_numbers<[1], [0], [0], [1], [0, 0, 1, 1], [], []>} : vector<64x32xbf16>, vector<32x256xbf16>, vector<64x256xf32> -> vector<64x256xf32>
    %c0_7 = arith.constant 0 : index
    %c0_8 = arith.constant 0 : index
    %7 = vector.load %arg4[%c0_7, %c0_8] : memref<1x256xf32, #tpu.memory_space<vmem>>, vector<1x256xf32>
    %8 = vector.broadcast %7 : vector<1x256xf32> to vector<64x256xf32>
    %9 = arith.addf %6, %8 : vector<64x256xf32>
    %cst_9 = arith.constant 0.000000e+00 : f32
    %10 = vector.broadcast %cst_9 : f32 to vector<64x256xf32>
    %11 = arith.maximumf %9, %10 : vector<64x256xf32>
    %c0_10 = arith.constant 0 : index
    %c0_11 = arith.constant 0 : index
    %12 = vector.load %arg5[%c0_10, %c0_11] : memref<768x256xf32, #tpu.memory_space<vmem>>, vector<768x256xf32>
    %c0_12 = arith.constant 0 : index
    %c0_13 = arith.constant 0 : index
    %13 = vector.load %arg6[%c0_12, %c0_13] : memref<1x256xf32, #tpu.memory_space<vmem>>, vector<1x256xf32>
    %14 = arith.truncf %0 : vector<64x64xf32> to vector<64x64xbf16>
    %15 = arith.truncf %11 : vector<64x256xf32> to vector<64x256xbf16>
    %cst_14 = arith.constant dense<0.000000e+00> : vector<64x256xf32>
    %16 = tpu.matmul %14, %15, %cst_14 {dimension_numbers = #tpu.dot_dimension_numbers<[1], [0], [0], [1], [0, 0, 1, 1], [], []>} : vector<64x64xbf16>, vector<64x256xbf16>, vector<64x256xf32> -> vector<64x256xf32>
    %17 = arith.truncf %1 : vector<64x64xf32> to vector<64x64xbf16>
    %18 = arith.truncf %11 : vector<64x256xf32> to vector<64x256xbf16>
    %cst_15 = arith.constant dense<0.000000e+00> : vector<64x256xf32>
    %19 = tpu.matmul %17, %18, %cst_15 {dimension_numbers = #tpu.dot_dimension_numbers<[1], [0], [0], [1], [0, 0, 1, 1], [], []>} : vector<64x64xbf16>, vector<64x256xbf16>, vector<64x256xf32> -> vector<64x256xf32>
    %20 = tpu.concatenate %16, %11, %19 in 1 : vector<64x256xf32>, vector<64x256xf32>, vector<64x256xf32> -> vector<64x768xf32>
    %21 = arith.truncf %20 : vector<64x768xf32> to vector<64x768xbf16>
    %22 = arith.truncf %12 : vector<768x256xf32> to vector<768x256xbf16>
    %cst_16 = arith.constant dense<0.000000e+00> : vector<64x256xf32>
    %23 = tpu.matmul %21, %22, %cst_16 {dimension_numbers = #tpu.dot_dimension_numbers<[1], [0], [0], [1], [0, 0, 1, 1], [], []>} : vector<64x768xbf16>, vector<768x256xbf16>, vector<64x256xf32> -> vector<64x256xf32>
    %24 = vector.broadcast %13 : vector<1x256xf32> to vector<64x256xf32>
    %25 = arith.addf %23, %24 : vector<64x256xf32>
    %cst_17 = arith.constant 0.000000e+00 : f32
    %26 = vector.broadcast %cst_17 : f32 to vector<64x256xf32>
    %27 = arith.maximumf %25, %26 : vector<64x256xf32>
    %c0_18 = arith.constant 0 : index
    %c0_19 = arith.constant 0 : index
    %28 = vector.load %arg11[%c0_18, %c0_19] : memref<64x256xf32, #tpu.memory_space<vmem>>, vector<64x256xf32>
    tpu.vector_store %arg11[%c0_18, %c0_19], %27 {strides = array<i32>} : memref<64x256xf32, #tpu.memory_space<vmem>>, vector<64x256xf32>,
    %c0_20 = arith.constant 0 : index
    %c0_21 = arith.constant 0 : index
    %29 = vector.load %arg7[%c0_20, %c0_21] : memref<768x256xf32, #tpu.memory_space<vmem>>, vector<768x256xf32>
    %c0_22 = arith.constant 0 : index
    %c0_23 = arith.constant 0 : index
    %30 = vector.load %arg8[%c0_22, %c0_23] : memref<1x256xf32, #tpu.memory_space<vmem>>, vector<1x256xf32>
    %31 = arith.truncf %0 : vector<64x64xf32> to vector<64x64xbf16>
    %32 = arith.truncf %27 : vector<64x256xf32> to vector<64x256xbf16>
    %cst_24 = arith.constant dense<0.000000e+00> : vector<64x256xf32>
    %33 = tpu.matmul %31, %32, %cst_24 {dimension_numbers = #tpu.dot_dimension_numbers<[1], [0], [0], [1], [0, 0, 1, 1], [], []>} : vector<64x64xbf16>, vector<64x256xbf16>, vector<64x256xf32> -> vector<64x256xf32>
    %34 = arith.truncf %1 : vector<64x64xf32> to vector<64x64xbf16>
    %35 = arith.truncf %27 : vector<64x256xf32> to vector<64x256xbf16>
    %cst_25 = arith.constant dense<0.000000e+00> : vector<64x256xf32>
    %36 = tpu.matmul %34, %35, %cst_25 {dimension_numbers = #tpu.dot_dimension_numbers<[1], [0], [0], [1], [0, 0, 1, 1], [], []>} : vector<64x64xbf16>, vector<64x256xbf16>, vector<64x256xf32> -> vector<64x256xf32>
    %37 = tpu.concatenate %33, %27, %36 in 1 : vector<64x256xf32>, vector<64x256xf32>, vector<64x256xf32> -> vector<64x768xf32>
    %38 = arith.truncf %37 : vector<64x768xf32> to vector<64x768xbf16>
    %39 = arith.truncf %29 : vector<768x256xf32> to vector<768x256xbf16>
    %cst_26 = arith.constant dense<0.000000e+00> : vector<64x256xf32>
    %40 = tpu.matmul %38, %39, %cst_26 {dimension_numbers = #tpu.dot_dimension_numbers<[1], [0], [0], [1], [0, 0, 1, 1], [], []>} : vector<64x768xbf16>, vector<768x256xbf16>, vector<64x256xf32> -> vector<64x256xf32>
    %41 = vector.broadcast %30 : vector<1x256xf32> to vector<64x256xf32>
    %42 = arith.addf %40, %41 : vector<64x256xf32>
    %cst_27 = arith.constant 0.000000e+00 : f32
    %43 = vector.broadcast %cst_27 : f32 to vector<64x256xf32>
    %44 = arith.maximumf %42, %43 : vector<64x256xf32>
    %c0_28 = arith.constant 0 : index
    %c0_29 = arith.constant 0 : index
    %45 = vector.load %arg9[%c0_28, %c0_29] : memref<256x128xf32, #tpu.memory_space<vmem>>, vector<256x128xf32>
    %46 = arith.truncf %44 : vector<64x256xf32> to vector<64x256xbf16>
    %47 = arith.truncf %45 : vector<256x128xf32> to vector<256x128xbf16>
    %cst_30 = arith.constant dense<0.000000e+00> : vector<64x128xf32>
    %48 = tpu.matmul %46, %47, %cst_30 {dimension_numbers = #tpu.dot_dimension_numbers<[1], [0], [0], [1], [0, 0, 1, 1], [], []>} : vector<64x256xbf16>, vector<256x128xbf16>, vector<64x128xf32> -> vector<64x128xf32>
    %c0_31 = arith.constant 0 : index
    %c0_32 = arith.constant 0 : index
    %49 = vector.load %arg10[%c0_31, %c0_32] : memref<1x128xf32, #tpu.memory_space<vmem>>, vector<1x128xf32>
    %50 = vector.broadcast %49 : vector<1x128xf32> to vector<64x128xf32>
    %51 = arith.addf %48, %50 : vector<64x128xf32>
    %52 = arith.negf %51 : vector<64x128xf32>
    %53 = math.exp %52 : vector<64x128xf32>
    %cst_33 = arith.constant 1.000000e+00 : f32
    %54 = vector.broadcast %cst_33 : f32 to vector<64x128xf32>
    %55 = arith.addf %54, %53 : vector<64x128xf32>
    %56 = arith.divf %54, %55 : vector<64x128xf32>
    %c0_34 = arith.constant 0 : index
    %c0_35 = arith.constant 0 : index
    %57 = vector.load %arg12[%c0_34, %c0_35] : memref<64x128xf32, #tpu.memory_space<vmem>>, vector<64x128xf32>
    tpu.vector_store %arg12[%c0_34, %c0_35], %56 {strides = array<i32>} : memref<64x128xf32, #tpu.memory_space<vmem>>, vector<64x128xf32>,
    return
  }
}

module attributes {stable_mosaic.version = 11 : i64} {
  func.func @_stage_kernel(%arg0: memref<64x256xf32, #tpu.memory_space<vmem>>, %arg1: memref<256x64xf32, #tpu.memory_space<vmem>>, %arg2: memref<64x64xf32, #tpu.memory_space<vmem>>, %arg3: memref<64x64xf32, #tpu.memory_space<vmem>>, %arg4: memref<768x256xf32, #tpu.memory_space<vmem>>, %arg5: memref<1x256xf32, #tpu.memory_space<vmem>>, %arg6: memref<2048x128xf32, #tpu.memory_space<vmem>>, %arg7: memref<1x128xf32, #tpu.memory_space<vmem>>, %arg8: memref<128x128xf32, #tpu.memory_space<vmem>>, %arg9: memref<1x128xf32, #tpu.memory_space<vmem>>, %arg10: memref<32x128xf32, #tpu.memory_space<vmem>>) attributes {dimension_semantics = [], scalar_prefetch = 0 : i64, scratch_operands = 0 : i64, tpu.core_type = #tpu.core_type<tc>} {
    %c0 = arith.constant 0 : index
    %c0_0 = arith.constant 0 : index
    %0 = vector.load %arg0[%c0, %c0_0] : memref<64x256xf32, #tpu.memory_space<vmem>>, vector<64x256xf32>
    %c0_1 = arith.constant 0 : index
    %c0_2 = arith.constant 0 : index
    %1 = vector.load %arg2[%c0_1, %c0_2] : memref<64x64xf32, #tpu.memory_space<vmem>>, vector<64x64xf32>
    %c0_3 = arith.constant 0 : index
    %c0_4 = arith.constant 0 : index
    %2 = vector.load %arg3[%c0_3, %c0_4] : memref<64x64xf32, #tpu.memory_space<vmem>>, vector<64x64xf32>
    %c0_5 = arith.constant 0 : index
    %c0_6 = arith.constant 0 : index
    %3 = vector.load %arg4[%c0_5, %c0_6] : memref<768x256xf32, #tpu.memory_space<vmem>>, vector<768x256xf32>
    %c0_7 = arith.constant 0 : index
    %c0_8 = arith.constant 0 : index
    %4 = vector.load %arg5[%c0_7, %c0_8] : memref<1x256xf32, #tpu.memory_space<vmem>>, vector<1x256xf32>
    %5 = arith.truncf %1 : vector<64x64xf32> to vector<64x64xbf16>
    %6 = arith.truncf %0 : vector<64x256xf32> to vector<64x256xbf16>
    %cst = arith.constant dense<0.000000e+00> : vector<64x256xf32>
    %7 = tpu.matmul %5, %6, %cst {dimension_numbers = #tpu.dot_dimension_numbers<[1], [0], [0], [1], [0, 0, 1, 1], [], []>} : vector<64x64xbf16>, vector<64x256xbf16>, vector<64x256xf32> -> vector<64x256xf32>
    %8 = arith.truncf %2 : vector<64x64xf32> to vector<64x64xbf16>
    %9 = arith.truncf %0 : vector<64x256xf32> to vector<64x256xbf16>
    %cst_9 = arith.constant dense<0.000000e+00> : vector<64x256xf32>
    %10 = tpu.matmul %8, %9, %cst_9 {dimension_numbers = #tpu.dot_dimension_numbers<[1], [0], [0], [1], [0, 0, 1, 1], [], []>} : vector<64x64xbf16>, vector<64x256xbf16>, vector<64x256xf32> -> vector<64x256xf32>
    %11 = tpu.concatenate %7, %0, %10 in 1 : vector<64x256xf32>, vector<64x256xf32>, vector<64x256xf32> -> vector<64x768xf32>
    %12 = arith.truncf %11 : vector<64x768xf32> to vector<64x768xbf16>
    %13 = arith.truncf %3 : vector<768x256xf32> to vector<768x256xbf16>
    %cst_10 = arith.constant dense<0.000000e+00> : vector<64x256xf32>
    %14 = tpu.matmul %12, %13, %cst_10 {dimension_numbers = #tpu.dot_dimension_numbers<[1], [0], [0], [1], [0, 0, 1, 1], [], []>} : vector<64x768xbf16>, vector<768x256xbf16>, vector<64x256xf32> -> vector<64x256xf32>
    %15 = vector.broadcast %4 : vector<1x256xf32> to vector<64x256xf32>
    %16 = arith.addf %14, %15 : vector<64x256xf32>
    %cst_11 = arith.constant 0.000000e+00 : f32
    %17 = vector.broadcast %cst_11 : f32 to vector<64x256xf32>
    %18 = arith.maximumf %16, %17 : vector<64x256xf32>
    %19 = arith.addf %0, %18 : vector<64x256xf32>
    %c0_12 = arith.constant 0 : index
    %c0_13 = arith.constant 0 : index
    %20 = vector.load %arg1[%c0_12, %c0_13] : memref<256x64xf32, #tpu.memory_space<vmem>>, vector<256x64xf32>
    %21 = arith.truncf %20 : vector<256x64xf32> to vector<256x64xbf16>
    %22 = arith.truncf %19 : vector<64x256xf32> to vector<64x256xbf16>
    %cst_14 = arith.constant dense<0.000000e+00> : vector<256x256xf32>
    %23 = tpu.matmul %21, %22, %cst_14 {dimension_numbers = #tpu.dot_dimension_numbers<[1], [0], [0], [1], [0, 0, 1, 1], [], []>} : vector<256x64xbf16>, vector<64x256xbf16>, vector<256x256xf32> -> vector<256x256xf32>
    %24 = vector.extract_strided_slice %23 {offsets = [0, 0], sizes = [32, 256], strides = [1, 1]} : vector<256x256xf32> to vector<32x256xf32>
    %25 = vector.extract_strided_slice %23 {offsets = [32, 0], sizes = [32, 256], strides = [1, 1]} : vector<256x256xf32> to vector<32x256xf32>
    %26 = vector.extract_strided_slice %23 {offsets = [64, 0], sizes = [32, 256], strides = [1, 1]} : vector<256x256xf32> to vector<32x256xf32>
    %27 = vector.extract_strided_slice %23 {offsets = [96, 0], sizes = [32, 256], strides = [1, 1]} : vector<256x256xf32> to vector<32x256xf32>
    %28 = vector.extract_strided_slice %23 {offsets = [128, 0], sizes = [32, 256], strides = [1, 1]} : vector<256x256xf32> to vector<32x256xf32>
    %29 = vector.extract_strided_slice %23 {offsets = [160, 0], sizes = [32, 256], strides = [1, 1]} : vector<256x256xf32> to vector<32x256xf32>
    %30 = vector.extract_strided_slice %23 {offsets = [192, 0], sizes = [32, 256], strides = [1, 1]} : vector<256x256xf32> to vector<32x256xf32>
    %31 = vector.extract_strided_slice %23 {offsets = [224, 0], sizes = [32, 256], strides = [1, 1]} : vector<256x256xf32> to vector<32x256xf32>
    %32 = tpu.concatenate %24, %25, %26, %27, %28, %29, %30, %31 in 1 : vector<32x256xf32>, vector<32x256xf32>, vector<32x256xf32>, vector<32x256xf32>, vector<32x256xf32>, vector<32x256xf32>, vector<32x256xf32>, vector<32x256xf32> -> vector<32x2048xf32>
    %c0_15 = arith.constant 0 : index
    %c0_16 = arith.constant 0 : index
    %33 = vector.load %arg6[%c0_15, %c0_16] : memref<2048x128xf32, #tpu.memory_space<vmem>>, vector<2048x128xf32>
    %34 = arith.truncf %32 : vector<32x2048xf32> to vector<32x2048xbf16>
    %35 = arith.truncf %33 : vector<2048x128xf32> to vector<2048x128xbf16>
    %cst_17 = arith.constant dense<0.000000e+00> : vector<32x128xf32>
    %36 = tpu.matmul %34, %35, %cst_17 {dimension_numbers = #tpu.dot_dimension_numbers<[1], [0], [0], [1], [0, 0, 1, 1], [], []>} : vector<32x2048xbf16>, vector<2048x128xbf16>, vector<32x128xf32> -> vector<32x128xf32>
    %c0_18 = arith.constant 0 : index
    %c0_19 = arith.constant 0 : index
    %37 = vector.load %arg7[%c0_18, %c0_19] : memref<1x128xf32, #tpu.memory_space<vmem>>, vector<1x128xf32>
    %38 = vector.broadcast %37 : vector<1x128xf32> to vector<32x128xf32>
    %39 = arith.addf %36, %38 : vector<32x128xf32>
    %cst_20 = arith.constant 0.000000e+00 : f32
    %40 = vector.broadcast %cst_20 : f32 to vector<32x128xf32>
    %41 = arith.maximumf %39, %40 : vector<32x128xf32>
    %c0_21 = arith.constant 0 : index
    %c0_22 = arith.constant 0 : index
    %42 = vector.load %arg8[%c0_21, %c0_22] : memref<128x128xf32, #tpu.memory_space<vmem>>, vector<128x128xf32>
    %43 = arith.truncf %41 : vector<32x128xf32> to vector<32x128xbf16>
    %44 = arith.truncf %42 : vector<128x128xf32> to vector<128x128xbf16>
    %cst_23 = arith.constant dense<0.000000e+00> : vector<32x128xf32>
    %45 = tpu.matmul %43, %44, %cst_23 {dimension_numbers = #tpu.dot_dimension_numbers<[1], [0], [0], [1], [0, 0, 1, 1], [], []>} : vector<32x128xbf16>, vector<128x128xbf16>, vector<32x128xf32> -> vector<32x128xf32>
    %c0_24 = arith.constant 0 : index
    %c0_25 = arith.constant 0 : index
    %46 = vector.load %arg9[%c0_24, %c0_25] : memref<1x128xf32, #tpu.memory_space<vmem>>, vector<1x128xf32>
    %47 = vector.broadcast %46 : vector<1x128xf32> to vector<32x128xf32>
    %48 = arith.addf %45, %47 : vector<32x128xf32>
    %49 = tpu.iota {dimensions = array<i32: 1>} : vector<32x128xi32>
    %c0_i32 = arith.constant 0 : i32
    %50 = vector.broadcast %c0_i32 : i32 to vector<32x128xi32>
    %51 = arith.cmpi eq, %49, %50 : vector<32x128xi32>
    %52 = arith.negf %48 : vector<32x128xf32>
    %53 = math.exp %52 : vector<32x128xf32>
    %cst_26 = arith.constant 1.000000e+00 : f32
    %54 = vector.broadcast %cst_26 : f32 to vector<32x128xf32>
    %55 = arith.addf %54, %53 : vector<32x128xf32>
    %56 = arith.divf %54, %55 : vector<32x128xf32>
    %57 = arith.select %51, %56, %48 : vector<32x128xi1>, vector<32x128xf32>
    %c0_27 = arith.constant 0 : index
    %c0_28 = arith.constant 0 : index
    %58 = vector.load %arg10[%c0_27, %c0_28] : memref<32x128xf32, #tpu.memory_space<vmem>>, vector<32x128xf32>
    tpu.vector_store %arg10[%c0_27, %c0_28], %57 {strides = array<i32>} : memref<32x128xf32, #tpu.memory_space<vmem>>, vector<32x128xf32>,
    return
  }
}

</mosaic_0001>

<llo_original>
// kernel: squeeze.14
$region0: #{squeeze.14}
  %s0 = inlined_call_operand.vmem [shape: f32[32], index: 0, kind: input, shape index: {}]
  %s1 = inlined_call_operand.hbm [shape: f32[2,16], index: 1, kind: output, shape index: {}]
  $region1: #{squeeze.14} parent=0
    #allocation0 [shape = 'u8[1024]{0}', space=vmem, size = 0x400, scoped, tag = 'operand span for operand 1']
    #allocation1 [shape = 's32[1]{0}', space=sflag, size = 0x4, scoped, tag = 'scoped memory for squeeze.14']
    #allocation2 [shape = 'u8[4096]{0}', space=vmem, size = 0x1000, scoped, tag = 'scoped mem for output reshape']
    #allocation3 [shape = 'u8[4096]{0}', space=vmem, size = 0x1000, scoped, tag = 'scoped mem for input reshape']
    %2 = vsyncpa [#allocation1], 0
    %s4 = sshllo.u32 0, 1
    %v5 = vld [vmem:[%s0] sm:%s4]
    %6 = vst [vmem:[#allocation3] sm:%s4] %v5
    %v7 = vld [vmem:[#allocation3] sm:$0x1]
    %vm8 = vcmask 130048
    %9 = vst.msk [vmem:[#allocation2] sm:$0x1] %vm8, %v7
    %v10 = vld [vmem:[#allocation3] sm:$0x1]
    %11 = vrot.lane.b32.xlu0 %v10, 112
    %v12 = vpop.permute.xlu0 %11
    %vm13 = vcmask 130048
    %s14 = scalar_lea.vmem [#allocation2], 1
    %15 = vst.msk [vmem:[%s14] sm:$0x1] %vm13, %v12
    %s17 = sshllo.u32 0, 2
    %v19 = vld [vmem:[#allocation2] sm:%s17]
    %s20 = sshllo.u32 0, 2
    %21 = vst [vmem:[#allocation0] sm:%s20] %v19
    %s23 = ssub.s32 32, 32
    %24 = vsyncadd [#allocation1], %s23
    %s26 = sshll.u32 [#allocation0], 4
    %s27 = int_to_ptr.vmem [resolvable:$true] %s26
    %29 = dma.vmem_to_hbm [thread:$0]  %s27, 32, %s1, [#allocation1]
    %30 = dma.done [#allocation1], 32
    %31 = vsyncpa [#allocation1], 1

// kernel: detector_forward.3
$region0: #{detector_forward.3}
  #allocation0 [shape = 'u32[]', space=smem, size = 0x4, offset = 0x4, fixed_abs, tag = 'smem constant byte address 0x4 - core index']
  #allocation1 [shape = 'u32[144,128]{1,0:T(1,128)}', space=vmem, size = 0x12000, scoped, tag = 'internal scratch']
  %s0 = inlined_call_operand.vmem [shape: f32[64,32], index: 0, kind: input, shape index: {}]
  %s1 = inlined_call_operand.vmem [shape: f32[64,64], index: 1, kind: input, shape index: {}]
  %s2 = inlined_call_operand.vmem [shape: f32[64,64], index: 2, kind: input, shape index: {}]
  %s3 = inlined_call_operand.vmem [shape: f32[32,256], index: 3, kind: input, shape index: {}]
  %s4 = inlined_call_operand.vmem [shape: f32[1,256], index: 4, kind: input, shape index: {}]
  %s5 = inlined_call_operand.hbm [shape: f32[768,256], index: 5, kind: input, shape index: {}]
  %s6 = inlined_call_operand.vmem [shape: f32[1,256], index: 6, kind: input, shape index: {}]
  %s7 = inlined_call_operand.hbm [shape: f32[768,256], index: 7, kind: input, shape index: {}]
  %s8 = inlined_call_operand.vmem [shape: f32[1,256], index: 8, kind: input, shape index: {}]
  %s9 = inlined_call_operand.vmem [shape: f32[256,128], index: 9, kind: input, shape index: {}]
  %s10 = inlined_call_operand.vmem [shape: f32[1,128], index: 10, kind: input, shape index: {}]
  %s11 = inlined_call_operand.vmem [shape: f32[64,256], index: 11, kind: output, shape index: {0}]
  %s12 = inlined_call_operand.vmem [shape: f32[64,128], index: 12, kind: output, shape index: {1}]
  %13 = xla_tuple %s11, %s12
  %s14 = sld [smem:[#allocation0]]
  $region70: #{detector_forward.3} parent=0
    _
  %s16 = ssub.s32 1, %s14
  %s17 = scalar_select 0, %s16, %s14
  $region1: #{detector_forward.3} parent=0
    #allocation2 [shape = 'u8[786432]{0}', space=vmem, size = 0xc0000, scoped, tag = 'input window, operand 5, single buffered']
    #allocation3 [shape = 's32[1]{0}', space=sflag, size = 0x4, scoped, tag = 'scoped memory for detector_forward.3']
    #allocation4 [shape = 'u8[786432]{0}', space=vmem, size = 0xc0000, scoped, tag = 'input window, operand 7, single buffered']
    #allocation5 [shape = 's32[1]{0}', space=sflag, size = 0x4, scoped, tag = 'scoped memory for detector_forward.3']
    %18 = vsyncpa [#allocation3], 0
    %19 = vsyncpa [#allocation5], 0
    // Predicated region
    $region2: #{detector_forward.3} parent=1 // pred_check
      _
    $region3: #{detector_forward.3} parent=1 // pred_check_branch
      %21 = sbr.rel (0) target = $region5
    $region4: #{detector_forward.3} parent=1 // pred_region
      _
    $region5: #{detector_forward.3} parent=1 // pred_fallthru
      _
    // Predicated region
    $region6: #{detector_forward.3} parent=1 // pred_check
      _
    $region7: #{detector_forward.3} parent=1 // pred_check_branch
      %23 = sbr.rel (0) target = $region9
    $region8: #{detector_forward.3} parent=1 // pred_region
      _
    $region9: #{detector_forward.3} parent=1 // pred_fallthru
      _
    // Predicated region
    $region10: #{detector_forward.3} parent=1 // pred_check
      _
    $region11: #{detector_forward.3} parent=1 // pred_check_branch
      %25 = sbr.rel (0) target = $region13
    $region12: #{detector_forward.3} parent=1 // pred_region
      _
    $region13: #{detector_forward.3} parent=1 // pred_fallthru
      _
    // Predicated region
    $region14: #{detector_forward.3} parent=1 // pred_check
      _
    $region15: #{detector_forward.3} parent=1 // pred_check_branch
      %27 = sbr.rel (0) target = $region17
    $region16: #{detector_forward.3} parent=1 // pred_region
      _
    $region17: #{detector_forward.3} parent=1 // pred_fallthru
      _
    // Predicated region
    $region18: #{detector_forward.3} parent=1 // pred_check
      _
    $region19: #{detector_forward.3} parent=1 // pred_check_branch
      %29 = sbr.rel (0) target = $region21
    $region20: #{detector_forward.3} parent=1 // pred_region
      _
    $region21: #{detector_forward.3} parent=1 // pred_fallthru
      _
    // Predicated region
    $region22: #{detector_forward.3} parent=1 // pred_check
      _
    $region23: #{detector_forward.3} parent=1 // pred_check_branch
      %31 = sbr.rel (0) target = $region25
    $region24: #{detector_forward.3} parent=1 // pred_region
      %s33 = ssub.s32 24576, 24576
      %34 = vsyncadd [#allocation3], %s33
      %s35 = sshll.u32 [#allocation2], 4
      %s36 = int_to_ptr.vmem [resolvable:$true] %s35
      %41 = dma.hbm_to_vmem [thread:$0]  %s5, 24576, %s36, [#allocation3], 256, 256, 16
    $region25: #{detector_forward.3} parent=1 // pred_fallthru
      _
    // Predicated region
    $region26: #{detector_forward.3} parent=1 // pred_check
      _
    $region27: #{detector_forward.3} parent=1 // pred_check_branch
      %43 = sbr.rel (0) target = $region29
    $region28: #{detector_forward.3} parent=1 // pred_region
      _
    $region29: #{detector_forward.3} parent=1 // pred_fallthru
      _
    // Predicated region
    $region30: #{detector_forward.3} parent=1 // pred_check
      _
    $region31: #{detector_forward.3} parent=1 // pred_check_branch
      %45 = sbr.rel (0) target = $region33
    $region32: #{detector_forward.3} parent=1 // pred_region
      %s47 = ssub.s32 24576, 24576
      %48 = vsyncadd [#allocation5], %s47
      %s49 = sshll.u32 [#allocation4], 4
      %s50 = int_to_ptr.vmem [resolvable:$true] %s49
      %55 = dma.hbm_to_vmem [thread:$0]  %s7, 24576, %s50, [#allocation5], 256, 256, 16
    $region33: #{detector_forward.3} parent=1 // pred_fallthru
      _
    // Predicated region
    $region34: #{detector_forward.3} parent=1 // pred_check
      _
    $region35: #{detector_forward.3} parent=1 // pred_check_branch
      %57 = sbr.rel (0) target = $region37
    $region36: #{detector_forward.3} parent=1 // pred_region
      _
    $region37: #{detector_forward.3} parent=1 // pred_fallthru
      _
    // Predicated region
    $region38: #{detector_forward.3} parent=1 // pred_check
      _
    $region39: #{detector_forward.3} parent=1 // pred_check_branch
      %59 = sbr.rel (0) target = $region41
    $region40: #{detector_forward.3} parent=1 // pred_region
      _
    $region41: #{detector_forward.3} parent=1 // pred_fallthru
      _
    // Predicated region
    $region42: #{detector_forward.3} parent=1 // pred_check
      _
    $region43: #{detector_forward.3} parent=1 // pred_check_branch
      %61 = sbr.rel (0) target = $region45
    $region44: #{detector_forward.3} parent=1 // pred_region
      _
    $region45: #{detector_forward.3} parent=1 // pred_fallthru
      _
    // Predicated region
    $region46: #{detector_forward.3} parent=1 // pred_check
      _
    $region47: #{detector_forward.3} parent=1 // pred_check_branch
      %63 = sbr.rel (0) target = $region49
    $region48: #{detector_forward.3} parent=1 // pred_region
      %64 = dma.done [#allocation3], 24576
    $region49: #{detector_forward.3} parent=1 // pred_fallthru
      _
    // Predicated region
    $region50: #{detector_forward.3} parent=1 // pred_check
      _
    $region51: #{detector_forward.3} parent=1 // pred_check_branch
      %66 = sbr.rel (0) target = $region53
    $region52: #{detector_forward.3} parent=1 // pred_region
      %67 = dma.done [#allocation5], 24576
    $region53: #{detector_forward.3} parent=1 // pred_fallthru
      _
    %v69 = vld [vmem:[%s1] sm:$0xff]
    %v70 = vld [vmem:[%s1 + $0x8] sm:$0xff]
    %v71 = vld [vmem:[%s1 + $0x10] sm:$0xff]
    %v72 = vld [vmem:[%s1 + $0x18] sm:$0xff]
    %v73 = vld [vmem:[%s1 + $0x20] sm:$0xff]
    %v74 = vld [vmem:[%s1 + $0x28] sm:$0xff]
    %v75 = vld [vmem:[%s1 + $0x30] sm:$0xff]
    %v76 = vld [vmem:[%s1 + $0x38] sm:$0xff]
    %v77 = vld [vmem:[%s2] sm:$0xff]
    %v78 = vld [vmem:[%s2 + $0x8] sm:$0xff]
    %v79 = vld [vmem:[%s2 + $0x10] sm:$0xff]
    %v80 = vld [vmem:[%s2 + $0x18] sm:$0xff]
    %v81 = vld [vmem:[%s2 + $0x20] sm:$0xff]
    %v82 = vld [vmem:[%s2 + $0x28] sm:$0xff]
    %v83 = vld [vmem:[%s2 + $0x30] sm:$0xff]
    %v84 = vld [vmem:[%s2 + $0x38] sm:$0xff]
    %v85 = vld [vmem:[%s0] sm:$0xff]
    %v86 = vld [vmem:[%s0 + $0x8] sm:$0xff]
    %v87 = vld [vmem:[%s0 + $0x10] sm:$0xff]
    %v88 = vld [vmem:[%s0 + $0x18] sm:$0xff]
    %v89 = vld [vmem:[%s0 + $0x20] sm:$0xff]
    %v90 = vld [vmem:[%s0 + $0x28] sm:$0xff]
    %v91 = vld [vmem:[%s0 + $0x30] sm:$0xff]
    %v92 = vld [vmem:[%s0 + $0x38] sm:$0xff]
    %v93 = vld [vmem:[%s3] sm:$0xff]
    %v94 = vld [vmem:[%s3 + $0x8] sm:$0xff]
    %v95 = vld [vmem:[%s3 + $0x10] sm:$0xff]
    %v96 = vld [vmem:[%s3 + $0x18] sm:$0xff]
    %v97 = vld [vmem:[%s3 + $0x20] sm:$0xff]
    %v98 = vld [vmem:[%s3 + $0x28] sm:$0xff]
    %v99 = vld [vmem:[%s3 + $0x30] sm:$0xff]
    %v100 = vld [vmem:[%s3 + $0x38] sm:$0xff]
    %v101 = vpack.c.bf16 %v86, %v85
    %v102 = vpack.c.bf16 %v88, %v87
    %v103 = vpack.c.bf16 %v90, %v89
    %v104 = vpack.c.bf16 %v92, %v91
    %v105 = vpack.c.bf16 %v95, %v93
    %v106 = vpack.c.bf16 %v96, %v94
    %v107 = vpack.c.bf16 %v99, %v97
    %v108 = vpack.c.bf16 %v100, %v98
    %v109 = vld [vmem:[%s4] sm:$0x3]
    %v111 = vlaneseq
    %v112 = vshrl.u32 %v111, 7
    %v113 = vsub.s32 0, %v112
    %v114 = vrot.slane %v109, %v113
    %v115 = vlaneseq
    %v116 = vshrl.u32 %v115, 7
    %v117 = vsub.s32 1, %v116
    %v118 = vrot.slane %v109, %v117
    %vm121 = vcmask 261120
    %v123 = vsel %vm121, %v101, 0
    %v126 = vsel %vm121, %v102, 0
    %v129 = vsel %vm121, %v103, 0
    %v132 = vsel %vm121, %v104, 0
    %134 = vmatprep.subr.bf16.mxu0 %v106
    %135 = vmatpush1.bf16.msra.mxu0 %v105
    %136 = vmatprep.subr.bf16.mxu0 %v108
    %137 = vmatpush1.bf16.msra.mxu0 %v107
    %138 = vmatprep.subr.bf16.mxu0 0
    %139 = vmatpush1.bf16.msra.mxu0 0
    %140 = vmatprep.subr.bf16.mxu0 0
    %141 = vmatpush1.bf16.msra.mxu0 0
    %142 = vmatprep.subr.bf16.mxu0 0
    %143 = vmatpush1.bf16.msra.mxu0 0
    %144 = vmatprep.subr.bf16.mxu0 0
    %145 = vmatpush1.bf16.msra.mxu0 0
    %146 = vmatprep.subr.bf16.mxu0 0
    %147 = vmatpush1.bf16.msra.mxu0 0
    %148 = vmatprep.subr.bf16.mxu0 0
    %149 = vmatpush1.bf16.msra.mxu0 0
    %150 = vmatprep.subr.bf16.mxu0 0
    %151 = vmatpush1.bf16.msra.mxu0 0
    %152 = vmatprep.subr.bf16.mxu0 0
    %153 = vmatpush1.bf16.msra.mxu0 0
    %154 = vmatprep.subr.bf16.mxu0 0
    %155 = vmatpush1.bf16.msra.mxu0 0
    %156 = vmatprep.subr.bf16.mxu0 0
    %157 = vmatpush1.bf16.msra.mxu0 0
    %158 = vmatprep.subr.bf16.mxu0 0
    %159 = vmatpush1.bf16.msra.mxu0 0
    %160 = vmatprep.subr.bf16.mxu0 0
    %161 = vmatpush1.bf16.msra.mxu0 0
    %162 = vmatprep.subr.bf16.mxu0 0
    %163 = vmatpush1.bf16.msra.mxu0 0
    %164 = vmatprep.subr.bf16.mxu0 0
    %165 = vmatpush1.bf16.msra.mxu0 0
    %166 = vmatprep.mubr.bf16.mxu0 0
    %167 = vmatmul.mubr.bf16.gmra.mrb[0].mxu0 %v123
    %v168 = vpop.f32.mrb[0].mxu0
    %v169 = vadd.f32 %v114, %v168
    %v170 = vpop.f32.mrb[0].mxu0
    %v171 = vadd.f32 %v118, %v170
    %v172 = vpop.f32.mrb[0].mxu0
    %v173 = vadd.f32 %v114, %v172
    %v174 = vpop.f32.mrb[0].mxu0
    %v175 = vadd.f32 %v118, %v174
    %176 = vmatprep.mubr.bf16.mxu0 0
    %177 = vmatmul.mubr.bf16.gmra.mrb[0].mxu0 %v126
    %v178 = vpop.f32.mrb[0].mxu0
    %v179 = vadd.f32 %v114, %v178
    %v180 = vpop.f32.mrb[0].mxu0
    %v181 = vadd.f32 %v118, %v180
    %v182 = vpop.f32.mrb[0].mxu0
    %v183 = vadd.f32 %v114, %v182
    %v184 = vpop.f32.mrb[0].mxu0
    %v185 = vadd.f32 %v118, %v184
    %186 = vmatprep.mubr.bf16.mxu0 0
    %187 = vmatmul.mubr.bf16.gmra.mrb[0].mxu0 %v129
    %v188 = vpop.f32.mrb[0].mxu0
    %v189 = vadd.f32 %v114, %v188
    %v190 = vpop.f32.mrb[0].mxu0
    %v191 = vadd.f32 %v118, %v190
    %v192 = vpop.f32.mrb[0].mxu0
    %v193 = vadd.f32 %v114, %v192
    %v194 = vpop.f32.mrb[0].mxu0
    %v195 = vadd.f32 %v118, %v194
    %196 = vmatprep.mubr.bf16.mxu0 0
    %197 = vmatmul.mubr.bf16.gmra.mrb[0].mxu0 %v132
    %v198 = vpop.f32.mrb[0].mxu0
    %v199 = vadd.f32 %v114, %v198
    %v200 = vpop.f32.mrb[0].mxu0
    %v201 = vadd.f32 %v118, %v200
    %v202 = vpop.f32.mrb[0].mxu0
    %v203 = vadd.f32 %v114, %v202
    %v204 = vpop.f32.mrb[0].mxu0
    %v205 = vadd.f32 %v118, %v204
    %206 = vdwg.mxu0
    %v207 = vmax.f32 %v169, 0.0
    %v208 = vmax.f32 %v171, 0.0
    %v209 = vmax.f32 %v173, 0.0
    %v210 = vmax.f32 %v175, 0.0
    %v211 = vmax.f32 %v179, 0.0
    %v212 = vmax.f32 %v181, 0.0
    %v213 = vmax.f32 %v183, 0.0
    %v214 = vmax.f32 %v185, 0.0
    %v215 = vmax.f32 %v189, 0.0
    %v216 = vmax.f32 %v191, 0.0
    %v217 = vmax.f32 %v193, 0.0
    %v218 = vmax.f32 %v195, 0.0
    %v219 = vmax.f32 %v199, 0.0
    %v220 = vmax.f32 %v201, 0.0
    %v221 = vmax.f32 %v203, 0.0
    %v222 = vmax.f32 %v205, 0.0
    %v223 = vld [vmem:[#allocation2] sm:$0xff]
    %v224 = vld [vmem:[#allocation2 + $0x8] sm:$0xff]
    %v225 = vld [vmem:[#allocation2 + $0x10] sm:$0xff]
    %v226 = vld [vmem:[#allocation2 + $0x18] sm:$0xff]
    %v227 = vld [vmem:[#allocation2 + $0x20] sm:$0xff]
    %v228 = vld [vmem:[#allocation2 + $0x28] sm:$0xff]
    %v229 = vld [vmem:[#allocation2 + $0x30] sm:$0xff]
    %v230 = vld [vmem:[#allocation2 + $0x38] sm:$0xff]
    %v231 = vld [vmem:[#allocation2 + $0x40] sm:$0xff]
    %v232 = vld [vmem:[#allocation2 + $0x48] sm:$0xff]
    %v233 = vld [vmem:[#allocation2 + $0x50] sm:$0xff]
    %v234 = vld [vmem:[#allocation2 + $0x58] sm:$0xff]
    %v235 = vld [vmem:[#allocation2 + $0x60] sm:$0xff]
    %v236 = vld [vmem:[#allocation2 + $0x68] sm:$0xff]
    %v237 = vld [vmem:[#allocation2 + $0x70] sm:$0xff]
    %v238 = vld [vmem:[#allocation2 + $0x78] sm:$0xff]
    %v239 = vld [vmem:[#allocation2 + $0x80] sm:$0xff]
    %v240 = vld [vmem:[#allocation2 + $0x88] sm:$0xff]
    %v241 = vld [vmem:[#allocation2 + $0x90] sm:$0xff]
    %v242 = vld [vmem:[#allocation2 + $0x98] sm:$0xff]
    %v243 = vld [vmem:[#allocation2 + $0xa0] sm:$0xff]
    %v244 = vld [vmem:[#allocation2 + $0xa8] sm:$0xff]
    %v245 = vld [vmem:[#allocation2 + $0xb0] sm:$0xff]
    %v246 = vld [vmem:[#allocation2 + $0xb8] sm:$0xff]
    %v247 = vld [vmem:[#allocation2 + $0xc0] sm:$0xff]
    %v248 = vld [vmem:[#allocation2 + $0xc8] sm:$0xff]
    %v249 = vld [vmem:[#allocation2 + $0xd0] sm:$0xff]
    %v250 = vld [vmem:[#allocation2 + $0xd8] sm:$0xff]
    %v251 = vld [vmem:[#allocation2 + $0xe0] sm:$0xff]
    %v252 = vld [vmem:[#allocation2 + $0xe8] sm:$0xff]
    %v253 = vld [vmem:[#allocation2 + $0xf0] sm:$0xff]
    %v254 = vld [vmem:[#allocation2 + $0xf8] sm:$0xff]
    %v255 = vld [vmem:[#allocation2 + $0x100] sm:$0xff]
    %v256 = vld [vmem:[#allocation2 + $0x108] sm:$0xff]
    %v257 = vld [vmem:[#allocation2 + $0x110] sm:$0xff]
    %v258 = vld [vmem:[#allocation2 + $0x118] sm:$0xff]
    %v259 = vld [vmem:[#allocation2 + $0x120] sm:$0xff]
    %v260 = vld [vmem:[#allocation2 + $0x128] sm:$0xff]
    %v261 = vld [vmem:[#allocation2 + $0x130] sm:$0xff]
    %v262 = vld [vmem:[#allocation2 + $0x138] sm:$0xff]
    %v263 = vld [vmem:[#allocation2 + $0x140] sm:$0xff]
    %v264 = vld [vmem:[#allocation2 + $0x148] sm:$0xff]
    %v265 = vld [vmem:[#allocation2 + $0x150] sm:$0xff]
    %v266 = vld [vmem:[#allocation2 + $0x158] sm:$0xff]
    %v267 = vld [vmem:[#allocation2 + $0x160] sm:$0xff]
    %v268 = vld [vmem:[#allocation2 + $0x168] sm:$0xff]
    %v269 = vld [vmem:[#allocation2 + $0x170] sm:$0xff]
    %v270 = vld [vmem:[#allocation2 + $0x178] sm:$0xff]
    %v271 = vld [vmem:[#allocation2 + $0x180] sm:$0xff]
    %v272 = vld [vmem:[#allocation2 + $0x188] sm:$0xff]
    %v273 = vld [vmem:[#allocation2 + $0x190] sm:$0xff]
    %v274 = vld [vmem:[#allocation2 + $0x198] sm:$0xff]
    %v275 = vld [vmem:[#allocation2 + $0x1a0] sm:$0xff]
    %v276 = vld [vmem:[#allocation2 + $0x1a8] sm:$0xff]
    %v277 = vld [vmem:[#allocation2 + $0x1b0] sm:$0xff]
    %v278 = vld [vmem:[#allocation2 + $0x1b8] sm:$0xff]
    %v279 = vld [vmem:[#allocation2 + $0x1c0] sm:$0xff]
    %v280 = vld [vmem:[#allocation2 + $0x1c8] sm:$0xff]
    %v281 = vld [vmem:[#allocation2 + $0x1d0] sm:$0xff]
    %v282 = vld [vmem:[#allocation2 + $0x1d8] sm:$0xff]
    %v283 = vld [vmem:[#allocation2 + $0x1e0] sm:$0xff]
    %v284 = vld [vmem:[#allocation2 + $0x1e8] sm:$0xff]
    %v285 = vld [vmem:[#allocation2 + $0x1f0] sm:$0xff]
    %v286 = vld [vmem:[#allocation2 + $0x1f8] sm:$0xff]
    %v287 = vld [vmem:[#allocation2 + $0x200] sm:$0xff]
    %v288 = vld [vmem:[#allocation2 + $0x208] sm:$0xff]
    %v289 = vld [vmem:[#allocation2 + $0x210] sm:$0xff]
    %v290 = vld [vmem:[#allocation2 + $0x218] sm:$0xff]
    %v291 = vld [vmem:[#allocation2 + $0x220] sm:$0xff]
    %v292 = vld [vmem:[#allocation2 + $0x228] sm:$0xff]
    %v293 = vld [vmem:[#allocation2 + $0x230] sm:$0xff]
    %v294 = vld [vmem:[#allocation2 + $0x238] sm:$0xff]
    %v295 = vld [vmem:[#allocation2 + $0x240] sm:$0xff]
    %v296 = vld [vmem:[#allocation2 + $0x248] sm:$0xff]
    %v297 = vld [vmem:[#allocation2 + $0x250] sm:$0xff]
    %v298 = vld [vmem:[#allocation2 + $0x258] sm:$0xff]
    %v299 = vld [vmem:[#allocation2 + $0x260] sm:$0xff]
    %v300 = vld [vmem:[#allocation2 + $0x268] sm:$0xff]
    %v301 = vld [vmem:[#allocation2 + $0x270] sm:$0xff]
    %v302 = vld [vmem:[#allocation2 + $0x278] sm:$0xff]
    %v303 = vld [vmem:[#allocation2 + $0x280] sm:$0xff]
    %v304 = vld [vmem:[#allocation2 + $0x288] sm:$0xff]
    %v305 = vld [vmem:[#allocation2 + $0x290] sm:$0xff]
    %v306 = vld [vmem:[#allocation2 + $0x298] sm:$0xff]
    %v307 = vld [vmem:[#allocation2 + $0x2a0] sm:$0xff]
    %v308 = vld [vmem:[#allocation2 + $0x2a8] sm:$0xff]
    %v309 = vld [vmem:[#allocation2 + $0x2b0] sm:$0xff]
    %v310 = vld [vmem:[#allocation2 + $0x2b8] sm:$0xff]
    %v311 = vld [vmem:[#allocation2 + $0x2c0] sm:$0xff]
    %v312 = vld [vmem:[#allocation2 + $0x2c8] sm:$0xff]
    %v313 = vld [vmem:[#allocation2 + $0x2d0] sm:$0xff]
    %v314 = vld [vmem:[#allocation2 + $0x2d8] sm:$0xff]
    %v315 = vld [vmem:[#allocation2 + $0x2e0] sm:$0xff]
    %v316 = vld [vmem:[#allocation2 + $0x2e8] sm:$0xff]
    %v317 = vld [vmem:[#allocation2 + $0x2f0] sm:$0xff]
    %v318 = vld [vmem:[#allocation2 + $0x2f8] sm:$0xff]
    %v319 = vld [vmem:[#allocation2 + $0x300] sm:$0xff]
    %v320 = vld [vmem:[#allocation2 + $0x308] sm:$0xff]
    %v321 = vld [vmem:[#allocation2 + $0x310] sm:$0xff]
    %v322 = vld [vmem:[#allocation2 + $0x318] sm:$0xff]
    %v323 = vld [vmem:[#allocation2 + $0x320] sm:$0xff]
    %v324 = vld [vmem:[#allocation2 + $0x328] sm:$0xff]
    %v325 = vld [vmem:[#allocation2 + $0x330] sm:$0xff]
    %v326 = vld [vmem:[#allocation2 + $0x338] sm:$0xff]
    %v327 = vld [vmem:[#allocation2 + $0x340] sm:$0xff]
    %v328 = vld [vmem:[#allocation2 + $0x348] sm:$0xff]
    %v329 = vld [vmem:[#allocation2 + $0x350] sm:$0xff]
    %v330 = vld [vmem:[#allocation2 + $0x358] sm:$0xff]
    %v331 = vld [vmem:[#allocation2 + $0x360] sm:$0xff]
    %v332 = vld [vmem:[#allocation2 + $0x368] sm:$0xff]
    %v333 = vld [vmem:[#allocation2 + $0x370] sm:$0xff]
    %v334 = vld [vmem:[#allocation2 + $0x378] sm:$0xff]
    %v335 = vld [vmem:[#allocation2 + $0x380] sm:$0xff]
    %v336 = vld [vmem:[#allocation2 + $0x388] sm:$0xff]
    %v337 = vld [vmem:[#allocation2 + $0x390] sm:$0xff]
    %v338 = vld [vmem:[#allocation2 + $0x398] sm:$0xff]
    %v339 = vld [vmem:[#allocation2 + $0x3a0] sm:$0xff]
    %v340 = vld [vmem:[#allocation2 + $0x3a8] sm:$0xff]
    %v341 = vld [vmem:[#allocation2 + $0x3b0] sm:$0xff]
    %v342 = vld [vmem:[#allocation2 + $0x3b8] sm:$0xff]
    %v343 = vld [vmem:[#allocation2 + $0x3c0] sm:$0xff]
    %v344 = vld [vmem:[#allocation2 + $0x3c8] sm:$0xff]
    %v345 = vld [vmem:[#allocation2 + $0x3d0] sm:$0xff]
    %v346 = vld [vmem:[#allocation2 + $0x3d8] sm:$0xff]
    %v347 = vld [vmem:[#allocation2 + $0x3e0] sm:$0xff]
    %v348 = vld [vmem:[#allocation2 + $0x3e8] sm:$0xff]
    %v349 = vld [vmem:[#allocation2 + $0x3f0] sm:$0xff]
    %v350 = vld [vmem:[#allocation2 + $0x3f8] sm:$0xff]
    %v351 = vld [vmem:[#allocation2 + $0x400] sm:$0xff]
    %v352 = vld [vmem:[#allocation2 + $0x408] sm:$0xff]
    %v353 = vld [vmem:[#allocation2 + $0x410] sm:$0xff]
    %v354 = vld [vmem:[#allocation2 + $0x418] sm:$0xff]
    %v355 = vld [vmem:[#allocation2 + $0x420] sm:$0xff]
    %v356 = vld [vmem:[#allocation2 + $0x428] sm:$0xff]
    %v357 = vld [vmem:[#allocation2 + $0x430] sm:$0xff]
    %v358 = vld [vmem:[#allocation2 + $0x438] sm:$0xff]
    %v359 = vld [vmem:[#allocation2 + $0x440] sm:$0xff]
    %v360 = vld [vmem:[#allocation2 + $0x448] sm:$0xff]
    %v361 = vld [vmem:[#allocation2 + $0x450] sm:$0xff]
    %v362 = vld [vmem:[#allocation2 + $0x458] sm:$0xff]
    %v363 = vld [vmem:[#allocation2 + $0x460] sm:$0xff]
    %v364 = vld [vmem:[#allocation2 + $0x468] sm:$0xff]
    %v365 = vld [vmem:[#allocation2 + $0x470] sm:$0xff]
    %v366 = vld [vmem:[#allocation2 + $0x478] sm:$0xff]
    %v367 = vld [vmem:[#allocation2 + $0x480] sm:$0xff]
    %v368 = vld [vmem:[#allocation2 + $0x488] sm:$0xff]
    %v369 = vld [vmem:[#allocation2 + $0x490] sm:$0xff]
    %v370 = vld [vmem:[#allocation2 + $0x498] sm:$0xff]
    %v371 = vld [vmem:[#allocation2 + $0x4a0] sm:$0xff]
    %v372 = vld [vmem:[#allocation2 + $0x4a8] sm:$0xff]
    %v373 = vld [vmem:[#allocation2 + $0x4b0] sm:$0xff]
    %v374 = vld [vmem:[#allocation2 + $0x4b8] sm:$0xff]
    %v375 = vld [vmem:[#allocation2 + $0x4c0] sm:$0xff]
    %v376 = vld [vmem:[#allocation2 + $0x4c8] sm:$0xff]
    %v377 = vld [vmem:[#allocation2 + $0x4d0] sm:$0xff]
    %v378 = vld [vmem:[#allocation2 + $0x4d8] sm:$0xff]
    %v379 = vld [vmem:[#allocation2 + $0x4e0] sm:$0xff]
    %v380 = vld [vmem:[#allocation2 + $0x4e8] sm:$0xff]
    %v381 = vld [vmem:[#allocation2 + $0x4f0] sm:$0xff]
    %v382 = vld [vmem:[#allocation2 + $0x4f8] sm:$0xff]
    %v383 = vld [vmem:[#allocation2 + $0x500] sm:$0xff]
    %v384 = vld [vmem:[#allocation2 + $0x508] sm:$0xff]
    %v385 = vld [vmem:[#allocation2 + $0x510] sm:$0xff]
    %v386 = vld [vmem:[#allocation2 + $0x518] sm:$0xff]
    %v387 = vld [vmem:[#allocation2 + $0x520] sm:$0xff]
    %v388 = vld [vmem:[#allocation2 + $0x528] sm:$0xff]
    %v389 = vld [vmem:[#allocation2 + $0x530] sm:$0xff]
    %v390 = vld [vmem:[#allocation2 + $0x538] sm:$0xff]
    %v391 = vld [vmem:[#allocation2 + $0x540] sm:$0xff]
    %v392 = vld [vmem:[#allocation2 + $0x548] sm:$0xff]
    %v393 = vld [vmem:[#allocation2 + $0x550] sm:$0xff]
    %v394 = vld [vmem:[#allocation2 + $0x558] sm:$0xff]
    %v395 = vld [vmem:[#allocation2 + $0x560] sm:$0xff]
    %v396 = vld [vmem:[#allocation2 + $0x568] sm:$0xff]
    %v397 = vld [vmem:[#allocation2 + $0x570] sm:$0xff]
    %v398 = vld [vmem:[#allocation2 + $0x578] sm:$0xff]
    %v399 = vld [vmem:[#allocation2 + $0x580] sm:$0xff]
    %v400 = vld [vmem:[#allocation2 + $0x588] sm:$0xff]
    %v401 = vld [vmem:[#allocation2 + $0x590] sm:$0xff]
    %v402 = vld [vmem:[#allocation2 + $0x598] sm:$0xff]
    %v403 = vld [vmem:[#allocation2 + $0x5a0] sm:$0xff]
    %v404 = vld [vmem:[#allocation2 + $0x5a8] sm:$0xff]
    %v405 = vld [vmem:[#allocation2 + $0x5b0] sm:$0xff]
    %v406 = vld [vmem:[#allocation2 + $0x5b8] sm:$0xff]
    %v407 = vld [vmem:[#allocation2 + $0x5c0] sm:$0xff]
    %v408 = vld [vmem:[#allocation2 + $0x5c8] sm:$0xff]
    %v409 = vld [vmem:[#allocation2 + $0x5d0] sm:$0xff]
    %v410 = vld [vmem:[#allocation2 + $0x5d8] sm:$0xff]
    %v411 = vld [vmem:[#allocation2 + $0x5e0] sm:$0xff]
    %v412 = vld [vmem:[#allocation2 + $0x5e8] sm:$0xff]
    %v413 = vld [vmem:[#allocation2 + $0x5f0] sm:$0xff]
    %v414 = vld [vmem:[#allocation2 + $0x5f8] sm:$0xff]
    %v415 = vld [vmem:[%s6] sm:$0x3]
    %v416 = vpack.c.bf16 %v70, %v69
    %v417 = vpack.c.bf16 %v72, %v71
    %v418 = vpack.c.bf16 %v74, %v73
    %v419 = vpack.c.bf16 %v76, %v75
    %v420 = vpack.c.bf16 %v209, %v207
    %v421 = vpack.c.bf16 %v210, %v208
    %v422 = vpack.c.bf16 %v213, %v211
    %v423 = vpack.c.bf16 %v214, %v212
    %v424 = vpack.c.bf16 %v217, %v215
    %v425 = vpack.c.bf16 %v218, %v216
    %v426 = vpack.c.bf16 %v221, %v219
    %v427 = vpack.c.bf16 %v222, %v220
    %vm428 = vcmask 523264
    %v430 = vsel %vm428, %v416, 0
    %v433 = vsel %vm428, %v417, 0
    %v436 = vsel %vm428, %v418, 0
    %v439 = vsel %vm428, %v419, 0
    %441 = vmatprep.subr.bf16.mxu0 %v421
    %442 = vmatpush1.bf16.msra.mxu0 %v420
    %443 = vmatprep.subr.bf16.mxu0 %v423
    %444 = vmatpush1.bf16.msra.mxu0 %v422
    %445 = vmatprep.subr.bf16.mxu0 %v425
    %446 = vmatpush1.bf16.msra.mxu0 %v424
    %447 = vmatprep.subr.bf16.mxu0 %v427
    %448 = vmatpush1.bf16.msra.mxu0 %v426
    %449 = vmatprep.subr.bf16.mxu0 0
    %450 = vmatpush1.bf16.msra.mxu0 0
    %451 = vmatprep.subr.bf16.mxu0 0
    %452 = vmatpush1.bf16.msra.mxu0 0
    %453 = vmatprep.subr.bf16.mxu0 0
    %454 = vmatpush1.bf16.msra.mxu0 0
    %455 = vmatprep.subr.bf16.mxu0 0
    %456 = vmatpush1.bf16.msra.mxu0 0
    %457 = vmatprep.subr.bf16.mxu0 0
    %458 = vmatpush1.bf16.msra.mxu0 0
    %459 = vmatprep.subr.bf16.mxu0 0
    %460 = vmatpush1.bf16.msra.mxu0 0
    %461 = vmatprep.subr.bf16.mxu0 0
    %462 = vmatpush1.bf16.msra.mxu0 0
    %463 = vmatprep.subr.bf16.mxu0 0
    %464 = vmatpush1.bf16.msra.mxu0 0
    %465 = vmatprep.subr.bf16.mxu0 0
    %466 = vmatpush1.bf16.msra.mxu0 0
    %467 = vmatprep.subr.bf16.mxu0 0
    %468 = vmatpush1.bf16.msra.mxu0 0
    %469 = vmatprep.subr.bf16.mxu0 0
    %470 = vmatpush1.bf16.msra.mxu0 0
    %471 = vmatprep.subr.bf16.mxu0 0
    %472 = vmatpush1.bf16.msra.mxu0 0
    %473 = vmatprep.mubr.bf16.mxu0 0
    %474 = vmatmul.mubr.bf16.gmra.mrb[0].mxu0 %v430
    %v475 = vpop.f32.mrb[0].mxu0
    %v476 = vadd.f32 0.0, %v475
    %v477 = vpop.f32.mrb[0].mxu0
    %v478 = vadd.f32 0.0, %v477
    %v479 = vpop.f32.mrb[0].mxu0
    %v480 = vadd.f32 0.0, %v479
    %v481 = vpop.f32.mrb[0].mxu0
    %v482 = vadd.f32 0.0, %v481
    %483 = vmatprep.mubr.bf16.mxu0 0
    %484 = vmatmul.mubr.bf16.gmra.mrb[0].mxu0 %v433
    %v485 = vpop.f32.mrb[0].mxu0
    %v486 = vadd.f32 0.0, %v485
    %v487 = vpop.f32.mrb[0].mxu0
    %v488 = vadd.f32 0.0, %v487
    %v489 = vpop.f32.mrb[0].mxu0
    %v490 = vadd.f32 0.0, %v489
    %v491 = vpop.f32.mrb[0].mxu0
    %v492 = vadd.f32 0.0, %v491
    %493 = vmatprep.mubr.bf16.mxu0 0
    %494 = vmatmul.mubr.bf16.gmra.mrb[0].mxu0 %v436
    %v495 = vpop.f32.mrb[0].mxu0
    %v496 = vadd.f32 0.0, %v495
    %v497 = vpop.f32.mrb[0].mxu0
    %v498 = vadd.f32 0.0, %v497
    %v499 = vpop.f32.mrb[0].mxu0
    %v500 = vadd.f32 0.0, %v499
    %v501 = vpop.f32.mrb[0].mxu0
    %v502 = vadd.f32 0.0, %v501
    %503 = vmatprep.mubr.bf16.mxu0 0
    %504 = vmatmul.mubr.bf16.gmra.mrb[0].mxu0 %v439
    %v505 = vpop.f32.mrb[0].mxu0
    %v506 = vadd.f32 0.0, %v505
    %v507 = vpop.f32.mrb[0].mxu0
    %v508 = vadd.f32 0.0, %v507
    %v509 = vpop.f32.mrb[0].mxu0
    %v510 = vadd.f32 0.0, %v509
    %v511 = vpop.f32.mrb[0].mxu0
    %v512 = vadd.f32 0.0, %v511
    %513 = vdwg.mxu0
    %v514 = vpack.c.bf16 %v78, %v77
    %v515 = vpack.c.bf16 %v80, %v79
    %v516 = vpack.c.bf16 %v82, %v81
    %v517 = vpack.c.bf16 %v84, %v83
    %v519 = vsel %vm428, %v514, 0
    %v522 = vsel %vm428, %v515, 0
    %v525 = vsel %vm428, %v516, 0
    %v528 = vsel %vm428, %v517, 0
    %530 = vmatprep.subr.bf16.mxu0 %v421
    %531 = vmatpush1.bf16.msra.mxu0 %v420
    %532 = vmatprep.subr.bf16.mxu0 %v423
    %533 = vmatpush1.bf16.msra.mxu0 %v422
    %534 = vmatprep.subr.bf16.mxu0 %v425
    %535 = vmatpush1.bf16.msra.mxu0 %v424
    %536 = vmatprep.subr.bf16.mxu0 %v427
    %537 = vmatpush1.bf16.msra.mxu0 %v426
    %538 = vmatprep.subr.bf16.mxu0 0
    %539 = vmatpush1.bf16.msra.mxu0 0
    %540 = vmatprep.subr.bf16.mxu0 0
    %541 = vmatpush1.bf16.msra.mxu0 0
    %542 = vmatprep.subr.bf16.mxu0 0
    %543 = vmatpush1.bf16.msra.mxu0 0
    %544 = vmatprep.subr.bf16.mxu0 0
    %545 = vmatpush1.bf16.msra.mxu0 0
    %546 = vmatprep.subr.bf16.mxu0 0
    %547 = vmatpush1.bf16.msra.mxu0 0
    %548 = vmatprep.subr.bf16.mxu0 0
    %549 = vmatpush1.bf16.msra.mxu0 0
    %550 = vmatprep.subr.bf16.mxu0 0
    %551 = vmatpush1.bf16.msra.mxu0 0
    %552 = vmatprep.subr.bf16.mxu0 0
    %553 = vmatpush1.bf16.msra.mxu0 0
    %554 = vmatprep.subr.bf16.mxu0 0
    %555 = vmatpush1.bf16.msra.mxu0 0
    %556 = vmatprep.subr.bf16.mxu0 0
    %557 = vmatpush1.bf16.msra.mxu0 0
    %558 = vmatprep.subr.bf16.mxu0 0
    %559 = vmatpush1.bf16.msra.mxu0 0
    %560 = vmatprep.subr.bf16.mxu0 0
    %561 = vmatpush1.bf16.msra.mxu0 0
    %562 = vmatprep.mubr.bf16.mxu0 0
    %563 = vmatmul.mubr.bf16.gmra.mrb[0].mxu0 %v519
    %v564 = vpop.f32.mrb[0].mxu0
    %v565 = vadd.f32 0.0, %v564
    %v566 = vpop.f32.mrb[0].mxu0
    %v567 = vadd.f32 0.0, %v566
    %v568 = vpop.f32.mrb[0].mxu0
    %v569 = vadd.f32 0.0, %v568
    %v570 = vpop.f32.mrb[0].mxu0
    %v571 = vadd.f32 0.0, %v570
    %572 = vmatprep.mubr.bf16.mxu0 0
    %573 = vmatmul.mubr.bf16.gmra.mrb[0].mxu0 %v522
    %v574 = vpop.f32.mrb[0].mxu0
    %v575 = vadd.f32 0.0, %v574
    %v576 = vpop.f32.mrb[0].mxu0
    %v577 = vadd.f32 0.0, %v576
    %v578 = vpop.f32.mrb[0].mxu0
    %v579 = vadd.f32 0.0, %v578
    %v580 = vpop.f32.mrb[0].mxu0
    %v581 = vadd.f32 0.0, %v580
    %582 = vmatprep.mubr.bf16.mxu0 0
    %583 = vmatmul.mubr.bf16.gmra.mrb[0].mxu0 %v525
    %v584 = vpop.f32.mrb[0].mxu0
    %v585 = vadd.f32 0.0, %v584
    %v586 = vpop.f32.mrb[0].mxu0
    %v587 = vadd.f32 0.0, %v586
    %v588 = vpop.f32.mrb[0].mxu0
    %v589 = vadd.f32 0.0, %v588
    %v590 = vpop.f32.mrb[0].mxu0
    %v591 = vadd.f32 0.0, %v590
    %592 = vmatprep.mubr.bf16.mxu0 0
    %593 = vmatmul.mubr.bf16.gmra.mrb[0].mxu0 %v528
    %v594 = vpop.f32.mrb[0].mxu0
    %v595 = vadd.f32 0.0, %v594
    %v596 = vpop.f32.mrb[0].mxu0
    %v597 = vadd.f32 0.0, %v596
    %v598 = vpop.f32.mrb[0].mxu0
    %v599 = vadd.f32 0.0, %v598
    %v600 = vpop.f32.mrb[0].mxu0
    %v601 = vadd.f32 0.0, %v600
    %602 = vdwg.mxu0
    %v603 = vpack.c.bf16 %v480, %v476
    %v604 = vpack.c.bf16 %v482, %v478
    %v605 = vpack.c.bf16 %v569, %v565
    %v606 = vpack.c.bf16 %v571, %v567
    %v607 = vpack.c.bf16 %v490, %v486
    %v608 = vpack.c.bf16 %v492, %v488
    %v609 = vpack.c.bf16 %v579, %v575
    %v610 = vpack.c.bf16 %v581, %v577
    %v611 = vpack.c.bf16 %v500, %v496
    %v612 = vpack.c.bf16 %v502, %v498
    %v613 = vpack.c.bf16 %v589, %v585
    %v614 = vpack.c.bf16 %v591, %v587
    %v615 = vpack.c.bf16 %v510, %v506
    %v616 = vpack.c.bf16 %v512, %v508
    %v617 = vpack.c.bf16 %v599, %v595
    %v618 = vpack.c.bf16 %v601, %v597
    %v619 = vpack.c.bf16 %v225, %v223
    %v620 = vpack.c.bf16 %v226, %v224
    %v621 = vpack.c.bf16 %v229, %v227
    %v622 = vpack.c.bf16 %v230, %v228
    %v623 = vpack.c.bf16 %v233, %v231
    %v624 = vpack.c.bf16 %v234, %v232
    %v625 = vpack.c.bf16 %v237, %v235
    %v626 = vpack.c.bf16 %v238, %v236
    %v627 = vpack.c.bf16 %v241, %v239
    %v628 = vpack.c.bf16 %v242, %v240
    %v629 = vpack.c.bf16 %v245, %v243
    %v630 = vpack.c.bf16 %v246, %v244
    %v631 = vpack.c.bf16 %v249, %v247
    %v632 = vpack.c.bf16 %v250, %v248
    %v633 = vpack.c.bf16 %v253, %v251
    %v634 = vpack.c.bf16 %v254, %v252
    %v635 = vpack.c.bf16 %v257, %v255
    %v636 = vpack.c.bf16 %v258, %v256
    %v637 = vpack.c.bf16 %v261, %v259
    %v638 = vpack.c.bf16 %v262, %v260
    %v639 = vpack.c.bf16 %v265, %v263
    %v640 = vpack.c.bf16 %v266, %v264
    %v641 = vpack.c.bf16 %v269, %v267
    %v642 = vpack.c.bf16 %v270, %v268
    %v643 = vpack.c.bf16 %v273, %v271
    %v644 = vpack.c.bf16 %v274, %v272
    %v645 = vpack.c.bf16 %v277, %v275
    %v646 = vpack.c.bf16 %v278, %v276
    %v647 = vpack.c.bf16 %v281, %v279
    %v648 = vpack.c.bf16 %v282, %v280
    %v649 = vpack.c.bf16 %v285, %v283
    %v650 = vpack.c.bf16 %v286, %v284
    %v651 = vpack.c.bf16 %v289, %v287
    %v652 = vpack.c.bf16 %v290, %v288
    %v653 = vpack.c.bf16 %v293, %v291
    %v654 = vpack.c.bf16 %v294, %v292
    %v655 = vpack.c.bf16 %v297, %v295
    %v656 = vpack.c.bf16 %v298, %v296
    %v657 = vpack.c.bf16 %v301, %v299
    %v658 = vpack.c.bf16 %v302, %v300
    %v659 = vpack.c.bf16 %v305, %v303
    %v660 = vpack.c.bf16 %v306, %v304
    %v661 = vpack.c.bf16 %v309, %v307
    %v662 = vpack.c.bf16 %v310, %v308
    %v663 = vpack.c.bf16 %v313, %v311
    %v664 = vpack.c.bf16 %v314, %v312
    %v665 = vpack.c.bf16 %v317, %v315
    %v666 = vpack.c.bf16 %v318, %v316
    %v667 = vpack.c.bf16 %v321, %v319
    %v668 = vpack.c.bf16 %v322, %v320
    %v669 = vpack.c.bf16 %v325, %v323
    %v670 = vpack.c.bf16 %v326, %v324
    %v671 = vpack.c.bf16 %v329, %v327
    %v672 = vpack.c.bf16 %v330, %v328
    %v673 = vpack.c.bf16 %v333, %v331
    %v674 = vpack.c.bf16 %v334, %v332
    %v675 = vpack.c.bf16 %v337, %v335
    %v676 = vpack.c.bf16 %v338, %v336
    %v677 = vpack.c.bf16 %v341, %v339
    %v678 = vpack.c.bf16 %v342, %v340
    %v679 = vpack.c.bf16 %v345, %v343
    %v680 = vpack.c.bf16 %v346, %v344
    %v681 = vpack.c.bf16 %v349, %v347
    %v682 = vpack.c.bf16 %v350, %v348
    %v683 = vpack.c.bf16 %v353, %v351
    %v684 = vpack.c.bf16 %v354, %v352
    %v685 = vpack.c.bf16 %v357, %v355
    %v686 = vpack.c.bf16 %v358, %v356
    %v687 = vpack.c.bf16 %v361, %v359
    %v688 = vpack.c.bf16 %v362, %v360
    %v689 = vpack.c.bf16 %v365, %v363
    %v690 = vpack.c.bf16 %v366, %v364
    %v691 = vpack.c.bf16 %v369, %v367
    %v692 = vpack.c.bf16 %v370, %v368
    %v693 = vpack.c.bf16 %v373, %v371
    %v694 = vpack.c.bf16 %v374, %v372
    %v695 = vpack.c.bf16 %v377, %v375
    %v696 = vpack.c.bf16 %v378, %v376
    %v697 = vpack.c.bf16 %v381, %v379
    %v698 = vpack.c.bf16 %v382, %v380
    %v699 = vpack.c.bf16 %v385, %v383
    %v700 = vpack.c.bf16 %v386, %v384
    %v701 = vpack.c.bf16 %v389, %v387
    %v702 = vpack.c.bf16 %v390, %v388
    %v703 = vpack.c.bf16 %v393, %v391
    %v704 = vpack.c.bf16 %v394, %v392
    %v705 = vpack.c.bf16 %v397, %v395
    %v706 = vpack.c.bf16 %v398, %v396
    %v707 = vpack.c.bf16 %v401, %v399
    %v708 = vpack.c.bf16 %v402, %v400
    %v709 = vpack.c.bf16 %v405, %v403
    %v710 = vpack.c.bf16 %v406, %v404
    %v711 = vpack.c.bf16 %v409, %v407
    %v712 = vpack.c.bf16 %v410, %v408
    %v713 = vpack.c.bf16 %v413, %v411
    %v714 = vpack.c.bf16 %v414, %v412
    %v716 = vlaneseq
    %v717 = vshrl.u32 %v716, 7
    %v718 = vsub.s32 0, %v717
    %v719 = vrot.slane %v415, %v718
    %v720 = vlaneseq
    %v721 = vshrl.u32 %v720, 7
    %v722 = vsub.s32 1, %v721
    %v723 = vrot.slane %v415, %v722
    %726 = vmatprep.subr.bf16.mxu0 %v620
    %727 = vmatpush1.bf16.msra.mxu0 %v619
    %728 = vmatprep.subr.bf16.mxu0 %v622
    %729 = vmatpush1.bf16.msra.mxu0 %v621
    %730 = vmatprep.subr.bf16.mxu0 %v624
    %731 = vmatpush1.bf16.msra.mxu0 %v623
    %732 = vmatprep.subr.bf16.mxu0 %v626
    %733 = vmatpush1.bf16.msra.mxu0 %v625
    %734 = vmatprep.subr.bf16.mxu0 %v628
    %735 = vmatpush1.bf16.msra.mxu0 %v627
    %736 = vmatprep.subr.bf16.mxu0 %v630
    %737 = vmatpush1.bf16.msra.mxu0 %v629
    %738 = vmatprep.subr.bf16.mxu0 %v632
    %739 = vmatpush1.bf16.msra.mxu0 %v631
    %740 = vmatprep.subr.bf16.mxu0 %v634
    %741 = vmatpush1.bf16.msra.mxu0 %v633
    %742 = vmatprep.subr.bf16.mxu0 %v636
    %743 = vmatpush1.bf16.msra.mxu0 %v635
    %744 = vmatprep.subr.bf16.mxu0 %v638
    %745 = vmatpush1.bf16.msra.mxu0 %v637
    %746 = vmatprep.subr.bf16.mxu0 %v640
    %747 = vmatpush1.bf16.msra.mxu0 %v639
    %748 = vmatprep.subr.bf16.mxu0 %v642
    %749 = vmatpush1.bf16.msra.mxu0 %v641
    %750 = vmatprep.subr.bf16.mxu0 %v644
    %751 = vmatpush1.bf16.msra.mxu0 %v643
    %752 = vmatprep.subr.bf16.mxu0 %v646
    %753 = vmatpush1.bf16.msra.mxu0 %v645
    %754 = vmatprep.subr.bf16.mxu0 %v648
    %755 = vmatpush1.bf16.msra.mxu0 %v647
    %756 = vmatprep.subr.bf16.mxu0 %v650
    %757 = vmatpush1.bf16.msra.mxu0 %v649
    %758 = vmatprep.mubr.bf16.mxu0 %v604
    %759 = vmatmul.mubr.bf16.gmra.mrb[0].mxu0 %v603
    %v760 = vpop.f32.mrb[0].mxu0
    %v761 = vadd.f32 %v719, %v760
    %v762 = vpop.f32.mrb[0].mxu0
    %v763 = vadd.f32 %v723, %v762
    %v764 = vpop.f32.mrb[0].mxu0
    %v765 = vadd.f32 %v719, %v764
    %v766 = vpop.f32.mrb[0].mxu0
    %v767 = vadd.f32 %v723, %v766
    %768 = vmatprep.mubr.bf16.mxu0 %v608
    %769 = vmatmul.mubr.bf16.gmra.mrb[0].mxu0 %v607
    %v770 = vpop.f32.mrb[0].mxu0
    %v771 = vadd.f32 %v719, %v770
    %v772 = vpop.f32.mrb[0].mxu0
    %v773 = vadd.f32 %v723, %v772
    %v774 = vpop.f32.mrb[0].mxu0
    %v775 = vadd.f32 %v719, %v774
    %v776 = vpop.f32.mrb[0].mxu0
    %v777 = vadd.f32 %v723, %v776
    %778 = vmatprep.mubr.bf16.mxu0 %v612
    %779 = vmatmul.mubr.bf16.gmra.mrb[0].mxu0 %v611
    %v780 = vpop.f32.mrb[0].mxu0
    %v781 = vadd.f32 %v719, %v780
    %v782 = vpop.f32.mrb[0].mxu0
    %v783 = vadd.f32 %v723, %v782
    %v784 = vpop.f32.mrb[0].mxu0
    %v785 = vadd.f32 %v719, %v784
    %v786 = vpop.f32.mrb[0].mxu0
    %v787 = vadd.f32 %v723, %v786
    %788 = vmatprep.mubr.bf16.mxu0 %v616
    %789 = vmatmul.mubr.bf16.gmra.mrb[0].mxu0 %v615
    %v790 = vpop.f32.mrb[0].mxu0
    %v791 = vadd.f32 %v719, %v790
    %v792 = vpop.f32.mrb[0].mxu0
    %v793 = vadd.f32 %v723, %v792
    %v794 = vpop.f32.mrb[0].mxu0
    %v795 = vadd.f32 %v719, %v794
    %v796 = vpop.f32.mrb[0].mxu0
    %v797 = vadd.f32 %v723, %v796
    %798 = vdwg.mxu0
    %799 = vmatprep.subr.bf16.mxu0 %v652
    %800 = vmatpush1.bf16.msra.mxu0 %v651
    %801 = vmatprep.subr.bf16.mxu0 %v654
    %802 = vmatpush1.bf16.msra.mxu0 %v653
    %803 = vmatprep.subr.bf16.mxu0 %v656
    %804 = vmatpush1.bf16.msra.mxu0 %v655
    %805 = vmatprep.subr.bf16.mxu0 %v658
    %806 = vmatpush1.bf16.msra.mxu0 %v657
    %807 = vmatprep.subr.bf16.mxu0 %v660
    %808 = vmatpush1.bf16.msra.mxu0 %v659
    %809 = vmatprep.subr.bf16.mxu0 %v662
    %810 = vmatpush1.bf16.msra.mxu0 %v661
    %811 = vmatprep.subr.bf16.mxu0 %v664
    %812 = vmatpush1.bf16.msra.mxu0 %v663
    %813 = vmatprep.subr.bf16.mxu0 %v666
    %814 = vmatpush1.bf16.msra.mxu0 %v665
    %815 = vmatprep.subr.bf16.mxu0 %v668
    %816 = vmatpush1.bf16.msra.mxu0 %v667
    %817 = vmatprep.subr.bf16.mxu0 %v670
    %818 = vmatpush1.bf16.msra.mxu0 %v669
    %819 = vmatprep.subr.bf16.mxu0 %v672
    %820 = vmatpush1.bf16.msra.mxu0 %v671
    %821 = vmatprep.subr.bf16.mxu0 %v674
    %822 = vmatpush1.bf16.msra.mxu0 %v673
    %823 = vmatprep.subr.bf16.mxu0 %v676
    %824 = vmatpush1.bf16.msra.mxu0 %v675
    %825 = vmatprep.subr.bf16.mxu0 %v678
    %826 = vmatpush1.bf16.msra.mxu0 %v677
    %827 = vmatprep.subr.bf16.mxu0 %v680
    %828 = vmatpush1.bf16.msra.mxu0 %v679
    %829 = vmatprep.subr.bf16.mxu0 %v682
    %830 = vmatpush1.bf16.msra.mxu0 %v681
    %831 = vmatprep.mubr.bf16.mxu0 %v421
    %832 = vmatmul.mubr.bf16.gmra.mrb[0].mxu0 %v420
    %v833 = vpop.f32.mrb[0].mxu0
    %v834 = vadd.f32 %v761, %v833
    %v835 = vpop.f32.mrb[0].mxu0
    %v836 = vadd.f32 %v763, %v835
    %v837 = vpop.f32.mrb[0].mxu0
    %v838 = vadd.f32 %v765, %v837
    %v839 = vpop.f32.mrb[0].mxu0
    %v840 = vadd.f32 %v767, %v839
    %841 = vmatprep.mubr.bf16.mxu0 %v423
    %842 = vmatmul.mubr.bf16.gmra.mrb[0].mxu0 %v422
    %v843 = vpop.f32.mrb[0].mxu0
    %v844 = vadd.f32 %v771, %v843
    %v845 = vpop.f32.mrb[0].mxu0
    %v846 = vadd.f32 %v773, %v845
    %v847 = vpop.f32.mrb[0].mxu0
    %v848 = vadd.f32 %v775, %v847
    %v849 = vpop.f32.mrb[0].mxu0
    %v850 = vadd.f32 %v777, %v849
    %851 = vmatprep.mubr.bf16.mxu0 %v425
    %852 = vmatmul.mubr.bf16.gmra.mrb[0].mxu0 %v424
    %v853 = vpop.f32.mrb[0].mxu0
    %v854 = vadd.f32 %v781, %v853
    %v855 = vpop.f32.mrb[0].mxu0
    %v856 = vadd.f32 %v783, %v855
    %v857 = vpop.f32.mrb[0].mxu0
    %v858 = vadd.f32 %v785, %v857
    %v859 = vpop.f32.mrb[0].mxu0
    %v860 = vadd.f32 %v787, %v859
    %861 = vmatprep.mubr.bf16.mxu0 %v427
    %862 = vmatmul.mubr.bf16.gmra.mrb[0].mxu0 %v426
    %v863 = vpop.f32.mrb[0].mxu0
    %v864 = vadd.f32 %v791, %v863
    %v865 = vpop.f32.mrb[0].mxu0
    %v866 = vadd.f32 %v793, %v865
    %v867 = vpop.f32.mrb[0].mxu0
    %v868 = vadd.f32 %v795, %v867
    %v869 = vpop.f32.mrb[0].mxu0
    %v870 = vadd.f32 %v797, %v869
    %871 = vdwg.mxu0
    %872 = vmatprep.subr.bf16.mxu0 %v684
    %873 = vmatpush1.bf16.msra.mxu0 %v683
    %874 = vmatprep.subr.bf16.mxu0 %v686
    %875 = vmatpush1.bf16.msra.mxu0 %v685
    %876 = vmatprep.subr.bf16.mxu0 %v688
    %877 = vmatpush1.bf16.msra.mxu0 %v687
    %878 = vmatprep.subr.bf16.mxu0 %v690
    %879 = vmatpush1.bf16.msra.mxu0 %v689
    %880 = vmatprep.subr.bf16.mxu0 %v692
    %881 = vmatpush1.bf16.msra.mxu0 %v691
    %882 = vmatprep.subr.bf16.mxu0 %v694
    %883 = vmatpush1.bf16.msra.mxu0 %v693
    %884 = vmatprep.subr.bf16.mxu0 %v696
    %885 = vmatpush1.bf16.msra.mxu0 %v695
    %886 = vmatprep.subr.bf16.mxu0 %v698
    %887 = vmatpush1.bf16.msra.mxu0 %v697
    %888 = vmatprep.subr.bf16.mxu0 %v700
    %889 = vmatpush1.bf16.msra.mxu0 %v699
    %890 = vmatprep.subr.bf16.mxu0 %v702
    %891 = vmatpush1.bf16.msra.mxu0 %v701
    %892 = vmatprep.subr.bf16.mxu0 %v704
    %893 = vmatpush1.bf16.msra.mxu0 %v703
    %894 = vmatprep.subr.bf16.mxu0 %v706
    %895 = vmatpush1.bf16.msra.mxu0 %v705
    %896 = vmatprep.subr.bf16.mxu0 %v708
    %897 = vmatpush1.bf16.msra.mxu0 %v707
    %898 = vmatprep.subr.bf16.mxu0 %v710
    %899 = vmatpush1.bf16.msra.mxu0 %v709
    %900 = vmatprep.subr.bf16.mxu0 %v712
    %901 = vmatpush1.bf16.msra.mxu0 %v711
    %902 = vmatprep.subr.bf16.mxu0 %v714
    %903 = vmatpush1.bf16.msra.mxu0 %v713
    %904 = vmatprep.mubr.bf16.mxu0 %v606
    %905 = vmatmul.mubr.bf16.gmra.mrb[0].mxu0 %v605
    %v906 = vpop.f32.mrb[0].mxu0
    %v907 = vadd.f32 %v834, %v906
    %v908 = vpop.f32.mrb[0].mxu0
    %v909 = vadd.f32 %v836, %v908
    %v910 = vpop.f32.mrb[0].mxu0
    %v911 = vadd.f32 %v838, %v910
    %v912 = vpop.f32.mrb[0].mxu0
    %v913 = vadd.f32 %v840, %v912
    %914 = vmatprep.mubr.bf16.mxu0 %v610
    %915 = vmatmul.mubr.bf16.gmra.mrb[0].mxu0 %v609
    %v916 = vpop.f32.mrb[0].mxu0
    %v917 = vadd.f32 %v844, %v916
    %v918 = vpop.f32.mrb[0].mxu0
    %v919 = vadd.f32 %v846, %v918
    %v920 = vpop.f32.mrb[0].mxu0
    %v921 = vadd.f32 %v848, %v920
    %v922 = vpop.f32.mrb[0].mxu0
    %v923 = vadd.f32 %v850, %v922
    %924 = vmatprep.mubr.bf16.mxu0 %v614
    %925 = vmatmul.mubr.bf16.gmra.mrb[0].mxu0 %v613
    %v926 = vpop.f32.mrb[0].mxu0
    %v927 = vadd.f32 %v854, %v926
    %v928 = vpop.f32.mrb[0].mxu0
    %v929 = vadd.f32 %v856, %v928
    %v930 = vpop.f32.mrb[0].mxu0
    %v931 = vadd.f32 %v858, %v930
    %v932 = vpop.f32.mrb[0].mxu0
    %v933 = vadd.f32 %v860, %v932
    %934 = vmatprep.mubr.bf16.mxu0 %v618
    %935 = vmatmul.mubr.bf16.gmra.mrb[0].mxu0 %v617
    %v936 = vpop.f32.mrb[0].mxu0
    %v937 = vadd.f32 %v864, %v936
    %v938 = vpop.f32.mrb[0].mxu0
    %v939 = vadd.f32 %v866, %v938
    %v940 = vpop.f32.mrb[0].mxu0
    %v941 = vadd.f32 %v868, %v940
    %v942 = vpop.f32.mrb[0].mxu0
    %v943 = vadd.f32 %v870, %v942
    %944 = vdwg.mxu0
    %v945 = vmax.f32 %v907, 0.0
    %v946 = vmax.f32 %v909, 0.0
    %v947 = vmax.f32 %v911, 0.0
    %v948 = vmax.f32 %v913, 0.0
    %v949 = vmax.f32 %v917, 0.0
    %v950 = vmax.f32 %v919, 0.0
    %v951 = vmax.f32 %v921, 0.0
    %v952 = vmax.f32 %v923, 0.0
    %v953 = vmax.f32 %v927, 0.0
    %v954 = vmax.f32 %v929, 0.0
    %v955 = vmax.f32 %v931, 0.0
    %v956 = vmax.f32 %v933, 0.0
    %v957 = vmax.f32 %v937, 0.0
    %v958 = vmax.f32 %v939, 0.0
    %v959 = vmax.f32 %v941, 0.0
    %v960 = vmax.f32 %v943, 0.0
    %961 = vst [vmem:[%s11] sm:$0xff] %v945
    %962 = vst [vmem:[%s11 + $0x8] sm:$0xff] %v946
    %963 = vst [vmem:[%s11 + $0x10] sm:$0xff] %v947
    %964 = vst [vmem:[%s11 + $0x18] sm:$0xff] %v948
    %965 = vst [vmem:[%s11 + $0x20] sm:$0xff] %v949
    %966 = vst [vmem:[%s11 + $0x28] sm:$0xff] %v950
    %967 = vst [vmem:[%s11 + $0x30] sm:$0xff] %v951
    %968 = vst [vmem:[%s11 + $0x38] sm:$0xff] %v952
    %969 = vst [vmem:[%s11 + $0x40] sm:$0xff] %v953
    %970 = vst [vmem:[%s11 + $0x48] sm:$0xff] %v954
    %971 = vst [vmem:[%s11 + $0x50] sm:$0xff] %v955
    %972 = vst [vmem:[%s11 + $0x58] sm:$0xff] %v956
    %973 = vst [vmem:[%s11 + $0x60] sm:$0xff] %v957
    %974 = vst [vmem:[%s11 + $0x68] sm:$0xff] %v958
    %975 = vst [vmem:[%s11 + $0x70] sm:$0xff] %v959
    %976 = vst [vmem:[%s11 + $0x78] sm:$0xff] %v960
    %v977 = vld [vmem:[#allocation4] sm:$0xff]
    %v978 = vld [vmem:[#allocation4 + $0x8] sm:$0xff]
    %v979 = vld [vmem:[#allocation4 + $0x10] sm:$0xff]
    %v980 = vld [vmem:[#allocation4 + $0x18] sm:$0xff]
    %v981 = vld [vmem:[#allocation4 + $0x20] sm:$0xff]
    %v982 = vld [vmem:[#allocation4 + $0x28] sm:$0xff]
    %v983 = vld [vmem:[#allocation4 + $0x30] sm:$0xff]
    %v984 = vld [vmem:[#allocation4 + $0x38] sm:$0xff]
    %v985 = vld [vmem:[#allocation4 + $0x40] sm:$0xff]
    %v986 = vld [vmem:[#allocation4 + $0x48] sm:$0xff]
    %v987 = vld [vmem:[#allocation4 + $0x50] sm:$0xff]
    %v988 = vld [vmem:[#allocation4 + $0x58] sm:$0xff]
    %v989 = vld [vmem:[#allocation4 + $0x60] sm:$0xff]
    %v990 = vld [vmem:[#allocation4 + $0x68] sm:$0xff]
    %v991 = vld [vmem:[#allocation4 + $0x70] sm:$0xff]
    %v992 = vld [vmem:[#allocation4 + $0x78] sm:$0xff]
    %v993 = vld [vmem:[#allocation4 + $0x80] sm:$0xff]
    %v994 = vld [vmem:[#allocation4 + $0x88] sm:$0xff]
    %v995 = vld [vmem:[#allocation4 + $0x90] sm:$0xff]
    %v996 = vld [vmem:[#allocation4 + $0x98] sm:$0xff]
    %v997 = vld [vmem:[#allocation4 + $0xa0] sm:$0xff]
    %v998 = vld [vmem:[#allocation4 + $0xa8] sm:$0xff]
    %v999 = vld [vmem:[#allocation4 + $0xb0] sm:$0xff]
    %v1000 = vld [vmem:[#allocation4 + $0xb8] sm:$0xff]
    %v1001 = vld [vmem:[#allocation4 + $0xc0] sm:$0xff]
    %v1002 = vld [vmem:[#allocation4 + $0xc8] sm:$0xff]
    %v1003 = vld [vmem:[#allocation4 + $0xd0] sm:$0xff]
    %v1004 = vld [vmem:[#allocation4 + $0xd8] sm:$0xff]
    %v1005 = vld [vmem:[#allocation4 + $0xe0] sm:$0xff]
    %v1006 = vld [vmem:[#allocation4 + $0xe8] sm:$0xff]
    %v1007 = vld [vmem:[#allocation4 + $0xf0] sm:$0xff]
    %v1008 = vld [vmem:[#allocation4 + $0xf8] sm:$0xff]
    %v1009 = vld [vmem:[#allocation4 + $0x100] sm:$0xff]
    %v1010 = vld [vmem:[#allocation4 + $0x108] sm:$0xff]
    %v1011 = vld [vmem:[#allocation4 + $0x110] sm:$0xff]
    %v1012 = vld [vmem:[#allocation4 + $0x118] sm:$0xff]
    %v1013 = vld [vmem:[#allocation4 + $0x120] sm:$0xff]
    %v1014 = vld [vmem:[#allocation4 + $0x128] sm:$0xff]
    %v1015 = vld [vmem:[#allocation4 + $0x130] sm:$0xff]
    %v1016 = vld [vmem:[#allocation4 + $0x138] sm:$0xff]
    %v1017 = vld [vmem:[#allocation4 + $0x140] sm:$0xff]
    %v1018 = vld [vmem:[#allocation4 + $0x148] sm:$0xff]
    %v1019 = vld [vmem:[#allocation4 + $0x150] sm:$0xff]
    %v1020 = vld [vmem:[#allocation4 + $0x158] sm:$0xff]
    %v1021 = vld [vmem:[#allocation4 + $0x160] sm:$0xff]
    %v1022 = vld [vmem:[#allocation4 + $0x168] sm:$0xff]
    %v1023 = vld [vmem:[#allocation4 + $0x170] sm:$0xff]
    %v1024 = vld [vmem:[#allocation4 + $0x178] sm:$0xff]
    %v1025 = vld [vmem:[#allocation4 + $0x180] sm:$0xff]
    %v1026 = vld [vmem:[#allocation4 + $0x188] sm:$0xff]
    %v1027 = vld [vmem:[#allocation4 + $0x190] sm:$0xff]
    %v1028 = vld [vmem:[#allocation4 + $0x198] sm:$0xff]
    %v1029 = vld [vmem:[#allocation4 + $0x1a0] sm:$0xff]
    %v1030 = vld [vmem:[#allocation4 + $0x1a8] sm:$0xff]
    %v1031 = vld [vmem:[#allocation4 + $0x1b0] sm:$0xff]
    %v1032 = vld [vmem:[#allocation4 + $0x1b8] sm:$0xff]
    %v1033 = vld [vmem:[#allocation4 + $0x1c0] sm:$0xff]
    %v1034 = vld [vmem:[#allocation4 + $0x1c8] sm:$0xff]
    %v1035 = vld [vmem:[#allocation4 + $0x1d0] sm:$0xff]
    %v1036 = vld [vmem:[#allocation4 + $0x1d8] sm:$0xff]
    %v1037 = vld [vmem:[#allocation4 + $0x1e0] sm:$0xff]
    %v1038 = vld [vmem:[#allocation4 + $0x1e8] sm:$0xff]
    %v1039 = vld [vmem:[#allocation4 + $0x1f0] sm:$0xff]
    %v1040 = vld [vmem:[#allocation4 + $0x1f8] sm:$0xff]
    %v1041 = vld [vmem:[#allocation4 + $0x200] sm:$0xff]
    %v1042 = vld [vmem:[#allocation4 + $0x208] sm:$0xff]
    %v1043 = vld [vmem:[#allocation4 + $0x210] sm:$0xff]
    %v1044 = vld [vmem:[#allocation4 + $0x218] sm:$0xff]
    %v1045 = vld [vmem:[#allocation4 + $0x220] sm:$0xff]
    %v1046 = vld [vmem:[#allocation4 + $0x228] sm:$0xff]
    %v1047 = vld [vmem:[#allocation4 + $0x230] sm:$0xff]
    %v1048 = vld [vmem:[#allocation4 + $0x238] sm:$0xff]
    %v1049 = vld [vmem:[#allocation4 + $0x240] sm:$0xff]
    %v1050 = vld [vmem:[#allocation4 + $0x248] sm:$0xff]
    %v1051 = vld [vmem:[#allocation4 + $0x250] sm:$0xff]
    %v1052 = vld [vmem:[#allocation4 + $0x258] sm:$0xff]
    %v1053 = vld [vmem:[#allocation4 + $0x260] sm:$0xff]
    %v1054 = vld [vmem:[#allocation4 + $0x268] sm:$0xff]
    %v1055 = vld [vmem:[#allocation4 + $0x270] sm:$0xff]
    %v1056 = vld [vmem:[#allocation4 + $0x278] sm:$0xff]
    %v1057 = vld [vmem:[#allocation4 + $0x280] sm:$0xff]
    %v1058 = vld [vmem:[#allocation4 + $0x288] sm:$0xff]
    %v1059 = vld [vmem:[#allocation4 + $0x290] sm:$0xff]
    %v1060 = vld [vmem:[#allocation4 + $0x298] sm:$0xff]
    %v1061 = vld [vmem:[#allocation4 + $0x2a0] sm:$0xff]
    %v1062 = vld [vmem:[#allocation4 + $0x2a8] sm:$0xff]
    %v1063 = vld [vmem:[#allocation4 + $0x2b0] sm:$0xff]
    %v1064 = vld [vmem:[#allocation4 + $0x2b8] sm:$0xff]
    %v1065 = vld [vmem:[#allocation4 + $0x2c0] sm:$0xff]
    %v1066 = vld [vmem:[#allocation4 + $0x2c8] sm:$0xff]
    %v1067 = vld [vmem:[#allocation4 + $0x2d0] sm:$0xff]
    %v1068 = vld [vmem:[#allocation4 + $0x2d8] sm:$0xff]
    %v1069 = vld [vmem:[#allocation4 + $0x2e0] sm:$0xff]
    %v1070 = vld [vmem:[#allocation4 + $0x2e8] sm:$0xff]
    %v1071 = vld [vmem:[#allocation4 + $0x2f0] sm:$0xff]
    %v1072 = vld [vmem:[#allocation4 + $0x2f8] sm:$0xff]
    %v1073 = vld [vmem:[#allocation4 + $0x300] sm:$0xff]
    %v1074 = vld [vmem:[#allocation4 + $0x308] sm:$0xff]
    %v1075 = vld [vmem:[#allocation4 + $0x310] sm:$0xff]
    %v1076 = vld [vmem:[#allocation4 + $0x318] sm:$0xff]
    %v1077 = vld [vmem:[#allocation4 + $0x320] sm:$0xff]
    %v1078 = vld [vmem:[#allocation4 + $0x328] sm:$0xff]
    %v1079 = vld [vmem:[#allocation4 + $0x330] sm:$0xff]
    %v1080 = vld [vmem:[#allocation4 + $0x338] sm:$0xff]
    %v1081 = vld [vmem:[#allocation4 + $0x340] sm:$0xff]
    %v1082 = vld [vmem:[#allocation4 + $0x348] sm:$0xff]
    %v1083 = vld [vmem:[#allocation4 + $0x350] sm:$0xff]
    %v1084 = vld [vmem:[#allocation4 + $0x358] sm:$0xff]
    %v1085 = vld [vmem:[#allocation4 + $0x360] sm:$0xff]
    %v1086 = vld [vmem:[#allocation4 + $0x368] sm:$0xff]
    %v1087 = vld [vmem:[#allocation4 + $0x370] sm:$0xff]
    %v1088 = vld [vmem:[#allocation4 + $0x378] sm:$0xff]
    %v1089 = vld [vmem:[#allocation4 + $0x380] sm:$0xff]
    %v1090 = vld [vmem:[#allocation4 + $0x388] sm:$0xff]
    %v1091 = vld [vmem:[#allocation4 + $0x390] sm:$0xff]
    %v1092 = vld [vmem:[#allocation4 + $0x398] sm:$0xff]
    %v1093 = vld [vmem:[#allocation4 + $0x3a0] sm:$0xff]
    %v1094 = vld [vmem:[#allocation4 + $0x3a8] sm:$0xff]
    %v1095 = vld [vmem:[#allocation4 + $0x3b0] sm:$0xff]
    %v1096 = vld [vmem:[#allocation4 + $0x3b8] sm:$0xff]
    %v1097 = vld [vmem:[#allocation4 + $0x3c0] sm:$0xff]
    %v1098 = vld [vmem:[#allocation4 + $0x3c8] sm:$0xff]
    %v1099 = vld [vmem:[#allocation4 + $0x3d0] sm:$0xff]
    %v1100 = vld [vmem:[#allocation4 + $0x3d8] sm:$0xff]
    %v1101 = vld [vmem:[#allocation4 + $0x3e0] sm:$0xff]
    %v1102 = vld [vmem:[#allocation4 + $0x3e8] sm:$0xff]
    %v1103 = vld [vmem:[#allocation4 + $0x3f0] sm:$0xff]
    %v1104 = vld [vmem:[#allocation4 + $0x3f8] sm:$0xff]
    %v1105 = vld [vmem:[#allocation4 + $0x400] sm:$0xff]
    %v1106 = vld [vmem:[#allocation4 + $0x408] sm:$0xff]
    %v1107 = vld [vmem:[#allocation4 + $0x410] sm:$0xff]
    %v1108 = vld [vmem:[#allocation4 + $0x418] sm:$0xff]
    %v1109 = vld [vmem:[#allocation4 + $0x420] sm:$0xff]
    %v1110 = vld [vmem:[#allocation4 + $0x428] sm:$0xff]
    %v1111 = vld [vmem:[#allocation4 + $0x430] sm:$0xff]
    %v1112 = vld [vmem:[#allocation4 + $0x438] sm:$0xff]
    %v1113 = vld [vmem:[#allocation4 + $0x440] sm:$0xff]
    %v1114 = vld [vmem:[#allocation4 + $0x448] sm:$0xff]
    %v1115 = vld [vmem:[#allocation4 + $0x450] sm:$0xff]
    %v1116 = vld [vmem:[#allocation4 + $0x458] sm:$0xff]
    %v1117 = vld [vmem:[#allocation4 + $0x460] sm:$0xff]
    %v1118 = vld [vmem:[#allocation4 + $0x468] sm:$0xff]
    %v1119 = vld [vmem:[#allocation4 + $0x470] sm:$0xff]
    %v1120 = vld [vmem:[#allocation4 + $0x478] sm:$0xff]
    %v1121 = vld [vmem:[#allocation4 + $0x480] sm:$0xff]
    %v1122 = vld [vmem:[#allocation4 + $0x488] sm:$0xff]
    %v1123 = vld [vmem:[#allocation4 + $0x490] sm:$0xff]
    %v1124 = vld [vmem:[#allocation4 + $0x498] sm:$0xff]
    %v1125 = vld [vmem:[#allocation4 + $0x4a0] sm:$0xff]
    %v1126 = vld [vmem:[#allocation4 + $0x4a8] sm:$0xff]
    %v1127 = vld [vmem:[#allocation4 + $0x4b0] sm:$0xff]
    %v1128 = vld [vmem:[#allocation4 + $0x4b8] sm:$0xff]
    %v1129 = vld [vmem:[#allocation4 + $0x4c0] sm:$0xff]
    %v1130 = vld [vmem:[#allocation4 + $0x4c8] sm:$0xff]
    %v1131 = vld [vmem:[#allocation4 + $0x4d0] sm:$0xff]
    %v1132 = vld [vmem:[#allocation4 + $0x4d8] sm:$0xff]
    %v1133 = vld [vmem:[#allocation4 + $0x4e0] sm:$0xff]
    %v1134 = vld [vmem:[#allocation4 + $0x4e8] sm:$0xff]
    %v1135 = vld [vmem:[#allocation4 + $0x4f0] sm:$0xff]
    %v1136 = vld [vmem:[#allocation4 + $0x4f8] sm:$0xff]
    %v1137 = vld [vmem:[#allocation4 + $0x500] sm:$0xff]
    %v1138 = vld [vmem:[#allocation4 + $0x508] sm:$0xff]
    %v1139 = vld [vmem:[#allocation4 + $0x510] sm:$0xff]
    %v1140 = vld [vmem:[#allocation4 + $0x518] sm:$0xff]
    %v1141 = vld [vmem:[#allocation4 + $0x520] sm:$0xff]
    %v1142 = vld [vmem:[#allocation4 + $0x528] sm:$0xff]
    %v1143 = vld [vmem:[#allocation4 + $0x530] sm:$0xff]
    %v1144 = vld [vmem:[#allocation4 + $0x538] sm:$0xff]
    %v1145 = vld [vmem:[#allocation4 + $0x540] sm:$0xff]
    %v1146 = vld [vmem:[#allocation4 + $0x548] sm:$0xff]
    %v1147 = vld [vmem:[#allocation4 + $0x550] sm:$0xff]
    %v1148 = vld [vmem:[#allocation4 + $0x558] sm:$0xff]
    %v1149 = vld [vmem:[#allocation4 + $0x560] sm:$0xff]
    %v1150 = vld [vmem:[#allocation4 + $0x568] sm:$0xff]
    %v1151 = vld [vmem:[#allocation4 + $0x570] sm:$0xff]
    %v1152 = vld [vmem:[#allocation4 + $0x578] sm:$0xff]
    %v1153 = vld [vmem:[#allocation4 + $0x580] sm:$0xff]
    %v1154 = vld [vmem:[#allocation4 + $0x588] sm:$0xff]
    %v1155 = vld [vmem:[#allocation4 + $0x590] sm:$0xff]
    %v1156 = vld [vmem:[#allocation4 + $0x598] sm:$0xff]
    %v1157 = vld [vmem:[#allocation4 + $0x5a0] sm:$0xff]
    %v1158 = vld [vmem:[#allocation4 + $0x5a8] sm:$0xff]
    %v1159 = vld [vmem:[#allocation4 + $0x5b0] sm:$0xff]
    %v1160 = vld [vmem:[#allocation4 + $0x5b8] sm:$0xff]
    %v1161 = vld [vmem:[#allocation4 + $0x5c0] sm:$0xff]
    %v1162 = vld [vmem:[#allocation4 + $0x5c8] sm:$0xff]
    %v1163 = vld [vmem:[#allocation4 + $0x5d0] sm:$0xff]
    %v1164 = vld [vmem:[#allocation4 + $0x5d8] sm:$0xff]
    %v1165 = vld [vmem:[#allocation4 + $0x5e0] sm:$0xff]
    %v1166 = vld [vmem:[#allocation4 + $0x5e8] sm:$0xff]
    %v1167 = vld [vmem:[#allocation4 + $0x5f0] sm:$0xff]
    %v1168 = vld [vmem:[#allocation4 + $0x5f8] sm:$0xff]
    %v1169 = vld [vmem:[%s8] sm:$0x3]
    %v1170 = vpack.c.bf16 %v947, %v945
    %v1171 = vpack.c.bf16 %v948, %v946
    %v1172 = vpack.c.bf16 %v951, %v949
    %v1173 = vpack.c.bf16 %v952, %v950
    %v1174 = vpack.c.bf16 %v955, %v953
    %v1175 = vpack.c.bf16 %v956, %v954
    %v1176 = vpack.c.bf16 %v959, %v957
    %v1177 = vpack.c.bf16 %v960, %v958
    %1178 = vmatprep.subr.bf16.mxu0 %v1171
    %1179 = vmatpush1.bf16.msra.mxu0 %v1170
    %1180 = vmatprep.subr.bf16.mxu0 %v1173
    %1181 = vmatpush1.bf16.msra.mxu0 %v1172
    %1182 = vmatprep.subr.bf16.mxu0 %v1175
    %1183 = vmatpush1.bf16.msra.mxu0 %v1174
    %1184 = vmatprep.subr.bf16.mxu0 %v1177
    %1185 = vmatpush1.bf16.msra.mxu0 %v1176
    %1186 = vmatprep.subr.bf16.mxu0 0
    %1187 = vmatpush1.bf16.msra.mxu0 0
    %1188 = vmatprep.subr.bf16.mxu0 0
    %1189 = vmatpush1.bf16.msra.mxu0 0
    %1190 = vmatprep.subr.bf16.mxu0 0
    %1191 = vmatpush1.bf16.msra.mxu0 0
    %1192 = vmatprep.subr.bf16.mxu0 0
    %1193 = vmatpush1.bf16.msra.mxu0 0
    %1194 = vmatprep.subr.bf16.mxu0 0
    %1195 = vmatpush1.bf16.msra.mxu0 0
    %1196 = vmatprep.subr.bf16.mxu0 0
    %1197 = vmatpush1.bf16.msra.mxu0 0
    %1198 = vmatprep.subr.bf16.mxu0 0
    %1199 = vmatpush1.bf16.msra.mxu0 0
    %1200 = vmatprep.subr.bf16.mxu0 0
    %1201 = vmatpush1.bf16.msra.mxu0 0
    %1202 = vmatprep.subr.bf16.mxu0 0
    %1203 = vmatpush1.bf16.msra.mxu0 0
    %1204 = vmatprep.subr.bf16.mxu0 0
    %1205 = vmatpush1.bf16.msra.mxu0 0
    %1206 = vmatprep.subr.bf16.mxu0 0
    %1207 = vmatpush1.bf16.msra.mxu0 0
    %1208 = vmatprep.subr.bf16.mxu0 0
    %1209 = vmatpush1.bf16.msra.mxu0 0
    %1210 = vmatprep.mubr.bf16.mxu0 0
    %1211 = vmatmul.mubr.bf16.gmra.mrb[0].mxu0 %v430
    %v1212 = vpop.f32.mrb[0].mxu0
    %v1213 = vadd.f32 0.0, %v1212
    %v1214 = vpop.f32.mrb[0].mxu0
    %v1215 = vadd.f32 0.0, %v1214
    %v1216 = vpop.f32.mrb[0].mxu0
    %v1217 = vadd.f32 0.0, %v1216
    %v1218 = vpop.f32.mrb[0].mxu0
    %v1219 = vadd.f32 0.0, %v1218
    %1220 = vmatprep.mubr.bf16.mxu0 0
    %1221 = vmatmul.mubr.bf16.gmra.mrb[0].mxu0 %v433
    %v1222 = vpop.f32.mrb[0].mxu0
    %v1223 = vadd.f32 0.0, %v1222
    %v1224 = vpop.f32.mrb[0].mxu0
    %v1225 = vadd.f32 0.0, %v1224
    %v1226 = vpop.f32.mrb[0].mxu0
    %v1227 = vadd.f32 0.0, %v1226
    %v1228 = vpop.f32.mrb[0].mxu0
    %v1229 = vadd.f32 0.0, %v1228
    %1230 = vmatprep.mubr.bf16.mxu0 0
    %1231 = vmatmul.mubr.bf16.gmra.mrb[0].mxu0 %v436
    %v1232 = vpop.f32.mrb[0].mxu0
    %v1233 = vadd.f32 0.0, %v1232
    %v1234 = vpop.f32.mrb[0].mxu0
    %v1235 = vadd.f32 0.0, %v1234
    %v1236 = vpop.f32.mrb[0].mxu0
    %v1237 = vadd.f32 0.0, %v1236
    %v1238 = vpop.f32.mrb[0].mxu0
    %v1239 = vadd.f32 0.0, %v1238
    %1240 = vmatprep.mubr.bf16.mxu0 0
    %1241 = vmatmul.mubr.bf16.gmra.mrb[0].mxu0 %v439
    %v1242 = vpop.f32.mrb[0].mxu0
    %v1243 = vadd.f32 0.0, %v1242
    %v1244 = vpop.f32.mrb[0].mxu0
    %v1245 = vadd.f32 0.0, %v1244
    %v1246 = vpop.f32.mrb[0].mxu0
    %v1247 = vadd.f32 0.0, %v1246
    %v1248 = vpop.f32.mrb[0].mxu0
    %v1249 = vadd.f32 0.0, %v1248
    %1250 = vdwg.mxu0
    %1251 = vmatprep.subr.bf16.mxu0 %v1171
    %1252 = vmatpush1.bf16.msra.mxu0 %v1170
    %1253 = vmatprep.subr.bf16.mxu0 %v1173
    %1254 = vmatpush1.bf16.msra.mxu0 %v1172
    %1255 = vmatprep.subr.bf16.mxu0 %v1175
    %1256 = vmatpush1.bf16.msra.mxu0 %v1174
    %1257 = vmatprep.subr.bf16.mxu0 %v1177
    %1258 = vmatpush1.bf16.msra.mxu0 %v1176
    %1259 = vmatprep.subr.bf16.mxu0 0
    %1260 = vmatpush1.bf16.msra.mxu0 0
    %1261 = vmatprep.subr.bf16.mxu0 0
    %1262 = vmatpush1.bf16.msra.mxu0 0
    %1263 = vmatprep.subr.bf16.mxu0 0
    %1264 = vmatpush1.bf16.msra.mxu0 0
    %1265 = vmatprep.subr.bf16.mxu0 0
    %1266 = vmatpush1.bf16.msra.mxu0 0
    %1267 = vmatprep.subr.bf16.mxu0 0
    %1268 = vmatpush1.bf16.msra.mxu0 0
    %1269 = vmatprep.subr.bf16.mxu0 0
    %1270 = vmatpush1.bf16.msra.mxu0 0
    %1271 = vmatprep.subr.bf16.mxu0 0
    %1272 = vmatpush1.bf16.msra.mxu0 0
    %1273 = vmatprep.subr.bf16.mxu0 0
    %1274 = vmatpush1.bf16.msra.mxu0 0
    %1275 = vmatprep.subr.bf16.mxu0 0
    %1276 = vmatpush1.bf16.msra.mxu0 0
    %1277 = vmatprep.subr.bf16.mxu0 0
    %1278 = vmatpush1.bf16.msra.mxu0 0
    %1279 = vmatprep.subr.bf16.mxu0 0
    %1280 = vmatpush1.bf16.msra.mxu0 0
    %1281 = vmatprep.subr.bf16.mxu0 0
    %1282 = vmatpush1.bf16.msra.mxu0 0
    %1283 = vmatprep.mubr.bf16.mxu0 0
    %1284 = vmatmul.mubr.bf16.gmra.mrb[0].mxu0 %v519
    %v1285 = vpop.f32.mrb[0].mxu0
    %v1286 = vadd.f32 0.0, %v1285
    %v1287 = vpop.f32.mrb[0].mxu0
    %v1288 = vadd.f32 0.0, %v1287
    %v1289 = vpop.f32.mrb[0].mxu0
    %v1290 = vadd.f32 0.0, %v1289
    %v1291 = vpop.f32.mrb[0].mxu0
    %v1292 = vadd.f32 0.0, %v1291
    %1293 = vmatprep.mubr.bf16.mxu0 0
    %1294 = vmatmul.mubr.bf16.gmra.mrb[0].mxu0 %v522
    %v1295 = vpop.f32.mrb[0].mxu0
    %v1296 = vadd.f32 0.0, %v1295
    %v1297 = vpop.f32.mrb[0].mxu0
    %v1298 = vadd.f32 0.0, %v1297
    %v1299 = vpop.f32.mrb[0].mxu0
    %v1300 = vadd.f32 0.0, %v1299
    %v1301 = vpop.f32.mrb[0].mxu0
    %v1302 = vadd.f32 0.0, %v1301
    %1303 = vmatprep.mubr.bf16.mxu0 0
    %1304 = vmatmul.mubr.bf16.gmra.mrb[0].mxu0 %v525
    %v1305 = vpop.f32.mrb[0].mxu0
    %v1306 = vadd.f32 0.0, %v1305
    %v1307 = vpop.f32.mrb[0].mxu0
    %v1308 = vadd.f32 0.0, %v1307
    %v1309 = vpop.f32.mrb[0].mxu0
    %v1310 = vadd.f32 0.0, %v1309
    %v1311 = vpop.f32.mrb[0].mxu0
    %v1312 = vadd.f32 0.0, %v1311
    %1313 = vmatprep.mubr.bf16.mxu0 0
    %1314 = vmatmul.mubr.bf16.gmra.mrb[0].mxu0 %v528
    %v1315 = vpop.f32.mrb[0].mxu0
    %v1316 = vadd.f32 0.0, %v1315
    %v1317 = vpop.f32.mrb[0].mxu0
    %v1318 = vadd.f32 0.0, %v1317
    %v1319 = vpop.f32.mrb[0].mxu0
    %v1320 = vadd.f32 0.0, %v1319
    %v1321 = vpop.f32.mrb[0].mxu0
    %v1322 = vadd.f32 0.0, %v1321
    %1323 = vdwg.mxu0
    %v1324 = vpack.c.bf16 %v1217, %v1213
    %v1325 = vpack.c.bf16 %v1219, %v1215
    %v1326 = vpack.c.bf16 %v1290, %v1286
    %v1327 = vpack.c.bf16 %v1292, %v1288
    %v1328 = vpack.c.bf16 %v1227, %v1223
    %v1329 = vpack.c.bf16 %v1229, %v1225
    %v1330 = vpack.c.bf16 %v1300, %v1296
    %v1331 = vpack.c.bf16 %v1302, %v1298
    %v1332 = vpack.c.bf16 %v1237, %v1233
    %v1333 = vpack.c.bf16 %v1239, %v1235
    %v1334 = vpack.c.bf16 %v1310, %v1306
    %v1335 = vpack.c.bf16 %v1312, %v1308
    %v1336 = vpack.c.bf16 %v1247, %v1243
    %v1337 = vpack.c.bf16 %v1249, %v1245
    %v1338 = vpack.c.bf16 %v1320, %v1316
    %v1339 = vpack.c.bf16 %v1322, %v1318
    %v1340 = vpack.c.bf16 %v979, %v977
    %v1341 = vpack.c.bf16 %v980, %v978
    %v1342 = vpack.c.bf16 %v983, %v981
    %v1343 = vpack.c.bf16 %v984, %v982
    %v1344 = vpack.c.bf16 %v987, %v985
    %v1345 = vpack.c.bf16 %v988, %v986
    %v1346 = vpack.c.bf16 %v991, %v989
    %v1347 = vpack.c.bf16 %v992, %v990
    %v1348 = vpack.c.bf16 %v995, %v993
    %v1349 = vpack.c.bf16 %v996, %v994
    %v1350 = vpack.c.bf16 %v999, %v997
    %v1351 = vpack.c.bf16 %v1000, %v998
    %v1352 = vpack.c.bf16 %v1003, %v1001
    %v1353 = vpack.c.bf16 %v1004, %v1002
    %v1354 = vpack.c.bf16 %v1007, %v1005
    %v1355 = vpack.c.bf16 %v1008, %v1006
    %v1356 = vpack.c.bf16 %v1011, %v1009
    %v1357 = vpack.c.bf16 %v1012, %v1010
    %v1358 = vpack.c.bf16 %v1015, %v1013
    %v1359 = vpack.c.bf16 %v1016, %v1014
    %v1360 = vpack.c.bf16 %v1019, %v1017
    %v1361 = vpack.c.bf16 %v1020, %v1018
    %v1362 = vpack.c.bf16 %v1023, %v1021
    %v1363 = vpack.c.bf16 %v1024, %v1022
    %v1364 = vpack.c.bf16 %v1027, %v1025
    %v1365 = vpack.c.bf16 %v1028, %v1026
    %v1366 = vpack.c.bf16 %v1031, %v1029
    %v1367 = vpack.c.bf16 %v1032, %v1030
    %v1368 = vpack.c.bf16 %v1035, %v1033
    %v1369 = vpack.c.bf16 %v1036, %v1034
    %v1370 = vpack.c.bf16 %v1039, %v1037
    %v1371 = vpack.c.bf16 %v1040, %v1038
    %v1372 = vpack.c.bf16 %v1043, %v1041
    %v1373 = vpack.c.bf16 %v1044, %v1042
    %v1374 = vpack.c.bf16 %v1047, %v1045
    %v1375 = vpack.c.bf16 %v1048, %v1046
    %v1376 = vpack.c.bf16 %v1051, %v1049
    %v1377 = vpack.c.bf16 %v1052, %v1050
    %v1378 = vpack.c.bf16 %v1055, %v1053
    %v1379 = vpack.c.bf16 %v1056, %v1054
    %v1380 = vpack.c.bf16 %v1059, %v1057
    %v1381 = vpack.c.bf16 %v1060, %v1058
    %v1382 = vpack.c.bf16 %v1063, %v1061
    %v1383 = vpack.c.bf16 %v1064, %v1062
    %v1384 = vpack.c.bf16 %v1067, %v1065
    %v1385 = vpack.c.bf16 %v1068, %v1066
    %v1386 = vpack.c.bf16 %v1071, %v1069
    %v1387 = vpack.c.bf16 %v1072, %v1070
    %v1388 = vpack.c.bf16 %v1075, %v1073
    %v1389 = vpack.c.bf16 %v1076, %v1074
    %v1390 = vpack.c.bf16 %v1079, %v1077
    %v1391 = vpack.c.bf16 %v1080, %v1078
    %v1392 = vpack.c.bf16 %v1083, %v1081
    %v1393 = vpack.c.bf16 %v1084, %v1082
    %v1394 = vpack.c.bf16 %v1087, %v1085
    %v1395 = vpack.c.bf16 %v1088, %v1086
    %v1396 = vpack.c.bf16 %v1091, %v1089
    %v1397 = vpack.c.bf16 %v1092, %v1090
    %v1398 = vpack.c.bf16 %v1095, %v1093
    %v1399 = vpack.c.bf16 %v1096, %v1094
    %v1400 = vpack.c.bf16 %v1099, %v1097
    %v1401 = vpack.c.bf16 %v1100, %v1098
    %v1402 = vpack.c.bf16 %v1103, %v1101
    %v1403 = vpack.c.bf16 %v1104, %v1102
    %v1404 = vpack.c.bf16 %v1107, %v1105
    %v1405 = vpack.c.bf16 %v1108, %v1106
    %v1406 = vpack.c.bf16 %v1111, %v1109
    %v1407 = vpack.c.bf16 %v1112, %v1110
    %v1408 = vpack.c.bf16 %v1115, %v1113
    %v1409 = vpack.c.bf16 %v1116, %v1114
    %v1410 = vpack.c.bf16 %v1119, %v1117
    %v1411 = vpack.c.bf16 %v1120, %v1118
    %v1412 = vpack.c.bf16 %v1123, %v1121
    %v1413 = vpack.c.bf16 %v1124, %v1122
    %v1414 = vpack.c.bf16 %v1127, %v1125
    %v1415 = vpack.c.bf16 %v1128, %v1126
    %v1416 = vpack.c.bf16 %v1131, %v1129
    %v1417 = vpack.c.bf16 %v1132, %v1130
    %v1418 = vpack.c.bf16 %v1135, %v1133
    %v1419 = vpack.c.bf16 %v1136, %v1134
    %v1420 = vpack.c.bf16 %v1139, %v1137
    %v1421 = vpack.c.bf16 %v1140, %v1138
    %v1422 = vpack.c.bf16 %v1143, %v1141
    %v1423 = vpack.c.bf16 %v1144, %v1142
    %v1424 = vpack.c.bf16 %v1147, %v1145
    %v1425 = vpack.c.bf16 %v1148, %v1146
    %v1426 = vpack.c.bf16 %v1151, %v1149
    %v1427 = vpack.c.bf16 %v1152, %v1150
    %v1428 = vpack.c.bf16 %v1155, %v1153
    %v1429 = vpack.c.bf16 %v1156, %v1154
    %v1430 = vpack.c.bf16 %v1159, %v1157
    %v1431 = vpack.c.bf16 %v1160, %v1158
    %v1432 = vpack.c.bf16 %v1163, %v1161
    %v1433 = vpack.c.bf16 %v1164, %v1162
    %v1434 = vpack.c.bf16 %v1167, %v1165
    %v1435 = vpack.c.bf16 %v1168, %v1166
    %v1437 = vlaneseq
    %v1438 = vshrl.u32 %v1437, 7
    %v1439 = vsub.s32 0, %v1438
    %v1440 = vrot.slane %v1169, %v1439
    %v1441 = vlaneseq
    %v1442 = vshrl.u32 %v1441, 7
    %v1443 = vsub.s32 1, %v1442
    %v1444 = vrot.slane %v1169, %v1443
    %1447 = vmatprep.subr.bf16.mxu0 %v1341
    %1448 = vmatpush1.bf16.msra.mxu0 %v1340
    %1449 = vmatprep.subr.bf16.mxu0 %v1343
    %1450 = vmatpush1.bf16.msra.mxu0 %v1342
    %1451 = vmatprep.subr.bf16.mxu0 %v1345
    %1452 = vmatpush1.bf16.msra.mxu0 %v1344
    %1453 = vmatprep.subr.bf16.mxu0 %v1347
    %1454 = vmatpush1.bf16.msra.mxu0 %v1346
    %1455 = vmatprep.subr.bf16.mxu0 %v1349
    %1456 = vmatpush1.bf16.msra.mxu0 %v1348
    %1457 = vmatprep.subr.bf16.mxu0 %v1351
    %1458 = vmatpush1.bf16.msra.mxu0 %v1350
    %1459 = vmatprep.subr.bf16.mxu0 %v1353
    %1460 = vmatpush1.bf16.msra.mxu0 %v1352
    %1461 = vmatprep.subr.bf16.mxu0 %v1355
    %1462 = vmatpush1.bf16.msra.mxu0 %v1354
    %1463 = vmatprep.subr.bf16.mxu0 %v1357
    %1464 = vmatpush1.bf16.msra.mxu0 %v1356
    %1465 = vmatprep.subr.bf16.mxu0 %v1359
    %1466 = vmatpush1.bf16.msra.mxu0 %v1358
    %1467 = vmatprep.subr.bf16.mxu0 %v1361
    %1468 = vmatpush1.bf16.msra.mxu0 %v1360
    %1469 = vmatprep.subr.bf16.mxu0 %v1363
    %1470 = vmatpush1.bf16.msra.mxu0 %v1362
    %1471 = vmatprep.subr.bf16.mxu0 %v1365
    %1472 = vmatpush1.bf16.msra.mxu0 %v1364
    %1473 = vmatprep.subr.bf16.mxu0 %v1367
    %1474 = vmatpush1.bf16.msra.mxu0 %v1366
    %1475 = vmatprep.subr.bf16.mxu0 %v1369
    %1476 = vmatpush1.bf16.msra.mxu0 %v1368
    %1477 = vmatprep.subr.bf16.mxu0 %v1371
    %1478 = vmatpush1.bf16.msra.mxu0 %v1370
    %1479 = vmatprep.mubr.bf16.mxu0 %v1325
    %1480 = vmatmul.mubr.bf16.gmra.mrb[0].mxu0 %v1324
    %v1481 = vpop.f32.mrb[0].mxu0
    %v1482 = vadd.f32 %v1440, %v1481
    %v1483 = vpop.f32.mrb[0].mxu0
    %v1484 = vadd.f32 %v1444, %v1483
    %v1485 = vpop.f32.mrb[0].mxu0
    %v1486 = vadd.f32 %v1440, %v1485
    %v1487 = vpop.f32.mrb[0].mxu0
    %v1488 = vadd.f32 %v1444, %v1487
    %1489 = vmatprep.mubr.bf16.mxu0 %v1329
    %1490 = vmatmul.mubr.bf16.gmra.mrb[0].mxu0 %v1328
    %v1491 = vpop.f32.mrb[0].mxu0
    %v1492 = vadd.f32 %v1440, %v1491
    %v1493 = vpop.f32.mrb[0].mxu0
    %v1494 = vadd.f32 %v1444, %v1493
    %v1495 = vpop.f32.mrb[0].mxu0
    %v1496 = vadd.f32 %v1440, %v1495
    %v1497 = vpop.f32.mrb[0].mxu0
    %v1498 = vadd.f32 %v1444, %v1497
    %1499 = vmatprep.mubr.bf16.mxu0 %v1333
    %1500 = vmatmul.mubr.bf16.gmra.mrb[0].mxu0 %v1332
    %v1501 = vpop.f32.mrb[0].mxu0
    %v1502 = vadd.f32 %v1440, %v1501
    %v1503 = vpop.f32.mrb[0].mxu0
    %v1504 = vadd.f32 %v1444, %v1503
    %v1505 = vpop.f32.mrb[0].mxu0
    %v1506 = vadd.f32 %v1440, %v1505
    %v1507 = vpop.f32.mrb[0].mxu0
    %v1508 = vadd.f32 %v1444, %v1507
    %1509 = vmatprep.mubr.bf16.mxu0 %v1337
    %1510 = vmatmul.mubr.bf16.gmra.mrb[0].mxu0 %v1336
    %v1511 = vpop.f32.mrb[0].mxu0
    %v1512 = vadd.f32 %v1440, %v1511
    %v1513 = vpop.f32.mrb[0].mxu0
    %v1514 = vadd.f32 %v1444, %v1513
    %v1515 = vpop.f32.mrb[0].mxu0
    %v1516 = vadd.f32 %v1440, %v1515
    %v1517 = vpop.f32.mrb[0].mxu0
    %v1518 = vadd.f32 %v1444, %v1517
    %1519 = vdwg.mxu0
    %1520 = vmatprep.subr.bf16.mxu0 %v1373
    %1521 = vmatpush1.bf16.msra.mxu0 %v1372
    %1522 = vmatprep.subr.bf16.mxu0 %v1375
    %1523 = vmatpush1.bf16.msra.mxu0 %v1374
    %1524 = vmatprep.subr.bf16.mxu0 %v1377
    %1525 = vmatpush1.bf16.msra.mxu0 %v1376
    %1526 = vmatprep.subr.bf16.mxu0 %v1379
    %1527 = vmatpush1.bf16.msra.mxu0 %v1378
    %1528 = vmatprep.subr.bf16.mxu0 %v1381
    %1529 = vmatpush1.bf16.msra.mxu0 %v1380
    %1530 = vmatprep.subr.bf16.mxu0 %v1383
    %1531 = vmatpush1.bf16.msra.mxu0 %v1382
    %1532 = vmatprep.subr.bf16.mxu0 %v1385
    %1533 = vmatpush1.bf16.msra.mxu0 %v1384
    %1534 = vmatprep.subr.bf16.mxu0 %v1387
    %1535 = vmatpush1.bf16.msra.mxu0 %v1386
    %1536 = vmatprep.subr.bf16.mxu0 %v1389
    %1537 = vmatpush1.bf16.msra.mxu0 %v1388
    %1538 = vmatprep.subr.bf16.mxu0 %v1391
    %1539 = vmatpush1.bf16.msra.mxu0 %v1390
    %1540 = vmatprep.subr.bf16.mxu0 %v1393
    %1541 = vmatpush1.bf16.msra.mxu0 %v1392
    %1542 = vmatprep.subr.bf16.mxu0 %v1395
    %1543 = vmatpush1.bf16.msra.mxu0 %v1394
    %1544 = vmatprep.subr.bf16.mxu0 %v1397
    %1545 = vmatpush1.bf16.msra.mxu0 %v1396
    %1546 = vmatprep.subr.bf16.mxu0 %v1399
    %1547 = vmatpush1.bf16.msra.mxu0 %v1398
    %1548 = vmatprep.subr.bf16.mxu0 %v1401
    %1549 = vmatpush1.bf16.msra.mxu0 %v1400
    %1550 = vmatprep.subr.bf16.mxu0 %v1403
    %1551 = vmatpush1.bf16.msra.mxu0 %v1402
    %1552 = vmatprep.mubr.bf16.mxu0 %v1171
    %1553 = vmatmul.mubr.bf16.gmra.mrb[0].mxu0 %v1170
    %v1554 = vpop.f32.mrb[0].mxu0
    %v1555 = vadd.f32 %v1482, %v1554
    %v1556 = vpop.f32.mrb[0].mxu0
    %v1557 = vadd.f32 %v1484, %v1556
    %v1558 = vpop.f32.mrb[0].mxu0
    %v1559 = vadd.f32 %v1486, %v1558
    %v1560 = vpop.f32.mrb[0].mxu0
    %v1561 = vadd.f32 %v1488, %v1560
    %1562 = vmatprep.mubr.bf16.mxu0 %v1173
    %1563 = vmatmul.mubr.bf16.gmra.mrb[0].mxu0 %v1172
    %v1564 = vpop.f32.mrb[0].mxu0
    %v1565 = vadd.f32 %v1492, %v1564
    %v1566 = vpop.f32.mrb[0].mxu0
    %v1567 = vadd.f32 %v1494, %v1566
    %v1568 = vpop.f32.mrb[0].mxu0
    %v1569 = vadd.f32 %v1496, %v1568
    %v1570 = vpop.f32.mrb[0].mxu0
    %v1571 = vadd.f32 %v1498, %v1570
    %1572 = vmatprep.mubr.bf16.mxu0 %v1175
    %1573 = vmatmul.mubr.bf16.gmra.mrb[0].mxu0 %v1174
    %v1574 = vpop.f32.mrb[0].mxu0
    %v1575 = vadd.f32 %v1502, %v1574
    %v1576 = vpop.f32.mrb[0].mxu0
    %v1577 = vadd.f32 %v1504, %v1576
    %v1578 = vpop.f32.mrb[0].mxu0
    %v1579 = vadd.f32 %v1506, %v1578
    %v1580 = vpop.f32.mrb[0].mxu0
    %v1581 = vadd.f32 %v1508, %v1580
    %1582 = vmatprep.mubr.bf16.mxu0 %v1177
    %1583 = vmatmul.mubr.bf16.gmra.mrb[0].mxu0 %v1176
    %v1584 = vpop.f32.mrb[0].mxu0
    %v1585 = vadd.f32 %v1512, %v1584
    %v1586 = vpop.f32.mrb[0].mxu0
    %v1587 = vadd.f32 %v1514, %v1586
    %v1588 = vpop.f32.mrb[0].mxu0
    %v1589 = vadd.f32 %v1516, %v1588
    %v1590 = vpop.f32.mrb[0].mxu0
    %v1591 = vadd.f32 %v1518, %v1590
    %1592 = vdwg.mxu0
    %1593 = vmatprep.subr.bf16.mxu0 %v1405
    %1594 = vmatpush1.bf16.msra.mxu0 %v1404
    %1595 = vmatprep.subr.bf16.mxu0 %v1407
    %1596 = vmatpush1.bf16.msra.mxu0 %v1406
    %1597 = vmatprep.subr.bf16.mxu0 %v1409
    %1598 = vmatpush1.bf16.msra.mxu0 %v1408
    %1599 = vmatprep.subr.bf16.mxu0 %v1411
    %1600 = vmatpush1.bf16.msra.mxu0 %v1410
    %1601 = vmatprep.subr.bf16.mxu0 %v1413
    %1602 = vmatpush1.bf16.msra.mxu0 %v1412
    %1603 = vmatprep.subr.bf16.mxu0 %v1415
    %1604 = vmatpush1.bf16.msra.mxu0 %v1414
    %1605 = vmatprep.subr.bf16.mxu0 %v1417
    %1606 = vmatpush1.bf16.msra.mxu0 %v1416
    %1607 = vmatprep.subr.bf16.mxu0 %v1419
    %1608 = vmatpush1.bf16.msra.mxu0 %v1418
    %1609 = vmatprep.subr.bf16.mxu0 %v1421
    %1610 = vmatpush1.bf16.msra.mxu0 %v1420
    %1611 = vmatprep.subr.bf16.mxu0 %v1423
    %1612 = vmatpush1.bf16.msra.mxu0 %v1422
    %1613 = vmatprep.subr.bf16.mxu0 %v1425
    %1614 = vmatpush1.bf16.msra.mxu0 %v1424
    %1615 = vmatprep.subr.bf16.mxu0 %v1427
    %1616 = vmatpush1.bf16.msra.mxu0 %v1426
    %1617 = vmatprep.subr.bf16.mxu0 %v1429
    %1618 = vmatpush1.bf16.msra.mxu0 %v1428
    %1619 = vmatprep.subr.bf16.mxu0 %v1431
    %1620 = vmatpush1.bf16.msra.mxu0 %v1430
    %1621 = vmatprep.subr.bf16.mxu0 %v1433
    %1622 = vmatpush1.bf16.msra.mxu0 %v1432
    %1623 = vmatprep.subr.bf16.mxu0 %v1435
    %1624 = vmatpush1.bf16.msra.mxu0 %v1434
    %1625 = vmatprep.mubr.bf16.mxu0 %v1327
    %1626 = vmatmul.mubr.bf16.gmra.mrb[0].mxu0 %v1326
    %v1627 = vpop.f32.mrb[0].mxu0
    %v1628 = vadd.f32 %v1555, %v1627
    %v1629 = vpop.f32.mrb[0].mxu0
    %v1630 = vadd.f32 %v1557, %v1629
    %v1631 = vpop.f32.mrb[0].mxu0
    %v1632 = vadd.f32 %v1559, %v1631
    %v1633 = vpop.f32.mrb[0].mxu0
    %v1634 = vadd.f32 %v1561, %v1633
    %1635 = vmatprep.mubr.bf16.mxu0 %v1331
    %1636 = vmatmul.mubr.bf16.gmra.mrb[0].mxu0 %v1330
    %v1637 = vpop.f32.mrb[0].mxu0
    %v1638 = vadd.f32 %v1565, %v1637
    %v1639 = vpop.f32.mrb[0].mxu0
    %v1640 = vadd.f32 %v1567, %v1639
    %v1641 = vpop.f32.mrb[0].mxu0
    %v1642 = vadd.f32 %v1569, %v1641
    %v1643 = vpop.f32.mrb[0].mxu0
    %v1644 = vadd.f32 %v1571, %v1643
    %1645 = vmatprep.mubr.bf16.mxu0 %v1335
    %1646 = vmatmul.mubr.bf16.gmra.mrb[0].mxu0 %v1334
    %v1647 = vpop.f32.mrb[0].mxu0
    %v1648 = vadd.f32 %v1575, %v1647
    %v1649 = vpop.f32.mrb[0].mxu0
    %v1650 = vadd.f32 %v1577, %v1649
    %v1651 = vpop.f32.mrb[0].mxu0
    %v1652 = vadd.f32 %v1579, %v1651
    %v1653 = vpop.f32.mrb[0].mxu0
    %v1654 = vadd.f32 %v1581, %v1653
    %1655 = vmatprep.mubr.bf16.mxu0 %v1339
    %1656 = vmatmul.mubr.bf16.gmra.mrb[0].mxu0 %v1338
    %v1657 = vpop.f32.mrb[0].mxu0
    %v1658 = vadd.f32 %v1585, %v1657
    %v1659 = vpop.f32.mrb[0].mxu0
    %v1660 = vadd.f32 %v1587, %v1659
    %v1661 = vpop.f32.mrb[0].mxu0
    %v1662 = vadd.f32 %v1589, %v1661
    %v1663 = vpop.f32.mrb[0].mxu0
    %v1664 = vadd.f32 %v1591, %v1663
    %1665 = vdwg.mxu0
    %v1666 = vmax.f32 %v1628, 0.0
    %v1667 = vmax.f32 %v1630, 0.0
    %v1668 = vmax.f32 %v1632, 0.0
    %v1669 = vmax.f32 %v1634, 0.0
    %v1670 = vmax.f32 %v1638, 0.0
    %v1671 = vmax.f32 %v1640, 0.0
    %v1672 = vmax.f32 %v1642, 0.0
    %v1673 = vmax.f32 %v1644, 0.0
    %v1674 = vmax.f32 %v1648, 0.0
    %v1675 = vmax.f32 %v1650, 0.0
    %v1676 = vmax.f32 %v1652, 0.0
    %v1677 = vmax.f32 %v1654, 0.0
    %v1678 = vmax.f32 %v1658, 0.0
    %v1679 = vmax.f32 %v1660, 0.0
    %v1680 = vmax.f32 %v1662, 0.0
    %v1681 = vmax.f32 %v1664, 0.0
    %v1682 = vld [vmem:[%s9] sm:$0xff]
    %v1683 = vld [vmem:[%s9 + $0x8] sm:$0xff]
    %v1684 = vld [vmem:[%s9 + $0x10] sm:$0xff]
    %v1685 = vld [vmem:[%s9 + $0x18] sm:$0xff]
    %v1686 = vld [vmem:[%s9 + $0x20] sm:$0xff]
    %v1687 = vld [vmem:[%s9 + $0x28] sm:$0xff]
    %v1688 = vld [vmem:[%s9 + $0x30] sm:$0xff]
    %v1689 = vld [vmem:[%s9 + $0x38] sm:$0xff]
    %v1690 = vld [vmem:[%s9 + $0x40] sm:$0xff]
    %v1691 = vld [vmem:[%s9 + $0x48] sm:$0xff]
    %v1692 = vld [vmem:[%s9 + $0x50] sm:$0xff]
    %v1693 = vld [vmem:[%s9 + $0x58] sm:$0xff]
    %v1694 = vld [vmem:[%s9 + $0x60] sm:$0xff]
    %v1695 = vld [vmem:[%s9 + $0x68] sm:$0xff]
    %v1696 = vld [vmem:[%s9 + $0x70] sm:$0xff]
    %v1697 = vld [vmem:[%s9 + $0x78] sm:$0xff]
    %v1698 = vld [vmem:[%s9 + $0x80] sm:$0xff]
    %v1699 = vld [vmem:[%s9 + $0x88] sm:$0xff]
    %v1700 = vld [vmem:[%s9 + $0x90] sm:$0xff]
    %v1701 = vld [vmem:[%s9 + $0x98] sm:$0xff]
    %v1702 = vld [vmem:[%s9 + $0xa0] sm:$0xff]
    %v1703 = vld [vmem:[%s9 + $0xa8] sm:$0xff]
    %v1704 = vld [vmem:[%s9 + $0xb0] sm:$0xff]
    %v1705 = vld [vmem:[%s9 + $0xb8] sm:$0xff]
    %v1706 = vld [vmem:[%s9 + $0xc0] sm:$0xff]
    %v1707 = vld [vmem:[%s9 + $0xc8] sm:$0xff]
    %v1708 = vld [vmem:[%s9 + $0xd0] sm:$0xff]
    %v1709 = vld [vmem:[%s9 + $0xd8] sm:$0xff]
    %v1710 = vld [vmem:[%s9 + $0xe0] sm:$0xff]
    %v1711 = vld [vmem:[%s9 + $0xe8] sm:$0xff]
    %v1712 = vld [vmem:[%s9 + $0xf0] sm:$0xff]
    %v1713 = vld [vmem:[%s9 + $0xf8] sm:$0xff]
    %v1714 = vpack.c.bf16 %v1668, %v1666
    %v1715 = vpack.c.bf16 %v1669, %v1667
    %v1716 = vpack.c.bf16 %v1672, %v1670
    %v1717 = vpack.c.bf16 %v1673, %v1671
    %v1718 = vpack.c.bf16 %v1676, %v1674
    %v1719 = vpack.c.bf16 %v1677, %v1675
    %v1720 = vpack.c.bf16 %v1680, %v1678
    %v1721 = vpack.c.bf16 %v1681, %v1679
    %v1722 = vpack.c.bf16 %v1683, %v1682
    %v1723 = vpack.c.bf16 %v1685, %v1684
    %v1724 = vpack.c.bf16 %v1687, %v1686
    %v1725 = vpack.c.bf16 %v1689, %v1688
    %v1726 = vpack.c.bf16 %v1691, %v1690
    %v1727 = vpack.c.bf16 %v1693, %v1692
    %v1728 = vpack.c.bf16 %v1695, %v1694
    %v1729 = vpack.c.bf16 %v1697, %v1696
    %v1730 = vpack.c.bf16 %v1699, %v1698
    %v1731 = vpack.c.bf16 %v1701, %v1700
    %v1732 = vpack.c.bf16 %v1703, %v1702
    %v1733 = vpack.c.bf16 %v1705, %v1704
    %v1734 = vpack.c.bf16 %v1707, %v1706
    %v1735 = vpack.c.bf16 %v1709, %v1708
    %v1736 = vpack.c.bf16 %v1711, %v1710
    %v1737 = vpack.c.bf16 %v1713, %v1712
    %v1738 = vld [vmem:[%s10] sm:$0x1]
    %v1740 = vlaneseq
    %v1741 = vshrl.u32 %v1740, 7
    %v1742 = vsub.s32 0, %v1741
    %v1743 = vrot.slane %v1738, %v1742
    %1745 = vmatprep.subr.bf16.mxu0 0
    %1746 = vmatpush1.bf16.msra.mxu0 %v1722
    %1747 = vmatprep.subr.bf16.mxu0 0
    %1748 = vmatpush1.bf16.msra.mxu0 %v1723
    %1749 = vmatprep.subr.bf16.mxu0 0
    %1750 = vmatpush1.bf16.msra.mxu0 %v1724
    %1751 = vmatprep.subr.bf16.mxu0 0
    %1752 = vmatpush1.bf16.msra.mxu0 %v1725
    %1753 = vmatprep.subr.bf16.mxu0 0
    %1754 = vmatpush1.bf16.msra.mxu0 %v1726
    %1755 = vmatprep.subr.bf16.mxu0 0
    %1756 = vmatpush1.bf16.msra.mxu0 %v1727
    %1757 = vmatprep.subr.bf16.mxu0 0
    %1758 = vmatpush1.bf16.msra.mxu0 %v1728
    %1759 = vmatprep.subr.bf16.mxu0 0
    %1760 = vmatpush1.bf16.msra.mxu0 %v1729
    %1761 = vmatprep.subr.bf16.mxu0 0
    %1762 = vmatpush1.bf16.msra.mxu0 %v1730
    %1763 = vmatprep.subr.bf16.mxu0 0
    %1764 = vmatpush1.bf16.msra.mxu0 %v1731
    %1765 = vmatprep.subr.bf16.mxu0 0
    %1766 = vmatpush1.bf16.msra.mxu0 %v1732
    %1767 = vmatprep.subr.bf16.mxu0 0
    %1768 = vmatpush1.bf16.msra.mxu0 %v1733
    %1769 = vmatprep.subr.bf16.mxu0 0
    %1770 = vmatpush1.bf16.msra.mxu0 %v1734
    %1771 = vmatprep.subr.bf16.mxu0 0
    %1772 = vmatpush1.bf16.msra.mxu0 %v1735
    %1773 = vmatprep.subr.bf16.mxu0 0
    %1774 = vmatpush1.bf16.msra.mxu0 %v1736
    %1775 = vmatprep.subr.bf16.mxu0 0
    %1776 = vmatpush1.bf16.msra.mxu0 %v1737
    %1777 = vmatprep.mubr.bf16.mxu0 %v1715
    %1778 = vmatmul.mubr.bf16.gmra.mrb[0].mxu0 %v1714
    %v1779 = vpop.f32.mrb[0].mxu0
    %v1780 = vadd.f32 %v1743, %v1779
    %v1781 = vpop.f32.mrb[0].mxu0
    %v1782 = vpop.f32.mrb[0].mxu0
    %v1783 = vadd.f32 %v1743, %v1782
    %v1784 = vpop.f32.mrb[0].mxu0
    %1785 = vmatprep.mubr.bf16.mxu0 %v1717
    %1786 = vmatmul.mubr.bf16.gmra.mrb[0].mxu0 %v1716
    %v1787 = vpop.f32.mrb[0].mxu0
    %v1788 = vadd.f32 %v1743, %v1787
    %v1789 = vpop.f32.mrb[0].mxu0
    %v1790 = vpop.f32.mrb[0].mxu0
    %v1791 = vadd.f32 %v1743, %v1790
    %v1792 = vpop.f32.mrb[0].mxu0
    %1793 = vmatprep.mubr.bf16.mxu0 %v1719
    %1794 = vmatmul.mubr.bf16.gmra.mrb[0].mxu0 %v1718
    %v1795 = vpop.f32.mrb[0].mxu0
    %v1796 = vadd.f32 %v1743, %v1795
    %v1797 = vpop.f32.mrb[0].mxu0
    %v1798 = vpop.f32.mrb[0].mxu0
    %v1799 = vadd.f32 %v1743, %v1798
    %v1800 = vpop.f32.mrb[0].mxu0
    %1801 = vmatprep.mubr.bf16.mxu0 %v1721
    %1802 = vmatmul.mubr.bf16.gmra.mrb[0].mxu0 %v1720
    %v1803 = vpop.f32.mrb[0].mxu0
    %v1804 = vadd.f32 %v1743, %v1803
    %v1805 = vpop.f32.mrb[0].mxu0
    %v1806 = vpop.f32.mrb[0].mxu0
    %v1807 = vadd.f32 %v1743, %v1806
    %v1808 = vpop.f32.mrb[0].mxu0
    %1809 = vdwg.mxu0
    %v1810 = vxor.u32 %v1780, 2147483648
    %v1811 = vxor.u32 %v1783, 2147483648
    %v1812 = vxor.u32 %v1788, 2147483648
    %v1813 = vxor.u32 %v1791, 2147483648
    %v1814 = vxor.u32 %v1796, 2147483648
    %v1815 = vxor.u32 %v1799, 2147483648
    %v1816 = vxor.u32 %v1804, 2147483648
    %v1817 = vxor.u32 %v1807, 2147483648
    %v1818 = vmul.f32 %v1810, 1.442695
    %v1819 = vpow.pop %v1818
    %v1820 = vmul.f32 %v1811, 1.442695
    %v1821 = vpow.pop %v1820
    %v1822 = vmul.f32 %v1812, 1.442695
    %v1823 = vpow.pop %v1822
    %v1824 = vmul.f32 %v1813, 1.442695
    %v1825 = vpow.pop %v1824
    %v1826 = vmul.f32 %v1814, 1.442695
    %v1827 = vpow.pop %v1826
    %v1828 = vmul.f32 %v1815, 1.442695
    %v1829 = vpow.pop %v1828
    %v1830 = vmul.f32 %v1816, 1.442695
    %v1831 = vpow.pop %v1830
    %v1832 = vmul.f32 %v1817, 1.442695
    %v1833 = vpow.pop %v1832
    %v1834 = vadd.f32 %v1819, 1.0
    %v1835 = vadd.f32 %v1821, 1.0
    %v1836 = vadd.f32 %v1823, 1.0
    %v1837 = vadd.f32 %v1825, 1.0
    %v1838 = vadd.f32 %v1827, 1.0
    %v1839 = vadd.f32 %v1829, 1.0
    %v1840 = vadd.f32 %v1831, 1.0
    %v1841 = vadd.f32 %v1833, 1.0
    %v1842 = vrcp.pop %v1834
    %v1843 = vmul.f32 1.0, %v1842
    %v1844 = vrcp.pop %v1835
    %v1845 = vmul.f32 1.0, %v1844
    %v1846 = vrcp.pop %v1836
    %v1847 = vmul.f32 1.0, %v1846
    %v1848 = vrcp.pop %v1837
    %v1849 = vmul.f32 1.0, %v1848
    %v1850 = vrcp.pop %v1838
    %v1851 = vmul.f32 1.0, %v1850
    %v1852 = vrcp.pop %v1839
    %v1853 = vmul.f32 1.0, %v1852
    %v1854 = vrcp.pop %v1840
    %v1855 = vmul.f32 1.0, %v1854
    %v1856 = vrcp.pop %v1841
    %v1857 = vmul.f32 1.0, %v1856
    %1858 = vst [vmem:[%s12] sm:$0xff] %v1843
    %1859 = vst [vmem:[%s12 + $0x8] sm:$0xff] %v1845
    %1860 = vst [vmem:[%s12 + $0x10] sm:$0xff] %v1847
    %1861 = vst [vmem:[%s12 + $0x18] sm:$0xff] %v1849
    %1862 = vst [vmem:[%s12 + $0x20] sm:$0xff] %v1851
    %1863 = vst [vmem:[%s12 + $0x28] sm:$0xff] %v1853
    %1864 = vst [vmem:[%s12 + $0x30] sm:$0xff] %v1855
    %1865 = vst [vmem:[%s12 + $0x38] sm:$0xff] %v1857
    // Predicated region
    $region54: #{detector_forward.3} parent=1 // pred_check
      _
    $region55: #{detector_forward.3} parent=1 // pred_check_branch
      %1867 = sbr.rel (0) target = $region57
    $region56: #{detector_forward.3} parent=1 // pred_region
      _
    $region57: #{detector_forward.3} parent=1 // pred_fallthru
      _
    // Predicated region
    $region58: #{detector_forward.3} parent=1 // pred_check
      _
    $region59: #{detector_forward.3} parent=1 // pred_check_branch
      %1869 = sbr.rel (0) target = $region61
    $region60: #{detector_forward.3} parent=1 // pred_region
      _
    $region61: #{detector_forward.3} parent=1 // pred_fallthru
      _
    // Predicated region
    $region62: #{detector_forward.3} parent=1 // pred_check
      _
    $region63: #{detector_forward.3} parent=1 // pred_check_branch
      %1871 = sbr.rel (0) target = $region65
    $region64: #{detector_forward.3} parent=1 // pred_region
      _
    $region65: #{detector_forward.3} parent=1 // pred_fallthru
      _
    // Predicated region
    $region66: #{detector_forward.3} parent=1 // pred_check
      _
    $region67: #{detector_forward.3} parent=1 // pred_check_branch
      %1873 = sbr.rel (0) target = $region69
    $region68: #{detector_forward.3} parent=1 // pred_region
      _
    $region69: #{detector_forward.3} parent=1 // pred_fallthru
      _
    %1874 = vsyncpa [#allocation3], 1
    %1875 = vsyncpa [#allocation5], 1

// kernel: detector_forward.4
$region0: #{detector_forward.4}
  #allocation0 [shape = 'u32[]', space=smem, size = 0x4, offset = 0x4, fixed_abs, tag = 'smem constant byte address 0x4 - core index']
  #allocation1 [shape = 'u32[144,128]{1,0:T(1,128)}', space=vmem, size = 0x12000, scoped, tag = 'internal scratch']
  %s0 = inlined_call_operand.vmem [shape: f32[64,256], index: 0, kind: input, shape index: {}]
  %s1 = inlined_call_operand.vmem [shape: f32[256,64], index: 1, kind: input, shape index: {}]
  %s2 = inlined_call_operand.vmem [shape: f32[64,64], index: 2, kind: input, shape index: {}]
  %s3 = inlined_call_operand.vmem [shape: f32[64,64], index: 3, kind: input, shape index: {}]
  %s4 = inlined_call_operand.vmem [shape: f32[768,256], index: 4, kind: input, shape index: {}]
  %s5 = inlined_call_operand.vmem [shape: f32[1,256], index: 5, kind: input, shape index: {}]
  %s6 = inlined_call_operand.vmem [shape: f32[2048,128], index: 6, kind: input, shape index: {}]
  %s7 = inlined_call_operand.vmem [shape: f32[1,128], index: 7, kind: input, shape index: {}]
  %s8 = inlined_call_operand.vmem [shape: f32[128,128], index: 8, kind: input, shape index: {}]
  %s9 = inlined_call_operand.vmem [shape: f32[1,128], index: 9, kind: input, shape index: {}]
  %s10 = inlined_call_operand.vmem [shape: f32[32,128], index: 10, kind: output, shape index: {}]
  %s11 = sld [smem:[#allocation0]]
  $region50: #{detector_forward.4} parent=0
    _
  %s13 = ssub.s32 1, %s11
  %s14 = scalar_select 0, %s13, %s11
  // Predicated region
  $region2: #{detector_forward.4} parent=0 // pred_check
    _
  $region3: #{detector_forward.4} parent=0 // pred_check_branch
    %16 = sbr.rel (0) target = $region5
  $region4: #{detector_forward.4} parent=0 // pred_region
    _
  $region5: #{detector_forward.4} parent=0 // pred_fallthru
    _
  // Predicated region
  $region6: #{detector_forward.4} parent=0 // pred_check
    _
  $region7: #{detector_forward.4} parent=0 // pred_check_branch
    %18 = sbr.rel (0) target = $region9
  $region8: #{detector_forward.4} parent=0 // pred_region
    _
  $region9: #{detector_forward.4} parent=0 // pred_fallthru
    _
  // Predicated region
  $region10: #{detector_forward.4} parent=0 // pred_check
    _
  $region11: #{detector_forward.4} parent=0 // pred_check_branch
    %20 = sbr.rel (0) target = $region13
  $region12: #{detector_forward.4} parent=0 // pred_region
    _
  $region13: #{detector_forward.4} parent=0 // pred_fallthru
    _
  // Predicated region
  $region14: #{detector_forward.4} parent=0 // pred_check
    _
  $region15: #{detector_forward.4} parent=0 // pred_check_branch
    %22 = sbr.rel (0) target = $region17
  $region16: #{detector_forward.4} parent=0 // pred_region
    _
  $region17: #{detector_forward.4} parent=0 // pred_fallthru
    _
  // Predicated region
  $region18: #{detector_forward.4} parent=0 // pred_check
    _
  $region19: #{detector_forward.4} parent=0 // pred_check_branch
    %24 = sbr.rel (0) target = $region21
  $region20: #{detector_forward.4} parent=0 // pred_region
    _
  $region21: #{detector_forward.4} parent=0 // pred_fallthru
    _
  // Predicated region
  $region22: #{detector_forward.4} parent=0 // pred_check
    _
  $region23: #{detector_forward.4} parent=0 // pred_check_branch
    %26 = sbr.rel (0) target = $region25
  $region24: #{detector_forward.4} parent=0 // pred_region
    _
  $region25: #{detector_forward.4} parent=0 // pred_fallthru
    _
  // Predicated region
  $region26: #{detector_forward.4} parent=0 // pred_check
    _
  $region27: #{detector_forward.4} parent=0 // pred_check_branch
    %28 = sbr.rel (0) target = $region29
  $region28: #{detector_forward.4} parent=0 // pred_region
    _
  $region29: #{detector_forward.4} parent=0 // pred_fallthru
    _
  // Predicated region
  $region30: #{detector_forward.4} parent=0 // pred_check
    _
  $region31: #{detector_forward.4} parent=0 // pred_check_branch
    %30 = sbr.rel (0) target = $region33
  $region32: #{detector_forward.4} parent=0 // pred_region
    _
  $region33: #{detector_forward.4} parent=0 // pred_fallthru
    _
  // Predicated region
  $region34: #{detector_forward.4} parent=0 // pred_check
    _
  $region35: #{detector_forward.4} parent=0 // pred_check_branch
    %32 = sbr.rel (0) target = $region37
  $region36: #{detector_forward.4} parent=0 // pred_region
    _
  $region37: #{detector_forward.4} parent=0 // pred_fallthru
    _
  // Predicated region
  $region38: #{detector_forward.4} parent=0 // pred_check
    _
  $region39: #{detector_forward.4} parent=0 // pred_check_branch
    %34 = sbr.rel (0) target = $region41
  $region40: #{detector_forward.4} parent=0 // pred_region
    _
  $region41: #{detector_forward.4} parent=0 // pred_fallthru
    _
  %v36 = vld [vmem:[%s0] sm:$0xff]
  %v37 = vld [vmem:[%s0 + $0x8] sm:$0xff]
  %v38 = vld [vmem:[%s0 + $0x10] sm:$0xff]
  %v39 = vld [vmem:[%s0 + $0x18] sm:$0xff]
  %v40 = vld [vmem:[%s0 + $0x20] sm:$0xff]
  %v41 = vld [vmem:[%s0 + $0x28] sm:$0xff]
  %v42 = vld [vmem:[%s0 + $0x30] sm:$0xff]
  %v43 = vld [vmem:[%s0 + $0x38] sm:$0xff]
  %v44 = vld [vmem:[%s0 + $0x40] sm:$0xff]
  %v45 = vld [vmem:[%s0 + $0x48] sm:$0xff]
  %v46 = vld [vmem:[%s0 + $0x50] sm:$0xff]
  %v47 = vld [vmem:[%s0 + $0x58] sm:$0xff]
  %v48 = vld [vmem:[%s0 + $0x60] sm:$0xff]
  %v49 = vld [vmem:[%s0 + $0x68] sm:$0xff]
  %v50 = vld [vmem:[%s0 + $0x70] sm:$0xff]
  %v51 = vld [vmem:[%s0 + $0x78] sm:$0xff]
  %v52 = vld [vmem:[%s2] sm:$0xff]
  %v53 = vld [vmem:[%s2 + $0x8] sm:$0xff]
  %v54 = vld [vmem:[%s2 + $0x10] sm:$0xff]
  %v55 = vld [vmem:[%s2 + $0x18] sm:$0xff]
  %v56 = vld [vmem:[%s2 + $0x20] sm:$0xff]
  %v57 = vld [vmem:[%s2 + $0x28] sm:$0xff]
  %v58 = vld [vmem:[%s2 + $0x30] sm:$0xff]
  %v59 = vld [vmem:[%s2 + $0x38] sm:$0xff]
  %v60 = vld [vmem:[%s3] sm:$0xff]
  %v61 = vld [vmem:[%s3 + $0x8] sm:$0xff]
  %v62 = vld [vmem:[%s3 + $0x10] sm:$0xff]
  %v63 = vld [vmem:[%s3 + $0x18] sm:$0xff]
  %v64 = vld [vmem:[%s3 + $0x20] sm:$0xff]
  %v65 = vld [vmem:[%s3 + $0x28] sm:$0xff]
  %v66 = vld [vmem:[%s3 + $0x30] sm:$0xff]
  %v67 = vld [vmem:[%s3 + $0x38] sm:$0xff]
  %v68 = vld [vmem:[%s4] sm:$0xff]
  %v69 = vld [vmem:[%s4 + $0x8] sm:$0xff]
  %v70 = vld [vmem:[%s4 + $0x10] sm:$0xff]
  %v71 = vld [vmem:[%s4 + $0x18] sm:$0xff]
  %v72 = vld [vmem:[%s4 + $0x20] sm:$0xff]
  %v73 = vld [vmem:[%s4 + $0x28] sm:$0xff]
  %v74 = vld [vmem:[%s4 + $0x30] sm:$0xff]
  %v75 = vld [vmem:[%s4 + $0x38] sm:$0xff]
  %v76 = vld [vmem:[%s4 + $0x40] sm:$0xff]
  %v77 = vld [vmem:[%s4 + $0x48] sm:$0xff]
  %v78 = vld [vmem:[%s4 + $0x50] sm:$0xff]
  %v79 = vld [vmem:[%s4 + $0x58] sm:$0xff]
  %v80 = vld [vmem:[%s4 + $0x60] sm:$0xff]
  %v81 = vld [vmem:[%s4 + $0x68] sm:$0xff]
  %v82 = vld [vmem:[%s4 + $0x70] sm:$0xff]
  %v83 = vld [vmem:[%s4 + $0x78] sm:$0xff]
  %v84 = vld [vmem:[%s4 + $0x80] sm:$0xff]
  %v85 = vld [vmem:[%s4 + $0x88] sm:$0xff]
  %v86 = vld [vmem:[%s4 + $0x90] sm:$0xff]
  %v87 = vld [vmem:[%s4 + $0x98] sm:$0xff]
  %v88 = vld [vmem:[%s4 + $0xa0] sm:$0xff]
  %v89 = vld [vmem:[%s4 + $0xa8] sm:$0xff]
  %v90 = vld [vmem:[%s4 + $0xb0] sm:$0xff]
  %v91 = vld [vmem:[%s4 + $0xb8] sm:$0xff]
  %v92 = vld [vmem:[%s4 + $0xc0] sm:$0xff]
  %v93 = vld [vmem:[%s4 + $0xc8] sm:$0xff]
  %v94 = vld [vmem:[%s4 + $0xd0] sm:$0xff]
  %v95 = vld [vmem:[%s4 + $0xd8] sm:$0xff]
  %v96 = vld [vmem:[%s4 + $0xe0] sm:$0xff]
  %v97 = vld [vmem:[%s4 + $0xe8] sm:$0xff]
  %v98 = vld [vmem:[%s4 + $0xf0] sm:$0xff]
  %v99 = vld [vmem:[%s4 + $0xf8] sm:$0xff]
  %v100 = vld [vmem:[%s4 + $0x100] sm:$0xff]
  %v101 = vld [vmem:[%s4 + $0x108] sm:$0xff]
  %v102 = vld [vmem:[%s4 + $0x110] sm:$0xff]
  %v103 = vld [vmem:[%s4 + $0x118] sm:$0xff]
  %v104 = vld [vmem:[%s4 + $0x120] sm:$0xff]
  %v105 = vld [vmem:[%s4 + $0x128] sm:$0xff]
  %v106 = vld [vmem:[%s4 + $0x130] sm:$0xff]
  %v107 = vld [vmem:[%s4 + $0x138] sm:$0xff]
  %v108 = vld [vmem:[%s4 + $0x140] sm:$0xff]
  %v109 = vld [vmem:[%s4 + $0x148] sm:$0xff]
  %v110 = vld [vmem:[%s4 + $0x150] sm:$0xff]
  %v111 = vld [vmem:[%s4 + $0x158] sm:$0xff]
  %v112 = vld [vmem:[%s4 + $0x160] sm:$0xff]
  %v113 = vld [vmem:[%s4 + $0x168] sm:$0xff]
  %v114 = vld [vmem:[%s4 + $0x170] sm:$0xff]
  %v115 = vld [vmem:[%s4 + $0x178] sm:$0xff]
  %v116 = vld [vmem:[%s4 + $0x180] sm:$0xff]
  %v117 = vld [vmem:[%s4 + $0x188] sm:$0xff]
  %v118 = vld [vmem:[%s4 + $0x190] sm:$0xff]
  %v119 = vld [vmem:[%s4 + $0x198] sm:$0xff]
  %v120 = vld [vmem:[%s4 + $0x1a0] sm:$0xff]
  %v121 = vld [vmem:[%s4 + $0x1a8] sm:$0xff]
  %v122 = vld [vmem:[%s4 + $0x1b0] sm:$0xff]
  %v123 = vld [vmem:[%s4 + $0x1b8] sm:$0xff]
  %v124 = vld [vmem:[%s4 + $0x1c0] sm:$0xff]
  %v125 = vld [vmem:[%s4 + $0x1c8] sm:$0xff]
  %v126 = vld [vmem:[%s4 + $0x1d0] sm:$0xff]
  %v127 = vld [vmem:[%s4 + $0x1d8] sm:$0xff]
  %v128 = vld [vmem:[%s4 + $0x1e0] sm:$0xff]
  %v129 = vld [vmem:[%s4 + $0x1e8] sm:$0xff]
  %v130 = vld [vmem:[%s4 + $0x1f0] sm:$0xff]
  %v131 = vld [vmem:[%s4 + $0x1f8] sm:$0xff]
  %v132 = vld [vmem:[%s4 + $0x200] sm:$0xff]
  %v133 = vld [vmem:[%s4 + $0x208] sm:$0xff]
  %v134 = vld [vmem:[%s4 + $0x210] sm:$0xff]
  %v135 = vld [vmem:[%s4 + $0x218] sm:$0xff]
  %v136 = vld [vmem:[%s4 + $0x220] sm:$0xff]
  %v137 = vld [vmem:[%s4 + $0x228] sm:$0xff]
  %v138 = vld [vmem:[%s4 + $0x230] sm:$0xff]
  %v139 = vld [vmem:[%s4 + $0x238] sm:$0xff]
  %v140 = vld [vmem:[%s4 + $0x240] sm:$0xff]
  %v141 = vld [vmem:[%s4 + $0x248] sm:$0xff]
  %v142 = vld [vmem:[%s4 + $0x250] sm:$0xff]
  %v143 = vld [vmem:[%s4 + $0x258] sm:$0xff]
  %v144 = vld [vmem:[%s4 + $0x260] sm:$0xff]
  %v145 = vld [vmem:[%s4 + $0x268] sm:$0xff]
  %v146 = vld [vmem:[%s4 + $0x270] sm:$0xff]
  %v147 = vld [vmem:[%s4 + $0x278] sm:$0xff]
  %v148 = vld [vmem:[%s4 + $0x280] sm:$0xff]
  %v149 = vld [vmem:[%s4 + $0x288] sm:$0xff]
  %v150 = vld [vmem:[%s4 + $0x290] sm:$0xff]
  %v151 = vld [vmem:[%s4 + $0x298] sm:$0xff]
  %v152 = vld [vmem:[%s4 + $0x2a0] sm:$0xff]
  %v153 = vld [vmem:[%s4 + $0x2a8] sm:$0xff]
  %v154 = vld [vmem:[%s4 + $0x2b0] sm:$0xff]
  %v155 = vld [vmem:[%s4 + $0x2b8] sm:$0xff]
  %v156 = vld [vmem:[%s4 + $0x2c0] sm:$0xff]
  %v157 = vld [vmem:[%s4 + $0x2c8] sm:$0xff]
  %v158 = vld [vmem:[%s4 + $0x2d0] sm:$0xff]
  %v159 = vld [vmem:[%s4 + $0x2d8] sm:$0xff]
  %v160 = vld [vmem:[%s4 + $0x2e0] sm:$0xff]
  %v161 = vld [vmem:[%s4 + $0x2e8] sm:$0xff]
  %v162 = vld [vmem:[%s4 + $0x2f0] sm:$0xff]
  %v163 = vld [vmem:[%s4 + $0x2f8] sm:$0xff]
  %v164 = vld [vmem:[%s4 + $0x300] sm:$0xff]
  %v165 = vld [vmem:[%s4 + $0x308] sm:$0xff]
  %v166 = vld [vmem:[%s4 + $0x310] sm:$0xff]
  %v167 = vld [vmem:[%s4 + $0x318] sm:$0xff]
  %v168 = vld [vmem:[%s4 + $0x320] sm:$0xff]
  %v169 = vld [vmem:[%s4 + $0x328] sm:$0xff]
  %v170 = vld [vmem:[%s4 + $0x330] sm:$0xff]
  %v171 = vld [vmem:[%s4 + $0x338] sm:$0xff]
  %v172 = vld [vmem:[%s4 + $0x340] sm:$0xff]
  %v173 = vld [vmem:[%s4 + $0x348] sm:$0xff]
  %v174 = vld [vmem:[%s4 + $0x350] sm:$0xff]
  %v175 = vld [vmem:[%s4 + $0x358] sm:$0xff]
  %v176 = vld [vmem:[%s4 + $0x360] sm:$0xff]
  %v177 = vld [vmem:[%s4 + $0x368] sm:$0xff]
  %v178 = vld [vmem:[%s4 + $0x370] sm:$0xff]
  %v179 = vld [vmem:[%s4 + $0x378] sm:$0xff]
  %v180 = vld [vmem:[%s4 + $0x380] sm:$0xff]
  %v181 = vld [vmem:[%s4 + $0x388] sm:$0xff]
  %v182 = vld [vmem:[%s4 + $0x390] sm:$0xff]
  %v183 = vld [vmem:[%s4 + $0x398] sm:$0xff]
  %v184 = vld [vmem:[%s4 + $0x3a0] sm:$0xff]
  %v185 = vld [vmem:[%s4 + $0x3a8] sm:$0xff]
  %v186 = vld [vmem:[%s4 + $0x3b0] sm:$0xff]
  %v187 = vld [vmem:[%s4 + $0x3b8] sm:$0xff]
  %v188 = vld [vmem:[%s4 + $0x3c0] sm:$0xff]
  %v189 = vld [vmem:[%s4 + $0x3c8] sm:$0xff]
  %v190 = vld [vmem:[%s4 + $0x3d0] sm:$0xff]
  %v191 = vld [vmem:[%s4 + $0x3d8] sm:$0xff]
  %v192 = vld [vmem:[%s4 + $0x3e0] sm:$0xff]
  %v193 = vld [vmem:[%s4 + $0x3e8] sm:$0xff]
  %v194 = vld [vmem:[%s4 + $0x3f0] sm:$0xff]
  %v195 = vld [vmem:[%s4 + $0x3f8] sm:$0xff]
  %v196 = vld [vmem:[%s4 + $0x400] sm:$0xff]
  %v197 = vld [vmem:[%s4 + $0x408] sm:$0xff]
  %v198 = vld [vmem:[%s4 + $0x410] sm:$0xff]
  %v199 = vld [vmem:[%s4 + $0x418] sm:$0xff]
  %v200 = vld [vmem:[%s4 + $0x420] sm:$0xff]
  %v201 = vld [vmem:[%s4 + $0x428] sm:$0xff]
  %v202 = vld [vmem:[%s4 + $0x430] sm:$0xff]
  %v203 = vld [vmem:[%s4 + $0x438] sm:$0xff]
  %v204 = vld [vmem:[%s4 + $0x440] sm:$0xff]
  %v205 = vld [vmem:[%s4 + $0x448] sm:$0xff]
  %v206 = vld [vmem:[%s4 + $0x450] sm:$0xff]
  %v207 = vld [vmem:[%s4 + $0x458] sm:$0xff]
  %v208 = vld [vmem:[%s4 + $0x460] sm:$0xff]
  %v209 = vld [vmem:[%s4 + $0x468] sm:$0xff]
  %v210 = vld [vmem:[%s4 + $0x470] sm:$0xff]
  %v211 = vld [vmem:[%s4 + $0x478] sm:$0xff]
  %v212 = vld [vmem:[%s4 + $0x480] sm:$0xff]
  %v213 = vld [vmem:[%s4 + $0x488] sm:$0xff]
  %v214 = vld [vmem:[%s4 + $0x490] sm:$0xff]
  %v215 = vld [vmem:[%s4 + $0x498] sm:$0xff]
  %v216 = vld [vmem:[%s4 + $0x4a0] sm:$0xff]
  %v217 = vld [vmem:[%s4 + $0x4a8] sm:$0xff]
  %v218 = vld [vmem:[%s4 + $0x4b0] sm:$0xff]
  %v219 = vld [vmem:[%s4 + $0x4b8] sm:$0xff]
  %v220 = vld [vmem:[%s4 + $0x4c0] sm:$0xff]
  %v221 = vld [vmem:[%s4 + $0x4c8] sm:$0xff]
  %v222 = vld [vmem:[%s4 + $0x4d0] sm:$0xff]
  %v223 = vld [vmem:[%s4 + $0x4d8] sm:$0xff]
  %v224 = vld [vmem:[%s4 + $0x4e0] sm:$0xff]
  %v225 = vld [vmem:[%s4 + $0x4e8] sm:$0xff]
  %v226 = vld [vmem:[%s4 + $0x4f0] sm:$0xff]
  %v227 = vld [vmem:[%s4 + $0x4f8] sm:$0xff]
  %v228 = vld [vmem:[%s4 + $0x500] sm:$0xff]
  %v229 = vld [vmem:[%s4 + $0x508] sm:$0xff]
  %v230 = vld [vmem:[%s4 + $0x510] sm:$0xff]
  %v231 = vld [vmem:[%s4 + $0x518] sm:$0xff]
  %v232 = vld [vmem:[%s4 + $0x520] sm:$0xff]
  %v233 = vld [vmem:[%s4 + $0x528] sm:$0xff]
  %v234 = vld [vmem:[%s4 + $0x530] sm:$0xff]
  %v235 = vld [vmem:[%s4 + $0x538] sm:$0xff]
  %v236 = vld [vmem:[%s4 + $0x540] sm:$0xff]
  %v237 = vld [vmem:[%s4 + $0x548] sm:$0xff]
  %v238 = vld [vmem:[%s4 + $0x550] sm:$0xff]
  %v239 = vld [vmem:[%s4 + $0x558] sm:$0xff]
  %v240 = vld [vmem:[%s4 + $0x560] sm:$0xff]
  %v241 = vld [vmem:[%s4 + $0x568] sm:$0xff]
  %v242 = vld [vmem:[%s4 + $0x570] sm:$0xff]
  %v243 = vld [vmem:[%s4 + $0x578] sm:$0xff]
  %v244 = vld [vmem:[%s4 + $0x580] sm:$0xff]
  %v245 = vld [vmem:[%s4 + $0x588] sm:$0xff]
  %v246 = vld [vmem:[%s4 + $0x590] sm:$0xff]
  %v247 = vld [vmem:[%s4 + $0x598] sm:$0xff]
  %v248 = vld [vmem:[%s4 + $0x5a0] sm:$0xff]
  %v249 = vld [vmem:[%s4 + $0x5a8] sm:$0xff]
  %v250 = vld [vmem:[%s4 + $0x5b0] sm:$0xff]
  %v251 = vld [vmem:[%s4 + $0x5b8] sm:$0xff]
  %v252 = vld [vmem:[%s4 + $0x5c0] sm:$0xff]
  %v253 = vld [vmem:[%s4 + $0x5c8] sm:$0xff]
  %v254 = vld [vmem:[%s4 + $0x5d0] sm:$0xff]
  %v255 = vld [vmem:[%s4 + $0x5d8] sm:$0xff]
  %v256 = vld [vmem:[%s4 + $0x5e0] sm:$0xff]
  %v257 = vld [vmem:[%s4 + $0x5e8] sm:$0xff]
  %v258 = vld [vmem:[%s4 + $0x5f0] sm:$0xff]
  %v259 = vld [vmem:[%s4 + $0x5f8] sm:$0xff]
  %v260 = vld [vmem:[%s5] sm:$0x3]
  %v261 = vpack.c.bf16 %v53, %v52
  %v262 = vpack.c.bf16 %v55, %v54
  %v263 = vpack.c.bf16 %v57, %v56
  %v264 = vpack.c.bf16 %v59, %v58
  %v265 = vpack.c.bf16 %v38, %v36
  %v266 = vpack.c.bf16 %v39, %v37
  %v267 = vpack.c.bf16 %v42, %v40
  %v268 = vpack.c.bf16 %v43, %v41
  %v269 = vpack.c.bf16 %v46, %v44
  %v270 = vpack.c.bf16 %v47, %v45
  %v271 = vpack.c.bf16 %v50, %v48
  %v272 = vpack.c.bf16 %v51, %v49
  %vm273 = vcmask 523264
  %v275 = vsel %vm273, %v261, 0
  %v278 = vsel %vm273, %v262, 0
  %v281 = vsel %vm273, %v263, 0
  %v284 = vsel %vm273, %v264, 0
  %286 = vmatprep.subr.bf16.mxu0 %v266
  %287 = vmatpush1.bf16.msra.mxu0 %v265
  %288 = vmatprep.subr.bf16.mxu0 %v268
  %289 = vmatpush1.bf16.msra.mxu0 %v267
  %290 = vmatprep.subr.bf16.mxu0 %v270
  %291 = vmatpush1.bf16.msra.mxu0 %v269
  %292 = vmatprep.subr.bf16.mxu0 %v272
  %293 = vmatpush1.bf16.msra.mxu0 %v271
  %294 = vmatprep.subr.bf16.mxu0 0
  %295 = vmatpush1.bf16.msra.mxu0 0
  %296 = vmatprep.subr.bf16.mxu0 0
  %297 = vmatpush1.bf16.msra.mxu0 0
  %298 = vmatprep.subr.bf16.mxu0 0
  %299 = vmatpush1.bf16.msra.mxu0 0
  %300 = vmatprep.subr.bf16.mxu0 0
  %301 = vmatpush1.bf16.msra.mxu0 0
  %302 = vmatprep.subr.bf16.mxu0 0
  %303 = vmatpush1.bf16.msra.mxu0 0
  %304 = vmatprep.subr.bf16.mxu0 0
  %305 = vmatpush1.bf16.msra.mxu0 0
  %306 = vmatprep.subr.bf16.mxu0 0
  %307 = vmatpush1.bf16.msra.mxu0 0
  %308 = vmatprep.subr.bf16.mxu0 0
  %309 = vmatpush1.bf16.msra.mxu0 0
  %310 = vmatprep.subr.bf16.mxu0 0
  %311 = vmatpush1.bf16.msra.mxu0 0
  %312 = vmatprep.subr.bf16.mxu0 0
  %313 = vmatpush1.bf16.msra.mxu0 0
  %314 = vmatprep.subr.bf16.mxu0 0
  %315 = vmatpush1.bf16.msra.mxu0 0
  %316 = vmatprep.subr.bf16.mxu0 0
  %317 = vmatpush1.bf16.msra.mxu0 0
  %318 = vmatprep.mubr.bf16.mxu0 0
  %319 = vmatmul.mubr.bf16.gmra.mrb[0].mxu0 %v275
  %v320 = vpop.f32.mrb[0].mxu0
  %v321 = vadd.f32 0.0, %v320
  %v322 = vpop.f32.mrb[0].mxu0
  %v323 = vadd.f32 0.0, %v322
  %v324 = vpop.f32.mrb[0].mxu0
  %v325 = vadd.f32 0.0, %v324
  %v326 = vpop.f32.mrb[0].mxu0
  %v327 = vadd.f32 0.0, %v326
  %328 = vmatprep.mubr.bf16.mxu0 0
  %329 = vmatmul.mubr.bf16.gmra.mrb[0].mxu0 %v278
  %v330 = vpop.f32.mrb[0].mxu0
  %v331 = vadd.f32 0.0, %v330
  %v332 = vpop.f32.mrb[0].mxu0
  %v333 = vadd.f32 0.0, %v332
  %v334 = vpop.f32.mrb[0].mxu0
  %v335 = vadd.f32 0.0, %v334
  %v336 = vpop.f32.mrb[0].mxu0
  %v337 = vadd.f32 0.0, %v336
  %338 = vmatprep.mubr.bf16.mxu0 0
  %339 = vmatmul.mubr.bf16.gmra.mrb[0].mxu0 %v281
  %v340 = vpop.f32.mrb[0].mxu0
  %v341 = vadd.f32 0.0, %v340
  %v342 = vpop.f32.mrb[0].mxu0
  %v343 = vadd.f32 0.0, %v342
  %v344 = vpop.f32.mrb[0].mxu0
  %v345 = vadd.f32 0.0, %v344
  %v346 = vpop.f32.mrb[0].mxu0
  %v347 = vadd.f32 0.0, %v346
  %348 = vmatprep.mubr.bf16.mxu0 0
  %349 = vmatmul.mubr.bf16.gmra.mrb[0].mxu0 %v284
  %v350 = vpop.f32.mrb[0].mxu0
  %v351 = vadd.f32 0.0, %v350
  %v352 = vpop.f32.mrb[0].mxu0
  %v353 = vadd.f32 0.0, %v352
  %v354 = vpop.f32.mrb[0].mxu0
  %v355 = vadd.f32 0.0, %v354
  %v356 = vpop.f32.mrb[0].mxu0
  %v357 = vadd.f32 0.0, %v356
  %358 = vdwg.mxu0
  %v359 = vpack.c.bf16 %v61, %v60
  %v360 = vpack.c.bf16 %v63, %v62
  %v361 = vpack.c.bf16 %v65, %v64
  %v362 = vpack.c.bf16 %v67, %v66
  %v364 = vsel %vm273, %v359, 0
  %v367 = vsel %vm273, %v360, 0
  %v370 = vsel %vm273, %v361, 0
  %v373 = vsel %vm273, %v362, 0
  %375 = vmatprep.subr.bf16.mxu0 %v266
  %376 = vmatpush1.bf16.msra.mxu0 %v265
  %377 = vmatprep.subr.bf16.mxu0 %v268
  %378 = vmatpush1.bf16.msra.mxu0 %v267
  %379 = vmatprep.subr.bf16.mxu0 %v270
  %380 = vmatpush1.bf16.msra.mxu0 %v269
  %381 = vmatprep.subr.bf16.mxu0 %v272
  %382 = vmatpush1.bf16.msra.mxu0 %v271
  %383 = vmatprep.subr.bf16.mxu0 0
  %384 = vmatpush1.bf16.msra.mxu0 0
  %385 = vmatprep.subr.bf16.mxu0 0
  %386 = vmatpush1.bf16.msra.mxu0 0
  %387 = vmatprep.subr.bf16.mxu0 0
  %388 = vmatpush1.bf16.msra.mxu0 0
  %389 = vmatprep.subr.bf16.mxu0 0
  %390 = vmatpush1.bf16.msra.mxu0 0
  %391 = vmatprep.subr.bf16.mxu0 0
  %392 = vmatpush1.bf16.msra.mxu0 0
  %393 = vmatprep.subr.bf16.mxu0 0
  %394 = vmatpush1.bf16.msra.mxu0 0
  %395 = vmatprep.subr.bf16.mxu0 0
  %396 = vmatpush1.bf16.msra.mxu0 0
  %397 = vmatprep.subr.bf16.mxu0 0
  %398 = vmatpush1.bf16.msra.mxu0 0
  %399 = vmatprep.subr.bf16.mxu0 0
  %400 = vmatpush1.bf16.msra.mxu0 0
  %401 = vmatprep.subr.bf16.mxu0 0
  %402 = vmatpush1.bf16.msra.mxu0 0
  %403 = vmatprep.subr.bf16.mxu0 0
  %404 = vmatpush1.bf16.msra.mxu0 0
  %405 = vmatprep.subr.bf16.mxu0 0
  %406 = vmatpush1.bf16.msra.mxu0 0
  %407 = vmatprep.mubr.bf16.mxu0 0
  %408 = vmatmul.mubr.bf16.gmra.mrb[0].mxu0 %v364
  %v409 = vpop.f32.mrb[0].mxu0
  %v410 = vadd.f32 0.0, %v409
  %v411 = vpop.f32.mrb[0].mxu0
  %v412 = vadd.f32 0.0, %v411
  %v413 = vpop.f32.mrb[0].mxu0
  %v414 = vadd.f32 0.0, %v413
  %v415 = vpop.f32.mrb[0].mxu0
  %v416 = vadd.f32 0.0, %v415
  %417 = vmatprep.mubr.bf16.mxu0 0
  %418 = vmatmul.mubr.bf16.gmra.mrb[0].mxu0 %v367
  %v419 = vpop.f32.mrb[0].mxu0
  %v420 = vadd.f32 0.0, %v419
  %v421 = vpop.f32.mrb[0].mxu0
  %v422 = vadd.f32 0.0, %v421
  %v423 = vpop.f32.mrb[0].mxu0
  %v424 = vadd.f32 0.0, %v423
  %v425 = vpop.f32.mrb[0].mxu0
  %v426 = vadd.f32 0.0, %v425
  %427 = vmatprep.mubr.bf16.mxu0 0
  %428 = vmatmul.mubr.bf16.gmra.mrb[0].mxu0 %v370
  %v429 = vpop.f32.mrb[0].mxu0
  %v430 = vadd.f32 0.0, %v429
  %v431 = vpop.f32.mrb[0].mxu0
  %v432 = vadd.f32 0.0, %v431
  %v433 = vpop.f32.mrb[0].mxu0
  %v434 = vadd.f32 0.0, %v433
  %v435 = vpop.f32.mrb[0].mxu0
  %v436 = vadd.f32 0.0, %v435
  %437 = vmatprep.mubr.bf16.mxu0 0
  %438 = vmatmul.mubr.bf16.gmra.mrb[0].mxu0 %v373
  %v439 = vpop.f32.mrb[0].mxu0
  %v440 = vadd.f32 0.0, %v439
  %v441 = vpop.f32.mrb[0].mxu0
  %v442 = vadd.f32 0.0, %v441
  %v443 = vpop.f32.mrb[0].mxu0
  %v444 = vadd.f32 0.0, %v443
  %v445 = vpop.f32.mrb[0].mxu0
  %v446 = vadd.f32 0.0, %v445
  %447 = vdwg.mxu0
  %v448 = vpack.c.bf16 %v325, %v321
  %v449 = vpack.c.bf16 %v327, %v323
  %v450 = vpack.c.bf16 %v414, %v410
  %v451 = vpack.c.bf16 %v416, %v412
  %v452 = vpack.c.bf16 %v335, %v331
  %v453 = vpack.c.bf16 %v337, %v333
  %v454 = vpack.c.bf16 %v424, %v420
  %v455 = vpack.c.bf16 %v426, %v422
  %v456 = vpack.c.bf16 %v345, %v341
  %v457 = vpack.c.bf16 %v347, %v343
  %v458 = vpack.c.bf16 %v434, %v430
  %v459 = vpack.c.bf16 %v436, %v432
  %v460 = vpack.c.bf16 %v355, %v351
  %v461 = vpack.c.bf16 %v357, %v353
  %v462 = vpack.c.bf16 %v444, %v440
  %v463 = vpack.c.bf16 %v446, %v442
  %v464 = vpack.c.bf16 %v70, %v68
  %v465 = vpack.c.bf16 %v71, %v69
  %v466 = vpack.c.bf16 %v74, %v72
  %v467 = vpack.c.bf16 %v75, %v73
  %v468 = vpack.c.bf16 %v78, %v76
  %v469 = vpack.c.bf16 %v79, %v77
  %v470 = vpack.c.bf16 %v82, %v80
  %v471 = vpack.c.bf16 %v83, %v81
  %v472 = vpack.c.bf16 %v86, %v84
  %v473 = vpack.c.bf16 %v87, %v85
  %v474 = vpack.c.bf16 %v90, %v88
  %v475 = vpack.c.bf16 %v91, %v89
  %v476 = vpack.c.bf16 %v94, %v92
  %v477 = vpack.c.bf16 %v95, %v93
  %v478 = vpack.c.bf16 %v98, %v96
  %v479 = vpack.c.bf16 %v99, %v97
  %v480 = vpack.c.bf16 %v102, %v100
  %v481 = vpack.c.bf16 %v103, %v101
  %v482 = vpack.c.bf16 %v106, %v104
  %v483 = vpack.c.bf16 %v107, %v105
  %v484 = vpack.c.bf16 %v110, %v108
  %v485 = vpack.c.bf16 %v111, %v109
  %v486 = vpack.c.bf16 %v114, %v112
  %v487 = vpack.c.bf16 %v115, %v113
  %v488 = vpack.c.bf16 %v118, %v116
  %v489 = vpack.c.bf16 %v119, %v117
  %v490 = vpack.c.bf16 %v122, %v120
  %v491 = vpack.c.bf16 %v123, %v121
  %v492 = vpack.c.bf16 %v126, %v124
  %v493 = vpack.c.bf16 %v127, %v125
  %v494 = vpack.c.bf16 %v130, %v128
  %v495 = vpack.c.bf16 %v131, %v129
  %v496 = vpack.c.bf16 %v134, %v132
  %v497 = vpack.c.bf16 %v135, %v133
  %v498 = vpack.c.bf16 %v138, %v136
  %v499 = vpack.c.bf16 %v139, %v137
  %v500 = vpack.c.bf16 %v142, %v140
  %v501 = vpack.c.bf16 %v143, %v141
  %v502 = vpack.c.bf16 %v146, %v144
  %v503 = vpack.c.bf16 %v147, %v145
  %v504 = vpack.c.bf16 %v150, %v148
  %v505 = vpack.c.bf16 %v151, %v149
  %v506 = vpack.c.bf16 %v154, %v152
  %v507 = vpack.c.bf16 %v155, %v153
  %v508 = vpack.c.bf16 %v158, %v156
  %v509 = vpack.c.bf16 %v159, %v157
  %v510 = vpack.c.bf16 %v162, %v160
  %v511 = vpack.c.bf16 %v163, %v161
  %v512 = vpack.c.bf16 %v166, %v164
  %v513 = vpack.c.bf16 %v167, %v165
  %v514 = vpack.c.bf16 %v170, %v168
  %v515 = vpack.c.bf16 %v171, %v169
  %v516 = vpack.c.bf16 %v174, %v172
  %v517 = vpack.c.bf16 %v175, %v173
  %v518 = vpack.c.bf16 %v178, %v176
  %v519 = vpack.c.bf16 %v179, %v177
  %v520 = vpack.c.bf16 %v182, %v180
  %v521 = vpack.c.bf16 %v183, %v181
  %v522 = vpack.c.bf16 %v186, %v184
  %v523 = vpack.c.bf16 %v187, %v185
  %v524 = vpack.c.bf16 %v190, %v188
  %v525 = vpack.c.bf16 %v191, %v189
  %v526 = vpack.c.bf16 %v194, %v192
  %v527 = vpack.c.bf16 %v195, %v193
  %v528 = vpack.c.bf16 %v198, %v196
  %v529 = vpack.c.bf16 %v199, %v197
  %v530 = vpack.c.bf16 %v202, %v200
  %v531 = vpack.c.bf16 %v203, %v201
  %v532 = vpack.c.bf16 %v206, %v204
  %v533 = vpack.c.bf16 %v207, %v205
  %v534 = vpack.c.bf16 %v210, %v208
  %v535 = vpack.c.bf16 %v211, %v209
  %v536 = vpack.c.bf16 %v214, %v212
  %v537 = vpack.c.bf16 %v215, %v213
  %v538 = vpack.c.bf16 %v218, %v216
  %v539 = vpack.c.bf16 %v219, %v217
  %v540 = vpack.c.bf16 %v222, %v220
  %v541 = vpack.c.bf16 %v223, %v221
  %v542 = vpack.c.bf16 %v226, %v224
  %v543 = vpack.c.bf16 %v227, %v225
  %v544 = vpack.c.bf16 %v230, %v228
  %v545 = vpack.c.bf16 %v231, %v229
  %v546 = vpack.c.bf16 %v234, %v232
  %v547 = vpack.c.bf16 %v235, %v233
  %v548 = vpack.c.bf16 %v238, %v236
  %v549 = vpack.c.bf16 %v239, %v237
  %v550 = vpack.c.bf16 %v242, %v240
  %v551 = vpack.c.bf16 %v243, %v241
  %v552 = vpack.c.bf16 %v246, %v244
  %v553 = vpack.c.bf16 %v247, %v245
  %v554 = vpack.c.bf16 %v250, %v248
  %v555 = vpack.c.bf16 %v251, %v249
  %v556 = vpack.c.bf16 %v254, %v252
  %v557 = vpack.c.bf16 %v255, %v253
  %v558 = vpack.c.bf16 %v258, %v256
  %v559 = vpack.c.bf16 %v259, %v257
  %v561 = vlaneseq
  %v562 = vshrl.u32 %v561, 7
  %v563 = vsub.s32 0, %v562
  %v564 = vrot.slane %v260, %v563
  %v565 = vlaneseq
  %v566 = vshrl.u32 %v565, 7
  %v567 = vsub.s32 1, %v566
  %v568 = vrot.slane %v260, %v567
  %571 = vmatprep.subr.bf16.mxu0 %v465
  %572 = vmatpush1.bf16.msra.mxu0 %v464
  %573 = vmatprep.subr.bf16.mxu0 %v467
  %574 = vmatpush1.bf16.msra.mxu0 %v466
  %575 = vmatprep.subr.bf16.mxu0 %v469
  %576 = vmatpush1.bf16.msra.mxu0 %v468
  %577 = vmatprep.subr.bf16.mxu0 %v471
  %578 = vmatpush1.bf16.msra.mxu0 %v470
  %579 = vmatprep.subr.bf16.mxu0 %v473
  %580 = vmatpush1.bf16.msra.mxu0 %v472
  %581 = vmatprep.subr.bf16.mxu0 %v475
  %582 = vmatpush1.bf16.msra.mxu0 %v474
  %583 = vmatprep.subr.bf16.mxu0 %v477
  %584 = vmatpush1.bf16.msra.mxu0 %v476
  %585 = vmatprep.subr.bf16.mxu0 %v479
  %586 = vmatpush1.bf16.msra.mxu0 %v478
  %587 = vmatprep.subr.bf16.mxu0 %v481
  %588 = vmatpush1.bf16.msra.mxu0 %v480
  %589 = vmatprep.subr.bf16.mxu0 %v483
  %590 = vmatpush1.bf16.msra.mxu0 %v482
  %591 = vmatprep.subr.bf16.mxu0 %v485
  %592 = vmatpush1.bf16.msra.mxu0 %v484
  %593 = vmatprep.subr.bf16.mxu0 %v487
  %594 = vmatpush1.bf16.msra.mxu0 %v486
  %595 = vmatprep.subr.bf16.mxu0 %v489
  %596 = vmatpush1.bf16.msra.mxu0 %v488
  %597 = vmatprep.subr.bf16.mxu0 %v491
  %598 = vmatpush1.bf16.msra.mxu0 %v490
  %599 = vmatprep.subr.bf16.mxu0 %v493
  %600 = vmatpush1.bf16.msra.mxu0 %v492
  %601 = vmatprep.subr.bf16.mxu0 %v495
  %602 = vmatpush1.bf16.msra.mxu0 %v494
  %603 = vmatprep.mubr.bf16.mxu0 %v449
  %604 = vmatmul.mubr.bf16.gmra.mrb[0].mxu0 %v448
  %v605 = vpop.f32.mrb[0].mxu0
  %v606 = vadd.f32 %v564, %v605
  %v607 = vpop.f32.mrb[0].mxu0
  %v608 = vadd.f32 %v568, %v607
  %v609 = vpop.f32.mrb[0].mxu0
  %v610 = vadd.f32 %v564, %v609
  %v611 = vpop.f32.mrb[0].mxu0
  %v612 = vadd.f32 %v568, %v611
  %613 = vmatprep.mubr.bf16.mxu0 %v453
  %614 = vmatmul.mubr.bf16.gmra.mrb[0].mxu0 %v452
  %v615 = vpop.f32.mrb[0].mxu0
  %v616 = vadd.f32 %v564, %v615
  %v617 = vpop.f32.mrb[0].mxu0
  %v618 = vadd.f32 %v568, %v617
  %v619 = vpop.f32.mrb[0].mxu0
  %v620 = vadd.f32 %v564, %v619
  %v621 = vpop.f32.mrb[0].mxu0
  %v622 = vadd.f32 %v568, %v621
  %623 = vmatprep.mubr.bf16.mxu0 %v457
  %624 = vmatmul.mubr.bf16.gmra.mrb[0].mxu0 %v456
  %v625 = vpop.f32.mrb[0].mxu0
  %v626 = vadd.f32 %v564, %v625
  %v627 = vpop.f32.mrb[0].mxu0
  %v628 = vadd.f32 %v568, %v627
  %v629 = vpop.f32.mrb[0].mxu0
  %v630 = vadd.f32 %v564, %v629
  %v631 = vpop.f32.mrb[0].mxu0
  %v632 = vadd.f32 %v568, %v631
  %633 = vmatprep.mubr.bf16.mxu0 %v461
  %634 = vmatmul.mubr.bf16.gmra.mrb[0].mxu0 %v460
  %v635 = vpop.f32.mrb[0].mxu0
  %v636 = vadd.f32 %v564, %v635
  %v637 = vpop.f32.mrb[0].mxu0
  %v638 = vadd.f32 %v568, %v637
  %v639 = vpop.f32.mrb[0].mxu0
  %v640 = vadd.f32 %v564, %v639
  %v641 = vpop.f32.mrb[0].mxu0
  %v642 = vadd.f32 %v568, %v641
  %643 = vdwg.mxu0
  %644 = vmatprep.subr.bf16.mxu0 %v497
  %645 = vmatpush1.bf16.msra.mxu0 %v496
  %646 = vmatprep.subr.bf16.mxu0 %v499
  %647 = vmatpush1.bf16.msra.mxu0 %v498
  %648 = vmatprep.subr.bf16.mxu0 %v501
  %649 = vmatpush1.bf16.msra.mxu0 %v500
  %650 = vmatprep.subr.bf16.mxu0 %v503
  %651 = vmatpush1.bf16.msra.mxu0 %v502
  %652 = vmatprep.subr.bf16.mxu0 %v505
  %653 = vmatpush1.bf16.msra.mxu0 %v504
  %654 = vmatprep.subr.bf16.mxu0 %v507
  %655 = vmatpush1.bf16.msra.mxu0 %v506
  %656 = vmatprep.subr.bf16.mxu0 %v509
  %657 = vmatpush1.bf16.msra.mxu0 %v508
  %658 = vmatprep.subr.bf16.mxu0 %v511
  %659 = vmatpush1.bf16.msra.mxu0 %v510
  %660 = vmatprep.subr.bf16.mxu0 %v513
  %661 = vmatpush1.bf16.msra.mxu0 %v512
  %662 = vmatprep.subr.bf16.mxu0 %v515
  %663 = vmatpush1.bf16.msra.mxu0 %v514
  %664 = vmatprep.subr.bf16.mxu0 %v517
  %665 = vmatpush1.bf16.msra.mxu0 %v516
  %666 = vmatprep.subr.bf16.mxu0 %v519
  %667 = vmatpush1.bf16.msra.mxu0 %v518
  %668 = vmatprep.subr.bf16.mxu0 %v521
  %669 = vmatpush1.bf16.msra.mxu0 %v520
  %670 = vmatprep.subr.bf16.mxu0 %v523
  %671 = vmatpush1.bf16.msra.mxu0 %v522
  %672 = vmatprep.subr.bf16.mxu0 %v525
  %673 = vmatpush1.bf16.msra.mxu0 %v524
  %674 = vmatprep.subr.bf16.mxu0 %v527
  %675 = vmatpush1.bf16.msra.mxu0 %v526
  %676 = vmatprep.mubr.bf16.mxu0 %v266
  %677 = vmatmul.mubr.bf16.gmra.mrb[0].mxu0 %v265
  %v678 = vpop.f32.mrb[0].mxu0
  %v679 = vadd.f32 %v606, %v678
  %v680 = vpop.f32.mrb[0].mxu0
  %v681 = vadd.f32 %v608, %v680
  %v682 = vpop.f32.mrb[0].mxu0
  %v683 = vadd.f32 %v610, %v682
  %v684 = vpop.f32.mrb[0].mxu0
  %v685 = vadd.f32 %v612, %v684
  %686 = vmatprep.mubr.bf16.mxu0 %v268
  %687 = vmatmul.mubr.bf16.gmra.mrb[0].mxu0 %v267
  %v688 = vpop.f32.mrb[0].mxu0
  %v689 = vadd.f32 %v616, %v688
  %v690 = vpop.f32.mrb[0].mxu0
  %v691 = vadd.f32 %v618, %v690
  %v692 = vpop.f32.mrb[0].mxu0
  %v693 = vadd.f32 %v620, %v692
  %v694 = vpop.f32.mrb[0].mxu0
  %v695 = vadd.f32 %v622, %v694
  %696 = vmatprep.mubr.bf16.mxu0 %v270
  %697 = vmatmul.mubr.bf16.gmra.mrb[0].mxu0 %v269
  %v698 = vpop.f32.mrb[0].mxu0
  %v699 = vadd.f32 %v626, %v698
  %v700 = vpop.f32.mrb[0].mxu0
  %v701 = vadd.f32 %v628, %v700
  %v702 = vpop.f32.mrb[0].mxu0
  %v703 = vadd.f32 %v630, %v702
  %v704 = vpop.f32.mrb[0].mxu0
  %v705 = vadd.f32 %v632, %v704
  %706 = vmatprep.mubr.bf16.mxu0 %v272
  %707 = vmatmul.mubr.bf16.gmra.mrb[0].mxu0 %v271
  %v708 = vpop.f32.mrb[0].mxu0
  %v709 = vadd.f32 %v636, %v708
  %v710 = vpop.f32.mrb[0].mxu0
  %v711 = vadd.f32 %v638, %v710
  %v712 = vpop.f32.mrb[0].mxu0
  %v713 = vadd.f32 %v640, %v712
  %v714 = vpop.f32.mrb[0].mxu0
  %v715 = vadd.f32 %v642, %v714
  %716 = vdwg.mxu0
  %717 = vmatprep.subr.bf16.mxu0 %v529
  %718 = vmatpush1.bf16.msra.mxu0 %v528
  %719 = vmatprep.subr.bf16.mxu0 %v531
  %720 = vmatpush1.bf16.msra.mxu0 %v530
  %721 = vmatprep.subr.bf16.mxu0 %v533
  %722 = vmatpush1.bf16.msra.mxu0 %v532
  %723 = vmatprep.subr.bf16.mxu0 %v535
  %724 = vmatpush1.bf16.msra.mxu0 %v534
  %725 = vmatprep.subr.bf16.mxu0 %v537
  %726 = vmatpush1.bf16.msra.mxu0 %v536
  %727 = vmatprep.subr.bf16.mxu0 %v539
  %728 = vmatpush1.bf16.msra.mxu0 %v538
  %729 = vmatprep.subr.bf16.mxu0 %v541
  %730 = vmatpush1.bf16.msra.mxu0 %v540
  %731 = vmatprep.subr.bf16.mxu0 %v543
  %732 = vmatpush1.bf16.msra.mxu0 %v542
  %733 = vmatprep.subr.bf16.mxu0 %v545
  %734 = vmatpush1.bf16.msra.mxu0 %v544
  %735 = vmatprep.subr.bf16.mxu0 %v547
  %736 = vmatpush1.bf16.msra.mxu0 %v546
  %737 = vmatprep.subr.bf16.mxu0 %v549
  %738 = vmatpush1.bf16.msra.mxu0 %v548
  %739 = vmatprep.subr.bf16.mxu0 %v551
  %740 = vmatpush1.bf16.msra.mxu0 %v550
  %741 = vmatprep.subr.bf16.mxu0 %v553
  %742 = vmatpush1.bf16.msra.mxu0 %v552
  %743 = vmatprep.subr.bf16.mxu0 %v555
  %744 = vmatpush1.bf16.msra.mxu0 %v554
  %745 = vmatprep.subr.bf16.mxu0 %v557
  %746 = vmatpush1.bf16.msra.mxu0 %v556
  %747 = vmatprep.subr.bf16.mxu0 %v559
  %748 = vmatpush1.bf16.msra.mxu0 %v558
  %749 = vmatprep.mubr.bf16.mxu0 %v451
  %750 = vmatmul.mubr.bf16.gmra.mrb[0].mxu0 %v450
  %v751 = vpop.f32.mrb[0].mxu0
  %v752 = vadd.f32 %v679, %v751
  %v753 = vpop.f32.mrb[0].mxu0
  %v754 = vadd.f32 %v681, %v753
  %v755 = vpop.f32.mrb[0].mxu0
  %v756 = vadd.f32 %v683, %v755
  %v757 = vpop.f32.mrb[0].mxu0
  %v758 = vadd.f32 %v685, %v757
  %759 = vmatprep.mubr.bf16.mxu0 %v455
  %760 = vmatmul.mubr.bf16.gmra.mrb[0].mxu0 %v454
  %v761 = vpop.f32.mrb[0].mxu0
  %v762 = vadd.f32 %v689, %v761
  %v763 = vpop.f32.mrb[0].mxu0
  %v764 = vadd.f32 %v691, %v763
  %v765 = vpop.f32.mrb[0].mxu0
  %v766 = vadd.f32 %v693, %v765
  %v767 = vpop.f32.mrb[0].mxu0
  %v768 = vadd.f32 %v695, %v767
  %769 = vmatprep.mubr.bf16.mxu0 %v459
  %770 = vmatmul.mubr.bf16.gmra.mrb[0].mxu0 %v458
  %v771 = vpop.f32.mrb[0].mxu0
  %v772 = vadd.f32 %v699, %v771
  %v773 = vpop.f32.mrb[0].mxu0
  %v774 = vadd.f32 %v701, %v773
  %v775 = vpop.f32.mrb[0].mxu0
  %v776 = vadd.f32 %v703, %v775
  %v777 = vpop.f32.mrb[0].mxu0
  %v778 = vadd.f32 %v705, %v777
  %779 = vmatprep.mubr.bf16.mxu0 %v463
  %780 = vmatmul.mubr.bf16.gmra.mrb[0].mxu0 %v462
  %v781 = vpop.f32.mrb[0].mxu0
  %v782 = vadd.f32 %v709, %v781
  %v783 = vpop.f32.mrb[0].mxu0
  %v784 = vadd.f32 %v711, %v783
  %v785 = vpop.f32.mrb[0].mxu0
  %v786 = vadd.f32 %v713, %v785
  %v787 = vpop.f32.mrb[0].mxu0
  %v788 = vadd.f32 %v715, %v787
  %789 = vdwg.mxu0
  %v790 = vmax.f32 %v752, 0.0
  %v791 = vmax.f32 %v754, 0.0
  %v792 = vmax.f32 %v756, 0.0
  %v793 = vmax.f32 %v758, 0.0
  %v794 = vmax.f32 %v762, 0.0
  %v795 = vmax.f32 %v764, 0.0
  %v796 = vmax.f32 %v766, 0.0
  %v797 = vmax.f32 %v768, 0.0
  %v798 = vmax.f32 %v772, 0.0
  %v799 = vmax.f32 %v774, 0.0
  %v800 = vmax.f32 %v776, 0.0
  %v801 = vmax.f32 %v778, 0.0
  %v802 = vmax.f32 %v782, 0.0
  %v803 = vmax.f32 %v784, 0.0
  %v804 = vmax.f32 %v786, 0.0
  %v805 = vmax.f32 %v788, 0.0
  %v806 = vadd.f32 %v36, %v790
  %v807 = vadd.f32 %v37, %v791
  %v808 = vadd.f32 %v38, %v792
  %v809 = vadd.f32 %v39, %v793
  %v810 = vadd.f32 %v40, %v794
  %v811 = vadd.f32 %v41, %v795
  %v812 = vadd.f32 %v42, %v796
  %v813 = vadd.f32 %v43, %v797
  %v814 = vadd.f32 %v44, %v798
  %v815 = vadd.f32 %v45, %v799
  %v816 = vadd.f32 %v46, %v800
  %v817 = vadd.f32 %v47, %v801
  %v818 = vadd.f32 %v48, %v802
  %v819 = vadd.f32 %v49, %v803
  %v820 = vadd.f32 %v50, %v804
  %v821 = vadd.f32 %v51, %v805
  %v822 = vld [vmem:[%s1] sm:$0xff]
  %v823 = vld [vmem:[%s1 + $0x8] sm:$0xff]
  %v824 = vld [vmem:[%s1 + $0x10] sm:$0xff]
  %v825 = vld [vmem:[%s1 + $0x18] sm:$0xff]
  %v826 = vld [vmem:[%s1 + $0x20] sm:$0xff]
  %v827 = vld [vmem:[%s1 + $0x28] sm:$0xff]
  %v828 = vld [vmem:[%s1 + $0x30] sm:$0xff]
  %v829 = vld [vmem:[%s1 + $0x38] sm:$0xff]
  %v830 = vld [vmem:[%s1 + $0x40] sm:$0xff]
  %v831 = vld [vmem:[%s1 + $0x48] sm:$0xff]
  %v832 = vld [vmem:[%s1 + $0x50] sm:$0xff]
  %v833 = vld [vmem:[%s1 + $0x58] sm:$0xff]
  %v834 = vld [vmem:[%s1 + $0x60] sm:$0xff]
  %v835 = vld [vmem:[%s1 + $0x68] sm:$0xff]
  %v836 = vld [vmem:[%s1 + $0x70] sm:$0xff]
  %v837 = vld [vmem:[%s1 + $0x78] sm:$0xff]
  %v838 = vld [vmem:[%s1 + $0x80] sm:$0xff]
  %v839 = vld [vmem:[%s1 + $0x88] sm:$0xff]
  %v840 = vld [vmem:[%s1 + $0x90] sm:$0xff]
  %v841 = vld [vmem:[%s1 + $0x98] sm:$0xff]
  %v842 = vld [vmem:[%s1 + $0xa0] sm:$0xff]
  %v843 = vld [vmem:[%s1 + $0xa8] sm:$0xff]
  %v844 = vld [vmem:[%s1 + $0xb0] sm:$0xff]
  %v845 = vld [vmem:[%s1 + $0xb8] sm:$0xff]
  %v846 = vld [vmem:[%s1 + $0xc0] sm:$0xff]
  %v847 = vld [vmem:[%s1 + $0xc8] sm:$0xff]
  %v848 = vld [vmem:[%s1 + $0xd0] sm:$0xff]
  %v849 = vld [vmem:[%s1 + $0xd8] sm:$0xff]
  %v850 = vld [vmem:[%s1 + $0xe0] sm:$0xff]
  %v851 = vld [vmem:[%s1 + $0xe8] sm:$0xff]
  %v852 = vld [vmem:[%s1 + $0xf0] sm:$0xff]
  %v853 = vld [vmem:[%s1 + $0xf8] sm:$0xff]
  %v854 = vpack.c.bf16 %v823, %v822
  %v855 = vpack.c.bf16 %v825, %v824
  %v856 = vpack.c.bf16 %v827, %v826
  %v857 = vpack.c.bf16 %v829, %v828
  %v858 = vpack.c.bf16 %v831, %v830
  %v859 = vpack.c.bf16 %v833, %v832
  %v860 = vpack.c.bf16 %v835, %v834
  %v861 = vpack.c.bf16 %v837, %v836
  %v862 = vpack.c.bf16 %v839, %v838
  %v863 = vpack.c.bf16 %v841, %v840
  %v864 = vpack.c.bf16 %v843, %v842
  %v865 = vpack.c.bf16 %v845, %v844
  %v866 = vpack.c.bf16 %v847, %v846
  %v867 = vpack.c.bf16 %v849, %v848
  %v868 = vpack.c.bf16 %v851, %v850
  %v869 = vpack.c.bf16 %v853, %v852
  %v870 = vpack.c.bf16 %v808, %v806
  %v871 = vpack.c.bf16 %v809, %v807
  %v872 = vpack.c.bf16 %v812, %v810
  %v873 = vpack.c.bf16 %v813, %v811
  %v874 = vpack.c.bf16 %v816, %v814
  %v875 = vpack.c.bf16 %v817, %v815
  %v876 = vpack.c.bf16 %v820, %v818
  %v877 = vpack.c.bf16 %v821, %v819
  %v879 = vsel %vm273, %v854, 0
  %v882 = vsel %vm273, %v855, 0
  %v885 = vsel %vm273, %v856, 0
  %v888 = vsel %vm273, %v857, 0
  %v891 = vsel %vm273, %v858, 0
  %v894 = vsel %vm273, %v859, 0
  %v897 = vsel %vm273, %v860, 0
  %v900 = vsel %vm273, %v861, 0
  %v903 = vsel %vm273, %v862, 0
  %v906 = vsel %vm273, %v863, 0
  %v909 = vsel %vm273, %v864, 0
  %v912 = vsel %vm273, %v865, 0
  %v915 = vsel %vm273, %v866, 0
  %v918 = vsel %vm273, %v867, 0
  %v921 = vsel %vm273, %v868, 0
  %v924 = vsel %vm273, %v869, 0
  %926 = vmatprep.subr.bf16.mxu0 %v871
  %927 = vmatpush1.bf16.msra.mxu0 %v870
  %928 = vmatprep.subr.bf16.mxu0 %v873
  %929 = vmatpush1.bf16.msra.mxu0 %v872
  %930 = vmatprep.subr.bf16.mxu0 %v875
  %931 = vmatpush1.bf16.msra.mxu0 %v874
  %932 = vmatprep.subr.bf16.mxu0 %v877
  %933 = vmatpush1.bf16.msra.mxu0 %v876
  %934 = vmatprep.subr.bf16.mxu0 0
  %935 = vmatpush1.bf16.msra.mxu0 0
  %936 = vmatprep.subr.bf16.mxu0 0
  %937 = vmatpush1.bf16.msra.mxu0 0
  %938 = vmatprep.subr.bf16.mxu0 0
  %939 = vmatpush1.bf16.msra.mxu0 0
  %940 = vmatprep.subr.bf16.mxu0 0
  %941 = vmatpush1.bf16.msra.mxu0 0
  %942 = vmatprep.subr.bf16.mxu0 0
  %943 = vmatpush1.bf16.msra.mxu0 0
  %944 = vmatprep.subr.bf16.mxu0 0
  %945 = vmatpush1.bf16.msra.mxu0 0
  %946 = vmatprep.subr.bf16.mxu0 0
  %947 = vmatpush1.bf16.msra.mxu0 0
  %948 = vmatprep.subr.bf16.mxu0 0
  %949 = vmatpush1.bf16.msra.mxu0 0
  %950 = vmatprep.subr.bf16.mxu0 0
  %951 = vmatpush1.bf16.msra.mxu0 0
  %952 = vmatprep.subr.bf16.mxu0 0
  %953 = vmatpush1.bf16.msra.mxu0 0
  %954 = vmatprep.subr.bf16.mxu0 0
  %955 = vmatpush1.bf16.msra.mxu0 0
  %956 = vmatprep.subr.bf16.mxu0 0
  %957 = vmatpush1.bf16.msra.mxu0 0
  %958 = vmatprep.mubr.bf16.mxu0 0
  %959 = vmatmul.mubr.bf16.gmra.mrb[0].mxu0 %v879
  %v960 = vpop.f32.mrb[0].mxu0
  %v961 = vadd.f32 0.0, %v960
  %v962 = vpop.f32.mrb[0].mxu0
  %v963 = vadd.f32 0.0, %v962
  %v964 = vpop.f32.mrb[0].mxu0
  %v965 = vadd.f32 0.0, %v964
  %v966 = vpop.f32.mrb[0].mxu0
  %v967 = vadd.f32 0.0, %v966
  %968 = vmatprep.mubr.bf16.mxu0 0
  %969 = vmatmul.mubr.bf16.gmra.mrb[0].mxu0 %v882
  %v970 = vpop.f32.mrb[0].mxu0
  %v971 = vadd.f32 0.0, %v970
  %v972 = vpop.f32.mrb[0].mxu0
  %v973 = vadd.f32 0.0, %v972
  %v974 = vpop.f32.mrb[0].mxu0
  %v975 = vadd.f32 0.0, %v974
  %v976 = vpop.f32.mrb[0].mxu0
  %v977 = vadd.f32 0.0, %v976
  %978 = vmatprep.mubr.bf16.mxu0 0
  %979 = vmatmul.mubr.bf16.gmra.mrb[0].mxu0 %v885
  %v980 = vpop.f32.mrb[0].mxu0
  %v981 = vadd.f32 0.0, %v980
  %v982 = vpop.f32.mrb[0].mxu0
  %v983 = vadd.f32 0.0, %v982
  %v984 = vpop.f32.mrb[0].mxu0
  %v985 = vadd.f32 0.0, %v984
  %v986 = vpop.f32.mrb[0].mxu0
  %v987 = vadd.f32 0.0, %v986
  %988 = vmatprep.mubr.bf16.mxu0 0
  %989 = vmatmul.mubr.bf16.gmra.mrb[0].mxu0 %v888
  %v990 = vpop.f32.mrb[0].mxu0
  %v991 = vadd.f32 0.0, %v990
  %v992 = vpop.f32.mrb[0].mxu0
  %v993 = vadd.f32 0.0, %v992
  %v994 = vpop.f32.mrb[0].mxu0
  %v995 = vadd.f32 0.0, %v994
  %v996 = vpop.f32.mrb[0].mxu0
  %v997 = vadd.f32 0.0, %v996
  %998 = vmatprep.mubr.bf16.mxu0 0
  %999 = vmatmul.mubr.bf16.gmra.mrb[0].mxu0 %v891
  %v1000 = vpop.f32.mrb[0].mxu0
  %v1001 = vadd.f32 0.0, %v1000
  %v1002 = vpop.f32.mrb[0].mxu0
  %v1003 = vadd.f32 0.0, %v1002
  %v1004 = vpop.f32.mrb[0].mxu0
  %v1005 = vadd.f32 0.0, %v1004
  %v1006 = vpop.f32.mrb[0].mxu0
  %v1007 = vadd.f32 0.0, %v1006
  %1008 = vmatprep.mubr.bf16.mxu0 0
  %1009 = vmatmul.mubr.bf16.gmra.mrb[0].mxu0 %v894
  %v1010 = vpop.f32.mrb[0].mxu0
  %v1011 = vadd.f32 0.0, %v1010
  %v1012 = vpop.f32.mrb[0].mxu0
  %v1013 = vadd.f32 0.0, %v1012
  %v1014 = vpop.f32.mrb[0].mxu0
  %v1015 = vadd.f32 0.0, %v1014
  %v1016 = vpop.f32.mrb[0].mxu0
  %v1017 = vadd.f32 0.0, %v1016
  %1018 = vmatprep.mubr.bf16.mxu0 0
  %1019 = vmatmul.mubr.bf16.gmra.mrb[0].mxu0 %v897
  %v1020 = vpop.f32.mrb[0].mxu0
  %v1021 = vadd.f32 0.0, %v1020
  %v1022 = vpop.f32.mrb[0].mxu0
  %v1023 = vadd.f32 0.0, %v1022
  %v1024 = vpop.f32.mrb[0].mxu0
  %v1025 = vadd.f32 0.0, %v1024
  %v1026 = vpop.f32.mrb[0].mxu0
  %v1027 = vadd.f32 0.0, %v1026
  %1028 = vmatprep.mubr.bf16.mxu0 0
  %1029 = vmatmul.mubr.bf16.gmra.mrb[0].mxu0 %v900
  %v1030 = vpop.f32.mrb[0].mxu0
  %v1031 = vadd.f32 0.0, %v1030
  %v1032 = vpop.f32.mrb[0].mxu0
  %v1033 = vadd.f32 0.0, %v1032
  %v1034 = vpop.f32.mrb[0].mxu0
  %v1035 = vadd.f32 0.0, %v1034
  %v1036 = vpop.f32.mrb[0].mxu0
  %v1037 = vadd.f32 0.0, %v1036
  %1038 = vmatprep.mubr.bf16.mxu0 0
  %1039 = vmatmul.mubr.bf16.gmra.mrb[0].mxu0 %v903
  %v1040 = vpop.f32.mrb[0].mxu0
  %v1041 = vadd.f32 0.0, %v1040
  %v1042 = vpop.f32.mrb[0].mxu0
  %v1043 = vadd.f32 0.0, %v1042
  %v1044 = vpop.f32.mrb[0].mxu0
  %v1045 = vadd.f32 0.0, %v1044
  %v1046 = vpop.f32.mrb[0].mxu0
  %v1047 = vadd.f32 0.0, %v1046
  %1048 = vmatprep.mubr.bf16.mxu0 0
  %1049 = vmatmul.mubr.bf16.gmra.mrb[0].mxu0 %v906
  %v1050 = vpop.f32.mrb[0].mxu0
  %v1051 = vadd.f32 0.0, %v1050
  %v1052 = vpop.f32.mrb[0].mxu0
  %v1053 = vadd.f32 0.0, %v1052
  %v1054 = vpop.f32.mrb[0].mxu0
  %v1055 = vadd.f32 0.0, %v1054
  %v1056 = vpop.f32.mrb[0].mxu0
  %v1057 = vadd.f32 0.0, %v1056
  %1058 = vmatprep.mubr.bf16.mxu0 0
  %1059 = vmatmul.mubr.bf16.gmra.mrb[0].mxu0 %v909
  %v1060 = vpop.f32.mrb[0].mxu0
  %v1061 = vadd.f32 0.0, %v1060
  %v1062 = vpop.f32.mrb[0].mxu0
  %v1063 = vadd.f32 0.0, %v1062
  %v1064 = vpop.f32.mrb[0].mxu0
  %v1065 = vadd.f32 0.0, %v1064
  %v1066 = vpop.f32.mrb[0].mxu0
  %v1067 = vadd.f32 0.0, %v1066
  %1068 = vmatprep.mubr.bf16.mxu0 0
  %1069 = vmatmul.mubr.bf16.gmra.mrb[0].mxu0 %v912
  %v1070 = vpop.f32.mrb[0].mxu0
  %v1071 = vadd.f32 0.0, %v1070
  %v1072 = vpop.f32.mrb[0].mxu0
  %v1073 = vadd.f32 0.0, %v1072
  %v1074 = vpop.f32.mrb[0].mxu0
  %v1075 = vadd.f32 0.0, %v1074
  %v1076 = vpop.f32.mrb[0].mxu0
  %v1077 = vadd.f32 0.0, %v1076
  %1078 = vmatprep.mubr.bf16.mxu0 0
  %1079 = vmatmul.mubr.bf16.gmra.mrb[0].mxu0 %v915
  %v1080 = vpop.f32.mrb[0].mxu0
  %v1081 = vadd.f32 0.0, %v1080
  %v1082 = vpop.f32.mrb[0].mxu0
  %v1083 = vadd.f32 0.0, %v1082
  %v1084 = vpop.f32.mrb[0].mxu0
  %v1085 = vadd.f32 0.0, %v1084
  %v1086 = vpop.f32.mrb[0].mxu0
  %v1087 = vadd.f32 0.0, %v1086
  %1088 = vmatprep.mubr.bf16.mxu0 0
  %1089 = vmatmul.mubr.bf16.gmra.mrb[0].mxu0 %v918
  %v1090 = vpop.f32.mrb[0].mxu0
  %v1091 = vadd.f32 0.0, %v1090
  %v1092 = vpop.f32.mrb[0].mxu0
  %v1093 = vadd.f32 0.0, %v1092
  %v1094 = vpop.f32.mrb[0].mxu0
  %v1095 = vadd.f32 0.0, %v1094
  %v1096 = vpop.f32.mrb[0].mxu0
  %v1097 = vadd.f32 0.0, %v1096
  %1098 = vmatprep.mubr.bf16.mxu0 0
  %1099 = vmatmul.mubr.bf16.gmra.mrb[0].mxu0 %v921
  %v1100 = vpop.f32.mrb[0].mxu0
  %v1101 = vadd.f32 0.0, %v1100
  %v1102 = vpop.f32.mrb[0].mxu0
  %v1103 = vadd.f32 0.0, %v1102
  %v1104 = vpop.f32.mrb[0].mxu0
  %v1105 = vadd.f32 0.0, %v1104
  %v1106 = vpop.f32.mrb[0].mxu0
  %v1107 = vadd.f32 0.0, %v1106
  %1108 = vmatprep.mubr.bf16.mxu0 0
  %1109 = vmatmul.mubr.bf16.gmra.mrb[0].mxu0 %v924
  %v1110 = vpop.f32.mrb[0].mxu0
  %v1111 = vadd.f32 0.0, %v1110
  %v1112 = vpop.f32.mrb[0].mxu0
  %v1113 = vadd.f32 0.0, %v1112
  %v1114 = vpop.f32.mrb[0].mxu0
  %v1115 = vadd.f32 0.0, %v1114
  %v1116 = vpop.f32.mrb[0].mxu0
  %v1117 = vadd.f32 0.0, %v1116
  %1118 = vdwg.mxu0
  %v1119 = vld [vmem:[%s6] sm:$0xff]
  %v1120 = vld [vmem:[%s6 + $0x8] sm:$0xff]
  %v1121 = vld [vmem:[%s6 + $0x10] sm:$0xff]
  %v1122 = vld [vmem:[%s6 + $0x18] sm:$0xff]
  %v1123 = vld [vmem:[%s6 + $0x20] sm:$0xff]
  %v1124 = vld [vmem:[%s6 + $0x28] sm:$0xff]
  %v1125 = vld [vmem:[%s6 + $0x30] sm:$0xff]
  %v1126 = vld [vmem:[%s6 + $0x38] sm:$0xff]
  %v1127 = vld [vmem:[%s6 + $0x40] sm:$0xff]
  %v1128 = vld [vmem:[%s6 + $0x48] sm:$0xff]
  %v1129 = vld [vmem:[%s6 + $0x50] sm:$0xff]
  %v1130 = vld [vmem:[%s6 + $0x58] sm:$0xff]
  %v1131 = vld [vmem:[%s6 + $0x60] sm:$0xff]
  %v1132 = vld [vmem:[%s6 + $0x68] sm:$0xff]
  %v1133 = vld [vmem:[%s6 + $0x70] sm:$0xff]
  %v1134 = vld [vmem:[%s6 + $0x78] sm:$0xff]
  %v1135 = vld [vmem:[%s6 + $0x80] sm:$0xff]
  %v1136 = vld [vmem:[%s6 + $0x88] sm:$0xff]
  %v1137 = vld [vmem:[%s6 + $0x90] sm:$0xff]
  %v1138 = vld [vmem:[%s6 + $0x98] sm:$0xff]
  %v1139 = vld [vmem:[%s6 + $0xa0] sm:$0xff]
  %v1140 = vld [vmem:[%s6 + $0xa8] sm:$0xff]
  %v1141 = vld [vmem:[%s6 + $0xb0] sm:$0xff]
  %v1142 = vld [vmem:[%s6 + $0xb8] sm:$0xff]
  %v1143 = vld [vmem:[%s6 + $0xc0] sm:$0xff]
  %v1144 = vld [vmem:[%s6 + $0xc8] sm:$0xff]
  %v1145 = vld [vmem:[%s6 + $0xd0] sm:$0xff]
  %v1146 = vld [vmem:[%s6 + $0xd8] sm:$0xff]
  %v1147 = vld [vmem:[%s6 + $0xe0] sm:$0xff]
  %v1148 = vld [vmem:[%s6 + $0xe8] sm:$0xff]
  %v1149 = vld [vmem:[%s6 + $0xf0] sm:$0xff]
  %v1150 = vld [vmem:[%s6 + $0xf8] sm:$0xff]
  %v1151 = vld [vmem:[%s6 + $0x100] sm:$0xff]
  %v1152 = vld [vmem:[%s6 + $0x108] sm:$0xff]
  %v1153 = vld [vmem:[%s6 + $0x110] sm:$0xff]
  %v1154 = vld [vmem:[%s6 + $0x118] sm:$0xff]
  %v1155 = vld [vmem:[%s6 + $0x120] sm:$0xff]
  %v1156 = vld [vmem:[%s6 + $0x128] sm:$0xff]
  %v1157 = vld [vmem:[%s6 + $0x130] sm:$0xff]
  %v1158 = vld [vmem:[%s6 + $0x138] sm:$0xff]
  %v1159 = vld [vmem:[%s6 + $0x140] sm:$0xff]
  %v1160 = vld [vmem:[%s6 + $0x148] sm:$0xff]
  %v1161 = vld [vmem:[%s6 + $0x150] sm:$0xff]
  %v1162 = vld [vmem:[%s6 + $0x158] sm:$0xff]
  %v1163 = vld [vmem:[%s6 + $0x160] sm:$0xff]
  %v1164 = vld [vmem:[%s6 + $0x168] sm:$0xff]
  %v1165 = vld [vmem:[%s6 + $0x170] sm:$0xff]
  %v1166 = vld [vmem:[%s6 + $0x178] sm:$0xff]
  %v1167 = vld [vmem:[%s6 + $0x180] sm:$0xff]
  %v1168 = vld [vmem:[%s6 + $0x188] sm:$0xff]
  %v1169 = vld [vmem:[%s6 + $0x190] sm:$0xff]
  %v1170 = vld [vmem:[%s6 + $0x198] sm:$0xff]
  %v1171 = vld [vmem:[%s6 + $0x1a0] sm:$0xff]
  %v1172 = vld [vmem:[%s6 + $0x1a8] sm:$0xff]
  %v1173 = vld [vmem:[%s6 + $0x1b0] sm:$0xff]
  %v1174 = vld [vmem:[%s6 + $0x1b8] sm:$0xff]
  %v1175 = vld [vmem:[%s6 + $0x1c0] sm:$0xff]
  %v1176 = vld [vmem:[%s6 + $0x1c8] sm:$0xff]
  %v1177 = vld [vmem:[%s6 + $0x1d0] sm:$0xff]
  %v1178 = vld [vmem:[%s6 + $0x1d8] sm:$0xff]
  %v1179 = vld [vmem:[%s6 + $0x1e0] sm:$0xff]
  %v1180 = vld [vmem:[%s6 + $0x1e8] sm:$0xff]
  %v1181 = vld [vmem:[%s6 + $0x1f0] sm:$0xff]
  %v1182 = vld [vmem:[%s6 + $0x1f8] sm:$0xff]
  %v1183 = vld [vmem:[%s6 + $0x200] sm:$0xff]
  %v1184 = vld [vmem:[%s6 + $0x208] sm:$0xff]
  %v1185 = vld [vmem:[%s6 + $0x210] sm:$0xff]
  %v1186 = vld [vmem:[%s6 + $0x218] sm:$0xff]
  %v1187 = vld [vmem:[%s6 + $0x220] sm:$0xff]
  %v1188 = vld [vmem:[%s6 + $0x228] sm:$0xff]
  %v1189 = vld [vmem:[%s6 + $0x230] sm:$0xff]
  %v1190 = vld [vmem:[%s6 + $0x238] sm:$0xff]
  %v1191 = vld [vmem:[%s6 + $0x240] sm:$0xff]
  %v1192 = vld [vmem:[%s6 + $0x248] sm:$0xff]
  %v1193 = vld [vmem:[%s6 + $0x250] sm:$0xff]
  %v1194 = vld [vmem:[%s6 + $0x258] sm:$0xff]
  %v1195 = vld [vmem:[%s6 + $0x260] sm:$0xff]
  %v1196 = vld [vmem:[%s6 + $0x268] sm:$0xff]
  %v1197 = vld [vmem:[%s6 + $0x270] sm:$0xff]
  %v1198 = vld [vmem:[%s6 + $0x278] sm:$0xff]
  %v1199 = vld [vmem:[%s6 + $0x280] sm:$0xff]
  %v1200 = vld [vmem:[%s6 + $0x288] sm:$0xff]
  %v1201 = vld [vmem:[%s6 + $0x290] sm:$0xff]
  %v1202 = vld [vmem:[%s6 + $0x298] sm:$0xff]
  %v1203 = vld [vmem:[%s6 + $0x2a0] sm:$0xff]
  %v1204 = vld [vmem:[%s6 + $0x2a8] sm:$0xff]
  %v1205 = vld [vmem:[%s6 + $0x2b0] sm:$0xff]
  %v1206 = vld [vmem:[%s6 + $0x2b8] sm:$0xff]
  %v1207 = vld [vmem:[%s6 + $0x2c0] sm:$0xff]
  %v1208 = vld [vmem:[%s6 + $0x2c8] sm:$0xff]
  %v1209 = vld [vmem:[%s6 + $0x2d0] sm:$0xff]
  %v1210 = vld [vmem:[%s6 + $0x2d8] sm:$0xff]
  %v1211 = vld [vmem:[%s6 + $0x2e0] sm:$0xff]
  %v1212 = vld [vmem:[%s6 + $0x2e8] sm:$0xff]
  %v1213 = vld [vmem:[%s6 + $0x2f0] sm:$0xff]
  %v1214 = vld [vmem:[%s6 + $0x2f8] sm:$0xff]
  %v1215 = vld [vmem:[%s6 + $0x300] sm:$0xff]
  %v1216 = vld [vmem:[%s6 + $0x308] sm:$0xff]
  %v1217 = vld [vmem:[%s6 + $0x310] sm:$0xff]
  %v1218 = vld [vmem:[%s6 + $0x318] sm:$0xff]
  %v1219 = vld [vmem:[%s6 + $0x320] sm:$0xff]
  %v1220 = vld [vmem:[%s6 + $0x328] sm:$0xff]
  %v1221 = vld [vmem:[%s6 + $0x330] sm:$0xff]
  %v1222 = vld [vmem:[%s6 + $0x338] sm:$0xff]
  %v1223 = vld [vmem:[%s6 + $0x340] sm:$0xff]
  %v1224 = vld [vmem:[%s6 + $0x348] sm:$0xff]
  %v1225 = vld [vmem:[%s6 + $0x350] sm:$0xff]
  %v1226 = vld [vmem:[%s6 + $0x358] sm:$0xff]
  %v1227 = vld [vmem:[%s6 + $0x360] sm:$0xff]
  %v1228 = vld [vmem:[%s6 + $0x368] sm:$0xff]
  %v1229 = vld [vmem:[%s6 + $0x370] sm:$0xff]
  %v1230 = vld [vmem:[%s6 + $0x378] sm:$0xff]
  %v1231 = vld [vmem:[%s6 + $0x380] sm:$0xff]
  %v1232 = vld [vmem:[%s6 + $0x388] sm:$0xff]
  %v1233 = vld [vmem:[%s6 + $0x390] sm:$0xff]
  %v1234 = vld [vmem:[%s6 + $0x398] sm:$0xff]
  %v1235 = vld [vmem:[%s6 + $0x3a0] sm:$0xff]
  %v1236 = vld [vmem:[%s6 + $0x3a8] sm:$0xff]
  %v1237 = vld [vmem:[%s6 + $0x3b0] sm:$0xff]
  %v1238 = vld [vmem:[%s6 + $0x3b8] sm:$0xff]
  %v1239 = vld [vmem:[%s6 + $0x3c0] sm:$0xff]
  %v1240 = vld [vmem:[%s6 + $0x3c8] sm:$0xff]
  %v1241 = vld [vmem:[%s6 + $0x3d0] sm:$0xff]
  %v1242 = vld [vmem:[%s6 + $0x3d8] sm:$0xff]
  %v1243 = vld [vmem:[%s6 + $0x3e0] sm:$0xff]
  %v1244 = vld [vmem:[%s6 + $0x3e8] sm:$0xff]
  %v1245 = vld [vmem:[%s6 + $0x3f0] sm:$0xff]
  %v1246 = vld [vmem:[%s6 + $0x3f8] sm:$0xff]
  %v1247 = vld [vmem:[%s6 + $0x400] sm:$0xff]
  %v1248 = vld [vmem:[%s6 + $0x408] sm:$0xff]
  %v1249 = vld [vmem:[%s6 + $0x410] sm:$0xff]
  %v1250 = vld [vmem:[%s6 + $0x418] sm:$0xff]
  %v1251 = vld [vmem:[%s6 + $0x420] sm:$0xff]
  %v1252 = vld [vmem:[%s6 + $0x428] sm:$0xff]
  %v1253 = vld [vmem:[%s6 + $0x430] sm:$0xff]
  %v1254 = vld [vmem:[%s6 + $0x438] sm:$0xff]
  %v1255 = vld [vmem:[%s6 + $0x440] sm:$0xff]
  %v1256 = vld [vmem:[%s6 + $0x448] sm:$0xff]
  %v1257 = vld [vmem:[%s6 + $0x450] sm:$0xff]
  %v1258 = vld [vmem:[%s6 + $0x458] sm:$0xff]
  %v1259 = vld [vmem:[%s6 + $0x460] sm:$0xff]
  %v1260 = vld [vmem:[%s6 + $0x468] sm:$0xff]
  %v1261 = vld [vmem:[%s6 + $0x470] sm:$0xff]
  %v1262 = vld [vmem:[%s6 + $0x478] sm:$0xff]
  %v1263 = vld [vmem:[%s6 + $0x480] sm:$0xff]
  %v1264 = vld [vmem:[%s6 + $0x488] sm:$0xff]
  %v1265 = vld [vmem:[%s6 + $0x490] sm:$0xff]
  %v1266 = vld [vmem:[%s6 + $0x498] sm:$0xff]
  %v1267 = vld [vmem:[%s6 + $0x4a0] sm:$0xff]
  %v1268 = vld [vmem:[%s6 + $0x4a8] sm:$0xff]
  %v1269 = vld [vmem:[%s6 + $0x4b0] sm:$0xff]
  %v1270 = vld [vmem:[%s6 + $0x4b8] sm:$0xff]
  %v1271 = vld [vmem:[%s6 + $0x4c0] sm:$0xff]
  %v1272 = vld [vmem:[%s6 + $0x4c8] sm:$0xff]
  %v1273 = vld [vmem:[%s6 + $0x4d0] sm:$0xff]
  %v1274 = vld [vmem:[%s6 + $0x4d8] sm:$0xff]
  %v1275 = vld [vmem:[%s6 + $0x4e0] sm:$0xff]
  %v1276 = vld [vmem:[%s6 + $0x4e8] sm:$0xff]
  %v1277 = vld [vmem:[%s6 + $0x4f0] sm:$0xff]
  %v1278 = vld [vmem:[%s6 + $0x4f8] sm:$0xff]
  %v1279 = vld [vmem:[%s6 + $0x500] sm:$0xff]
  %v1280 = vld [vmem:[%s6 + $0x508] sm:$0xff]
  %v1281 = vld [vmem:[%s6 + $0x510] sm:$0xff]
  %v1282 = vld [vmem:[%s6 + $0x518] sm:$0xff]
  %v1283 = vld [vmem:[%s6 + $0x520] sm:$0xff]
  %v1284 = vld [vmem:[%s6 + $0x528] sm:$0xff]
  %v1285 = vld [vmem:[%s6 + $0x530] sm:$0xff]
  %v1286 = vld [vmem:[%s6 + $0x538] sm:$0xff]
  %v1287 = vld [vmem:[%s6 + $0x540] sm:$0xff]
  %v1288 = vld [vmem:[%s6 + $0x548] sm:$0xff]
  %v1289 = vld [vmem:[%s6 + $0x550] sm:$0xff]
  %v1290 = vld [vmem:[%s6 + $0x558] sm:$0xff]
  %v1291 = vld [vmem:[%s6 + $0x560] sm:$0xff]
  %v1292 = vld [vmem:[%s6 + $0x568] sm:$0xff]
  %v1293 = vld [vmem:[%s6 + $0x570] sm:$0xff]
  %v1294 = vld [vmem:[%s6 + $0x578] sm:$0xff]
  %v1295 = vld [vmem:[%s6 + $0x580] sm:$0xff]
  %v1296 = vld [vmem:[%s6 + $0x588] sm:$0xff]
  %v1297 = vld [vmem:[%s6 + $0x590] sm:$0xff]
  %v1298 = vld [vmem:[%s6 + $0x598] sm:$0xff]
  %v1299 = vld [vmem:[%s6 + $0x5a0] sm:$0xff]
  %v1300 = vld [vmem:[%s6 + $0x5a8] sm:$0xff]
  %v1301 = vld [vmem:[%s6 + $0x5b0] sm:$0xff]
  %v1302 = vld [vmem:[%s6 + $0x5b8] sm:$0xff]
  %v1303 = vld [vmem:[%s6 + $0x5c0] sm:$0xff]
  %v1304 = vld [vmem:[%s6 + $0x5c8] sm:$0xff]
  %v1305 = vld [vmem:[%s6 + $0x5d0] sm:$0xff]
  %v1306 = vld [vmem:[%s6 + $0x5d8] sm:$0xff]
  %v1307 = vld [vmem:[%s6 + $0x5e0] sm:$0xff]
  %v1308 = vld [vmem:[%s6 + $0x5e8] sm:$0xff]
  %v1309 = vld [vmem:[%s6 + $0x5f0] sm:$0xff]
  %v1310 = vld [vmem:[%s6 + $0x5f8] sm:$0xff]
  %v1311 = vld [vmem:[%s6 + $0x600] sm:$0xff]
  %v1312 = vld [vmem:[%s6 + $0x608] sm:$0xff]
  %v1313 = vld [vmem:[%s6 + $0x610] sm:$0xff]
  %v1314 = vld [vmem:[%s6 + $0x618] sm:$0xff]
  %v1315 = vld [vmem:[%s6 + $0x620] sm:$0xff]
  %v1316 = vld [vmem:[%s6 + $0x628] sm:$0xff]
  %v1317 = vld [vmem:[%s6 + $0x630] sm:$0xff]
  %v1318 = vld [vmem:[%s6 + $0x638] sm:$0xff]
  %v1319 = vld [vmem:[%s6 + $0x640] sm:$0xff]
  %v1320 = vld [vmem:[%s6 + $0x648] sm:$0xff]
  %v1321 = vld [vmem:[%s6 + $0x650] sm:$0xff]
  %v1322 = vld [vmem:[%s6 + $0x658] sm:$0xff]
  %v1323 = vld [vmem:[%s6 + $0x660] sm:$0xff]
  %v1324 = vld [vmem:[%s6 + $0x668] sm:$0xff]
  %v1325 = vld [vmem:[%s6 + $0x670] sm:$0xff]
  %v1326 = vld [vmem:[%s6 + $0x678] sm:$0xff]
  %v1327 = vld [vmem:[%s6 + $0x680] sm:$0xff]
  %v1328 = vld [vmem:[%s6 + $0x688] sm:$0xff]
  %v1329 = vld [vmem:[%s6 + $0x690] sm:$0xff]
  %v1330 = vld [vmem:[%s6 + $0x698] sm:$0xff]
  %v1331 = vld [vmem:[%s6 + $0x6a0] sm:$0xff]
  %v1332 = vld [vmem:[%s6 + $0x6a8] sm:$0xff]
  %v1333 = vld [vmem:[%s6 + $0x6b0] sm:$0xff]
  %v1334 = vld [vmem:[%s6 + $0x6b8] sm:$0xff]
  %v1335 = vld [vmem:[%s6 + $0x6c0] sm:$0xff]
  %v1336 = vld [vmem:[%s6 + $0x6c8] sm:$0xff]
  %v1337 = vld [vmem:[%s6 + $0x6d0] sm:$0xff]
  %v1338 = vld [vmem:[%s6 + $0x6d8] sm:$0xff]
  %v1339 = vld [vmem:[%s6 + $0x6e0] sm:$0xff]
  %v1340 = vld [vmem:[%s6 + $0x6e8] sm:$0xff]
  %v1341 = vld [vmem:[%s6 + $0x6f0] sm:$0xff]
  %v1342 = vld [vmem:[%s6 + $0x6f8] sm:$0xff]
  %v1343 = vld [vmem:[%s6 + $0x700] sm:$0xff]
  %v1344 = vld [vmem:[%s6 + $0x708] sm:$0xff]
  %v1345 = vld [vmem:[%s6 + $0x710] sm:$0xff]
  %v1346 = vld [vmem:[%s6 + $0x718] sm:$0xff]
  %v1347 = vld [vmem:[%s6 + $0x720] sm:$0xff]
  %v1348 = vld [vmem:[%s6 + $0x728] sm:$0xff]
  %v1349 = vld [vmem:[%s6 + $0x730] sm:$0xff]
  %v1350 = vld [vmem:[%s6 + $0x738] sm:$0xff]
  %v1351 = vld [vmem:[%s6 + $0x740] sm:$0xff]
  %v1352 = vld [vmem:[%s6 + $0x748] sm:$0xff]
  %v1353 = vld [vmem:[%s6 + $0x750] sm:$0xff]
  %v1354 = vld [vmem:[%s6 + $0x758] sm:$0xff]
  %v1355 = vld [vmem:[%s6 + $0x760] sm:$0xff]
  %v1356 = vld [vmem:[%s6 + $0x768] sm:$0xff]
  %v1357 = vld [vmem:[%s6 + $0x770] sm:$0xff]
  %v1358 = vld [vmem:[%s6 + $0x778] sm:$0xff]
  %v1359 = vld [vmem:[%s6 + $0x780] sm:$0xff]
  %v1360 = vld [vmem:[%s6 + $0x788] sm:$0xff]
  %v1361 = vld [vmem:[%s6 + $0x790] sm:$0xff]
  %v1362 = vld [vmem:[%s6 + $0x798] sm:$0xff]
  %v1363 = vld [vmem:[%s6 + $0x7a0] sm:$0xff]
  %v1364 = vld [vmem:[%s6 + $0x7a8] sm:$0xff]
  %v1365 = vld [vmem:[%s6 + $0x7b0] sm:$0xff]
  %v1366 = vld [vmem:[%s6 + $0x7b8] sm:$0xff]
  %v1367 = vld [vmem:[%s6 + $0x7c0] sm:$0xff]
  %v1368 = vld [vmem:[%s6 + $0x7c8] sm:$0xff]
  %v1369 = vld [vmem:[%s6 + $0x7d0] sm:$0xff]
  %v1370 = vld [vmem:[%s6 + $0x7d8] sm:$0xff]
  %v1371 = vld [vmem:[%s6 + $0x7e0] sm:$0xff]
  %v1372 = vld [vmem:[%s6 + $0x7e8] sm:$0xff]
  %v1373 = vld [vmem:[%s6 + $0x7f0] sm:$0xff]
  %v1374 = vld [vmem:[%s6 + $0x7f8] sm:$0xff]
  %v1375 = vpack.c.bf16 %v965, %v961
  %v1376 = vpack.c.bf16 %v967, %v963
  %v1377 = vpack.c.bf16 %v985, %v981
  %v1378 = vpack.c.bf16 %v987, %v983
  %v1379 = vpack.c.bf16 %v1005, %v1001
  %v1380 = vpack.c.bf16 %v1007, %v1003
  %v1381 = vpack.c.bf16 %v1025, %v1021
  %v1382 = vpack.c.bf16 %v1027, %v1023
  %v1383 = vpack.c.bf16 %v1045, %v1041
  %v1384 = vpack.c.bf16 %v1047, %v1043
  %v1385 = vpack.c.bf16 %v1065, %v1061
  %v1386 = vpack.c.bf16 %v1067, %v1063
  %v1387 = vpack.c.bf16 %v1085, %v1081
  %v1388 = vpack.c.bf16 %v1087, %v1083
  %v1389 = vpack.c.bf16 %v1105, %v1101
  %v1390 = vpack.c.bf16 %v1107, %v1103
  %v1391 = vpack.c.bf16 %v975, %v971
  %v1392 = vpack.c.bf16 %v977, %v973
  %v1393 = vpack.c.bf16 %v995, %v991
  %v1394 = vpack.c.bf16 %v997, %v993
  %v1395 = vpack.c.bf16 %v1015, %v1011
  %v1396 = vpack.c.bf16 %v1017, %v1013
  %v1397 = vpack.c.bf16 %v1035, %v1031
  %v1398 = vpack.c.bf16 %v1037, %v1033
  %v1399 = vpack.c.bf16 %v1055, %v1051
  %v1400 = vpack.c.bf16 %v1057, %v1053
  %v1401 = vpack.c.bf16 %v1075, %v1071
  %v1402 = vpack.c.bf16 %v1077, %v1073
  %v1403 = vpack.c.bf16 %v1095, %v1091
  %v1404 = vpack.c.bf16 %v1097, %v1093
  %v1405 = vpack.c.bf16 %v1115, %v1111
  %v1406 = vpack.c.bf16 %v1117, %v1113
  %v1407 = vpack.c.bf16 %v1120, %v1119
  %v1408 = vpack.c.bf16 %v1122, %v1121
  %v1409 = vpack.c.bf16 %v1124, %v1123
  %v1410 = vpack.c.bf16 %v1126, %v1125
  %v1411 = vpack.c.bf16 %v1128, %v1127
  %v1412 = vpack.c.bf16 %v1130, %v1129
  %v1413 = vpack.c.bf16 %v1132, %v1131
  %v1414 = vpack.c.bf16 %v1134, %v1133
  %v1415 = vpack.c.bf16 %v1136, %v1135
  %v1416 = vpack.c.bf16 %v1138, %v1137
  %v1417 = vpack.c.bf16 %v1140, %v1139
  %v1418 = vpack.c.bf16 %v1142, %v1141
  %v1419 = vpack.c.bf16 %v1144, %v1143
  %v1420 = vpack.c.bf16 %v1146, %v1145
  %v1421 = vpack.c.bf16 %v1148, %v1147
  %v1422 = vpack.c.bf16 %v1150, %v1149
  %v1423 = vpack.c.bf16 %v1152, %v1151
  %v1424 = vpack.c.bf16 %v1154, %v1153
  %v1425 = vpack.c.bf16 %v1156, %v1155
  %v1426 = vpack.c.bf16 %v1158, %v1157
  %v1427 = vpack.c.bf16 %v1160, %v1159
  %v1428 = vpack.c.bf16 %v1162, %v1161
  %v1429 = vpack.c.bf16 %v1164, %v1163
  %v1430 = vpack.c.bf16 %v1166, %v1165
  %v1431 = vpack.c.bf16 %v1168, %v1167
  %v1432 = vpack.c.bf16 %v1170, %v1169
  %v1433 = vpack.c.bf16 %v1172, %v1171
  %v1434 = vpack.c.bf16 %v1174, %v1173
  %v1435 = vpack.c.bf16 %v1176, %v1175
  %v1436 = vpack.c.bf16 %v1178, %v1177
  %v1437 = vpack.c.bf16 %v1180, %v1179
  %v1438 = vpack.c.bf16 %v1182, %v1181
  %v1439 = vpack.c.bf16 %v1184, %v1183
  %v1440 = vpack.c.bf16 %v1186, %v1185
  %v1441 = vpack.c.bf16 %v1188, %v1187
  %v1442 = vpack.c.bf16 %v1190, %v1189
  %v1443 = vpack.c.bf16 %v1192, %v1191
  %v1444 = vpack.c.bf16 %v1194, %v1193
  %v1445 = vpack.c.bf16 %v1196, %v1195
  %v1446 = vpack.c.bf16 %v1198, %v1197
  %v1447 = vpack.c.bf16 %v1200, %v1199
  %v1448 = vpack.c.bf16 %v1202, %v1201
  %v1449 = vpack.c.bf16 %v1204, %v1203
  %v1450 = vpack.c.bf16 %v1206, %v1205
  %v1451 = vpack.c.bf16 %v1208, %v1207
  %v1452 = vpack.c.bf16 %v1210, %v1209
  %v1453 = vpack.c.bf16 %v1212, %v1211
  %v1454 = vpack.c.bf16 %v1214, %v1213
  %v1455 = vpack.c.bf16 %v1216, %v1215
  %v1456 = vpack.c.bf16 %v1218, %v1217
  %v1457 = vpack.c.bf16 %v1220, %v1219
  %v1458 = vpack.c.bf16 %v1222, %v1221
  %v1459 = vpack.c.bf16 %v1224, %v1223
  %v1460 = vpack.c.bf16 %v1226, %v1225
  %v1461 = vpack.c.bf16 %v1228, %v1227
  %v1462 = vpack.c.bf16 %v1230, %v1229
  %v1463 = vpack.c.bf16 %v1232, %v1231
  %v1464 = vpack.c.bf16 %v1234, %v1233
  %v1465 = vpack.c.bf16 %v1236, %v1235
  %v1466 = vpack.c.bf16 %v1238, %v1237
  %v1467 = vpack.c.bf16 %v1240, %v1239
  %v1468 = vpack.c.bf16 %v1242, %v1241
  %v1469 = vpack.c.bf16 %v1244, %v1243
  %v1470 = vpack.c.bf16 %v1246, %v1245
  %v1471 = vpack.c.bf16 %v1248, %v1247
  %v1472 = vpack.c.bf16 %v1250, %v1249
  %v1473 = vpack.c.bf16 %v1252, %v1251
  %v1474 = vpack.c.bf16 %v1254, %v1253
  %v1475 = vpack.c.bf16 %v1256, %v1255
  %v1476 = vpack.c.bf16 %v1258, %v1257
  %v1477 = vpack.c.bf16 %v1260, %v1259
  %v1478 = vpack.c.bf16 %v1262, %v1261
  %v1479 = vpack.c.bf16 %v1264, %v1263
  %v1480 = vpack.c.bf16 %v1266, %v1265
  %v1481 = vpack.c.bf16 %v1268, %v1267
  %v1482 = vpack.c.bf16 %v1270, %v1269
  %v1483 = vpack.c.bf16 %v1272, %v1271
  %v1484 = vpack.c.bf16 %v1274, %v1273
  %v1485 = vpack.c.bf16 %v1276, %v1275
  %v1486 = vpack.c.bf16 %v1278, %v1277
  %v1487 = vpack.c.bf16 %v1280, %v1279
  %v1488 = vpack.c.bf16 %v1282, %v1281
  %v1489 = vpack.c.bf16 %v1284, %v1283
  %v1490 = vpack.c.bf16 %v1286, %v1285
  %v1491 = vpack.c.bf16 %v1288, %v1287
  %v1492 = vpack.c.bf16 %v1290, %v1289
  %v1493 = vpack.c.bf16 %v1292, %v1291
  %v1494 = vpack.c.bf16 %v1294, %v1293
  %v1495 = vpack.c.bf16 %v1296, %v1295
  %v1496 = vpack.c.bf16 %v1298, %v1297
  %v1497 = vpack.c.bf16 %v1300, %v1299
  %v1498 = vpack.c.bf16 %v1302, %v1301
  %v1499 = vpack.c.bf16 %v1304, %v1303
  %v1500 = vpack.c.bf16 %v1306, %v1305
  %v1501 = vpack.c.bf16 %v1308, %v1307
  %v1502 = vpack.c.bf16 %v1310, %v1309
  %v1503 = vpack.c.bf16 %v1312, %v1311
  %v1504 = vpack.c.bf16 %v1314, %v1313
  %v1505 = vpack.c.bf16 %v1316, %v1315
  %v1506 = vpack.c.bf16 %v1318, %v1317
  %v1507 = vpack.c.bf16 %v1320, %v1319
  %v1508 = vpack.c.bf16 %v1322, %v1321
  %v1509 = vpack.c.bf16 %v1324, %v1323
  %v1510 = vpack.c.bf16 %v1326, %v1325
  %v1511 = vpack.c.bf16 %v1328, %v1327
  %v1512 = vpack.c.bf16 %v1330, %v1329
  %v1513 = vpack.c.bf16 %v1332, %v1331
  %v1514 = vpack.c.bf16 %v1334, %v1333
  %v1515 = vpack.c.bf16 %v1336, %v1335
  %v1516 = vpack.c.bf16 %v1338, %v1337
  %v1517 = vpack.c.bf16 %v1340, %v1339
  %v1518 = vpack.c.bf16 %v1342, %v1341
  %v1519 = vpack.c.bf16 %v1344, %v1343
  %v1520 = vpack.c.bf16 %v1346, %v1345
  %v1521 = vpack.c.bf16 %v1348, %v1347
  %v1522 = vpack.c.bf16 %v1350, %v1349
  %v1523 = vpack.c.bf16 %v1352, %v1351
  %v1524 = vpack.c.bf16 %v1354, %v1353
  %v1525 = vpack.c.bf16 %v1356, %v1355
  %v1526 = vpack.c.bf16 %v1358, %v1357
  %v1527 = vpack.c.bf16 %v1360, %v1359
  %v1528 = vpack.c.bf16 %v1362, %v1361
  %v1529 = vpack.c.bf16 %v1364, %v1363
  %v1530 = vpack.c.bf16 %v1366, %v1365
  %v1531 = vpack.c.bf16 %v1368, %v1367
  %v1532 = vpack.c.bf16 %v1370, %v1369
  %v1533 = vpack.c.bf16 %v1372, %v1371
  %v1534 = vpack.c.bf16 %v1374, %v1373
  %v1535 = vld [vmem:[%s7] sm:$0x1]
  %v1537 = vlaneseq
  %v1538 = vshrl.u32 %v1537, 7
  %v1539 = vsub.s32 0, %v1538
  %v1540 = vrot.slane %v1535, %v1539
  %1542 = vmatprep.subr.bf16.mxu0 0
  %1543 = vmatpush1.bf16.msra.mxu0 %v1407
  %1544 = vmatprep.subr.bf16.mxu0 0
  %1545 = vmatpush1.bf16.msra.mxu0 %v1408
  %1546 = vmatprep.subr.bf16.mxu0 0
  %1547 = vmatpush1.bf16.msra.mxu0 %v1409
  %1548 = vmatprep.subr.bf16.mxu0 0
  %1549 = vmatpush1.bf16.msra.mxu0 %v1410
  %1550 = vmatprep.subr.bf16.mxu0 0
  %1551 = vmatpush1.bf16.msra.mxu0 %v1411
  %1552 = vmatprep.subr.bf16.mxu0 0
  %1553 = vmatpush1.bf16.msra.mxu0 %v1412
  %1554 = vmatprep.subr.bf16.mxu0 0
  %1555 = vmatpush1.bf16.msra.mxu0 %v1413
  %1556 = vmatprep.subr.bf16.mxu0 0
  %1557 = vmatpush1.bf16.msra.mxu0 %v1414
  %1558 = vmatprep.subr.bf16.mxu0 0
  %1559 = vmatpush1.bf16.msra.mxu0 %v1415
  %1560 = vmatprep.subr.bf16.mxu0 0
  %1561 = vmatpush1.bf16.msra.mxu0 %v1416
  %1562 = vmatprep.subr.bf16.mxu0 0
  %1563 = vmatpush1.bf16.msra.mxu0 %v1417
  %1564 = vmatprep.subr.bf16.mxu0 0
  %1565 = vmatpush1.bf16.msra.mxu0 %v1418
  %1566 = vmatprep.subr.bf16.mxu0 0
  %1567 = vmatpush1.bf16.msra.mxu0 %v1419
  %1568 = vmatprep.subr.bf16.mxu0 0
  %1569 = vmatpush1.bf16.msra.mxu0 %v1420
  %1570 = vmatprep.subr.bf16.mxu0 0
  %1571 = vmatpush1.bf16.msra.mxu0 %v1421
  %1572 = vmatprep.subr.bf16.mxu0 0
  %1573 = vmatpush1.bf16.msra.mxu0 %v1422
  %1574 = vmatprep.mubr.bf16.mxu0 %v1376
  %1575 = vmatmul.mubr.bf16.gmra.mrb[0].mxu0 %v1375
  %v1576 = vpop.f32.mrb[0].mxu0
  %v1577 = vadd.f32 %v1540, %v1576
  %v1578 = vpop.f32.mrb[0].mxu0
  %v1579 = vpop.f32.mrb[0].mxu0
  %v1580 = vadd.f32 %v1540, %v1579
  %v1581 = vpop.f32.mrb[0].mxu0
  %1582 = vmatprep.mubr.bf16.mxu0 %v1392
  %1583 = vmatmul.mubr.bf16.gmra.mrb[0].mxu0 %v1391
  %v1584 = vpop.f32.mrb[0].mxu0
  %v1585 = vadd.f32 %v1540, %v1584
  %v1586 = vpop.f32.mrb[0].mxu0
  %v1587 = vpop.f32.mrb[0].mxu0
  %v1588 = vadd.f32 %v1540, %v1587
  %v1589 = vpop.f32.mrb[0].mxu0
  %1590 = vdwg.mxu0
  %1591 = vmatprep.subr.bf16.mxu0 0
  %1592 = vmatpush1.bf16.msra.mxu0 %v1423
  %1593 = vmatprep.subr.bf16.mxu0 0
  %1594 = vmatpush1.bf16.msra.mxu0 %v1424
  %1595 = vmatprep.subr.bf16.mxu0 0
  %1596 = vmatpush1.bf16.msra.mxu0 %v1425
  %1597 = vmatprep.subr.bf16.mxu0 0
  %1598 = vmatpush1.bf16.msra.mxu0 %v1426
  %1599 = vmatprep.subr.bf16.mxu0 0
  %1600 = vmatpush1.bf16.msra.mxu0 %v1427
  %1601 = vmatprep.subr.bf16.mxu0 0
  %1602 = vmatpush1.bf16.msra.mxu0 %v1428
  %1603 = vmatprep.subr.bf16.mxu0 0
  %1604 = vmatpush1.bf16.msra.mxu0 %v1429
  %1605 = vmatprep.subr.bf16.mxu0 0
  %1606 = vmatpush1.bf16.msra.mxu0 %v1430
  %1607 = vmatprep.subr.bf16.mxu0 0
  %1608 = vmatpush1.bf16.msra.mxu0 %v1431
  %1609 = vmatprep.subr.bf16.mxu0 0
  %1610 = vmatpush1.bf16.msra.mxu0 %v1432
  %1611 = vmatprep.subr.bf16.mxu0 0
  %1612 = vmatpush1.bf16.msra.mxu0 %v1433
  %1613 = vmatprep.subr.bf16.mxu0 0
  %1614 = vmatpush1.bf16.msra.mxu0 %v1434
  %1615 = vmatprep.subr.bf16.mxu0 0
  %1616 = vmatpush1.bf16.msra.mxu0 %v1435
  %1617 = vmatprep.subr.bf16.mxu0 0
  %1618 = vmatpush1.bf16.msra.mxu0 %v1436
  %1619 = vmatprep.subr.bf16.mxu0 0
  %1620 = vmatpush1.bf16.msra.mxu0 %v1437
  %1621 = vmatprep.subr.bf16.mxu0 0
  %1622 = vmatpush1.bf16.msra.mxu0 %v1438
  %1623 = vmatprep.mubr.bf16.mxu0 %v1378
  %1624 = vmatmul.mubr.bf16.gmra.mrb[0].mxu0 %v1377
  %v1625 = vpop.f32.mrb[0].mxu0
  %v1626 = vadd.f32 %v1577, %v1625
  %v1627 = vpop.f32.mrb[0].mxu0
  %v1628 = vpop.f32.mrb[0].mxu0
  %v1629 = vadd.f32 %v1580, %v1628
  %v1630 = vpop.f32.mrb[0].mxu0
  %1631 = vmatprep.mubr.bf16.mxu0 %v1394
  %1632 = vmatmul.mubr.bf16.gmra.mrb[0].mxu0 %v1393
  %v1633 = vpop.f32.mrb[0].mxu0
  %v1634 = vadd.f32 %v1585, %v1633
  %v1635 = vpop.f32.mrb[0].mxu0
  %v1636 = vpop.f32.mrb[0].mxu0
  %v1637 = vadd.f32 %v1588, %v1636
  %v1638 = vpop.f32.mrb[0].mxu0
  %1639 = vdwg.mxu0
  %1640 = vmatprep.subr.bf16.mxu0 0
  %1641 = vmatpush1.bf16.msra.mxu0 %v1439
  %1642 = vmatprep.subr.bf16.mxu0 0
  %1643 = vmatpush1.bf16.msra.mxu0 %v1440
  %1644 = vmatprep.subr.bf16.mxu0 0
  %1645 = vmatpush1.bf16.msra.mxu0 %v1441
  %1646 = vmatprep.subr.bf16.mxu0 0
  %1647 = vmatpush1.bf16.msra.mxu0 %v1442
  %1648 = vmatprep.subr.bf16.mxu0 0
  %1649 = vmatpush1.bf16.msra.mxu0 %v1443
  %1650 = vmatprep.subr.bf16.mxu0 0
  %1651 = vmatpush1.bf16.msra.mxu0 %v1444
  %1652 = vmatprep.subr.bf16.mxu0 0
  %1653 = vmatpush1.bf16.msra.mxu0 %v1445
  %1654 = vmatprep.subr.bf16.mxu0 0
  %1655 = vmatpush1.bf16.msra.mxu0 %v1446
  %1656 = vmatprep.subr.bf16.mxu0 0
  %1657 = vmatpush1.bf16.msra.mxu0 %v1447
  %1658 = vmatprep.subr.bf16.mxu0 0
  %1659 = vmatpush1.bf16.msra.mxu0 %v1448
  %1660 = vmatprep.subr.bf16.mxu0 0
  %1661 = vmatpush1.bf16.msra.mxu0 %v1449
  %1662 = vmatprep.subr.bf16.mxu0 0
  %1663 = vmatpush1.bf16.msra.mxu0 %v1450
  %1664 = vmatprep.subr.bf16.mxu0 0
  %1665 = vmatpush1.bf16.msra.mxu0 %v1451
  %1666 = vmatprep.subr.bf16.mxu0 0
  %1667 = vmatpush1.bf16.msra.mxu0 %v1452
  %1668 = vmatprep.subr.bf16.mxu0 0
  %1669 = vmatpush1.bf16.msra.mxu0 %v1453
  %1670 = vmatprep.subr.bf16.mxu0 0
  %1671 = vmatpush1.bf16.msra.mxu0 %v1454
  %1672 = vmatprep.mubr.bf16.mxu0 %v1380
  %1673 = vmatmul.mubr.bf16.gmra.mrb[0].mxu0 %v1379
  %v1674 = vpop.f32.mrb[0].mxu0
  %v1675 = vadd.f32 %v1626, %v1674
  %v1676 = vpop.f32.mrb[0].mxu0
  %v1677 = vpop.f32.mrb[0].mxu0
  %v1678 = vadd.f32 %v1629, %v1677
  %v1679 = vpop.f32.mrb[0].mxu0
  %1680 = vmatprep.mubr.bf16.mxu0 %v1396
  %1681 = vmatmul.mubr.bf16.gmra.mrb[0].mxu0 %v1395
  %v1682 = vpop.f32.mrb[0].mxu0
  %v1683 = vadd.f32 %v1634, %v1682
  %v1684 = vpop.f32.mrb[0].mxu0
  %v1685 = vpop.f32.mrb[0].mxu0
  %v1686 = vadd.f32 %v1637, %v1685
  %v1687 = vpop.f32.mrb[0].mxu0
  %1688 = vdwg.mxu0
  %1689 = vmatprep.subr.bf16.mxu0 0
  %1690 = vmatpush1.bf16.msra.mxu0 %v1455
  %1691 = vmatprep.subr.bf16.mxu0 0
  %1692 = vmatpush1.bf16.msra.mxu0 %v1456
  %1693 = vmatprep.subr.bf16.mxu0 0
  %1694 = vmatpush1.bf16.msra.mxu0 %v1457
  %1695 = vmatprep.subr.bf16.mxu0 0
  %1696 = vmatpush1.bf16.msra.mxu0 %v1458
  %1697 = vmatprep.subr.bf16.mxu0 0
  %1698 = vmatpush1.bf16.msra.mxu0 %v1459
  %1699 = vmatprep.subr.bf16.mxu0 0
  %1700 = vmatpush1.bf16.msra.mxu0 %v1460
  %1701 = vmatprep.subr.bf16.mxu0 0
  %1702 = vmatpush1.bf16.msra.mxu0 %v1461
  %1703 = vmatprep.subr.bf16.mxu0 0
  %1704 = vmatpush1.bf16.msra.mxu0 %v1462
  %1705 = vmatprep.subr.bf16.mxu0 0
  %1706 = vmatpush1.bf16.msra.mxu0 %v1463
  %1707 = vmatprep.subr.bf16.mxu0 0
  %1708 = vmatpush1.bf16.msra.mxu0 %v1464
  %1709 = vmatprep.subr.bf16.mxu0 0
  %1710 = vmatpush1.bf16.msra.mxu0 %v1465
  %1711 = vmatprep.subr.bf16.mxu0 0
  %1712 = vmatpush1.bf16.msra.mxu0 %v1466
  %1713 = vmatprep.subr.bf16.mxu0 0
  %1714 = vmatpush1.bf16.msra.mxu0 %v1467
  %1715 = vmatprep.subr.bf16.mxu0 0
  %1716 = vmatpush1.bf16.msra.mxu0 %v1468
  %1717 = vmatprep.subr.bf16.mxu0 0
  %1718 = vmatpush1.bf16.msra.mxu0 %v1469
  %1719 = vmatprep.subr.bf16.mxu0 0
  %1720 = vmatpush1.bf16.msra.mxu0 %v1470
  %1721 = vmatprep.mubr.bf16.mxu0 %v1382
  %1722 = vmatmul.mubr.bf16.gmra.mrb[0].mxu0 %v1381
  %v1723 = vpop.f32.mrb[0].mxu0
  %v1724 = vadd.f32 %v1675, %v1723
  %v1725 = vpop.f32.mrb[0].mxu0
  %v1726 = vpop.f32.mrb[0].mxu0
  %v1727 = vadd.f32 %v1678, %v1726
  %v1728 = vpop.f32.mrb[0].mxu0
  %1729 = vmatprep.mubr.bf16.mxu0 %v1398
  %1730 = vmatmul.mubr.bf16.gmra.mrb[0].mxu0 %v1397
  %v1731 = vpop.f32.mrb[0].mxu0
  %v1732 = vadd.f32 %v1683, %v1731
  %v1733 = vpop.f32.mrb[0].mxu0
  %v1734 = vpop.f32.mrb[0].mxu0
  %v1735 = vadd.f32 %v1686, %v1734
  %v1736 = vpop.f32.mrb[0].mxu0
  %1737 = vdwg.mxu0
  %1738 = vmatprep.subr.bf16.mxu0 0
  %1739 = vmatpush1.bf16.msra.mxu0 %v1471
  %1740 = vmatprep.subr.bf16.mxu0 0
  %1741 = vmatpush1.bf16.msra.mxu0 %v1472
  %1742 = vmatprep.subr.bf16.mxu0 0
  %1743 = vmatpush1.bf16.msra.mxu0 %v1473
  %1744 = vmatprep.subr.bf16.mxu0 0
  %1745 = vmatpush1.bf16.msra.mxu0 %v1474
  %1746 = vmatprep.subr.bf16.mxu0 0
  %1747 = vmatpush1.bf16.msra.mxu0 %v1475
  %1748 = vmatprep.subr.bf16.mxu0 0
  %1749 = vmatpush1.bf16.msra.mxu0 %v1476
  %1750 = vmatprep.subr.bf16.mxu0 0
  %1751 = vmatpush1.bf16.msra.mxu0 %v1477
  %1752 = vmatprep.subr.bf16.mxu0 0
  %1753 = vmatpush1.bf16.msra.mxu0 %v1478
  %1754 = vmatprep.subr.bf16.mxu0 0
  %1755 = vmatpush1.bf16.msra.mxu0 %v1479
  %1756 = vmatprep.subr.bf16.mxu0 0
  %1757 = vmatpush1.bf16.msra.mxu0 %v1480
  %1758 = vmatprep.subr.bf16.mxu0 0
  %1759 = vmatpush1.bf16.msra.mxu0 %v1481
  %1760 = vmatprep.subr.bf16.mxu0 0
  %1761 = vmatpush1.bf16.msra.mxu0 %v1482
  %1762 = vmatprep.subr.bf16.mxu0 0
  %1763 = vmatpush1.bf16.msra.mxu0 %v1483
  %1764 = vmatprep.subr.bf16.mxu0 0
  %1765 = vmatpush1.bf16.msra.mxu0 %v1484
  %1766 = vmatprep.subr.bf16.mxu0 0
  %1767 = vmatpush1.bf16.msra.mxu0 %v1485
  %1768 = vmatprep.subr.bf16.mxu0 0
  %1769 = vmatpush1.bf16.msra.mxu0 %v1486
  %1770 = vmatprep.mubr.bf16.mxu0 %v1384
  %1771 = vmatmul.mubr.bf16.gmra.mrb[0].mxu0 %v1383
  %v1772 = vpop.f32.mrb[0].mxu0
  %v1773 = vadd.f32 %v1724, %v1772
  %v1774 = vpop.f32.mrb[0].mxu0
  %v1775 = vpop.f32.mrb[0].mxu0
  %v1776 = vadd.f32 %v1727, %v1775
  %v1777 = vpop.f32.mrb[0].mxu0
  %1778 = vmatprep.mubr.bf16.mxu0 %v1400
  %1779 = vmatmul.mubr.bf16.gmra.mrb[0].mxu0 %v1399
  %v1780 = vpop.f32.mrb[0].mxu0
  %v1781 = vadd.f32 %v1732, %v1780
  %v1782 = vpop.f32.mrb[0].mxu0
  %v1783 = vpop.f32.mrb[0].mxu0
  %v1784 = vadd.f32 %v1735, %v1783
  %v1785 = vpop.f32.mrb[0].mxu0
  %1786 = vdwg.mxu0
  %1787 = vmatprep.subr.bf16.mxu0 0
  %1788 = vmatpush1.bf16.msra.mxu0 %v1487
  %1789 = vmatprep.subr.bf16.mxu0 0
  %1790 = vmatpush1.bf16.msra.mxu0 %v1488
  %1791 = vmatprep.subr.bf16.mxu0 0
  %1792 = vmatpush1.bf16.msra.mxu0 %v1489
  %1793 = vmatprep.subr.bf16.mxu0 0
  %1794 = vmatpush1.bf16.msra.mxu0 %v1490
  %1795 = vmatprep.subr.bf16.mxu0 0
  %1796 = vmatpush1.bf16.msra.mxu0 %v1491
  %1797 = vmatprep.subr.bf16.mxu0 0
  %1798 = vmatpush1.bf16.msra.mxu0 %v1492
  %1799 = vmatprep.subr.bf16.mxu0 0
  %1800 = vmatpush1.bf16.msra.mxu0 %v1493
  %1801 = vmatprep.subr.bf16.mxu0 0
  %1802 = vmatpush1.bf16.msra.mxu0 %v1494
  %1803 = vmatprep.subr.bf16.mxu0 0
  %1804 = vmatpush1.bf16.msra.mxu0 %v1495
  %1805 = vmatprep.subr.bf16.mxu0 0
  %1806 = vmatpush1.bf16.msra.mxu0 %v1496
  %1807 = vmatprep.subr.bf16.mxu0 0
  %1808 = vmatpush1.bf16.msra.mxu0 %v1497
  %1809 = vmatprep.subr.bf16.mxu0 0
  %1810 = vmatpush1.bf16.msra.mxu0 %v1498
  %1811 = vmatprep.subr.bf16.mxu0 0
  %1812 = vmatpush1.bf16.msra.mxu0 %v1499
  %1813 = vmatprep.subr.bf16.mxu0 0
  %1814 = vmatpush1.bf16.msra.mxu0 %v1500
  %1815 = vmatprep.subr.bf16.mxu0 0
  %1816 = vmatpush1.bf16.msra.mxu0 %v1501
  %1817 = vmatprep.subr.bf16.mxu0 0
  %1818 = vmatpush1.bf16.msra.mxu0 %v1502
  %1819 = vmatprep.mubr.bf16.mxu0 %v1386
  %1820 = vmatmul.mubr.bf16.gmra.mrb[0].mxu0 %v1385
  %v1821 = vpop.f32.mrb[0].mxu0
  %v1822 = vadd.f32 %v1773, %v1821
  %v1823 = vpop.f32.mrb[0].mxu0
  %v1824 = vpop.f32.mrb[0].mxu0
  %v1825 = vadd.f32 %v1776, %v1824
  %v1826 = vpop.f32.mrb[0].mxu0
  %1827 = vmatprep.mubr.bf16.mxu0 %v1402
  %1828 = vmatmul.mubr.bf16.gmra.mrb[0].mxu0 %v1401
  %v1829 = vpop.f32.mrb[0].mxu0
  %v1830 = vadd.f32 %v1781, %v1829
  %v1831 = vpop.f32.mrb[0].mxu0
  %v1832 = vpop.f32.mrb[0].mxu0
  %v1833 = vadd.f32 %v1784, %v1832
  %v1834 = vpop.f32.mrb[0].mxu0
  %1835 = vdwg.mxu0
  %1836 = vmatprep.subr.bf16.mxu0 0
  %1837 = vmatpush1.bf16.msra.mxu0 %v1503
  %1838 = vmatprep.subr.bf16.mxu0 0
  %1839 = vmatpush1.bf16.msra.mxu0 %v1504
  %1840 = vmatprep.subr.bf16.mxu0 0
  %1841 = vmatpush1.bf16.msra.mxu0 %v1505
  %1842 = vmatprep.subr.bf16.mxu0 0
  %1843 = vmatpush1.bf16.msra.mxu0 %v1506
  %1844 = vmatprep.subr.bf16.mxu0 0
  %1845 = vmatpush1.bf16.msra.mxu0 %v1507
  %1846 = vmatprep.subr.bf16.mxu0 0
  %1847 = vmatpush1.bf16.msra.mxu0 %v1508
  %1848 = vmatprep.subr.bf16.mxu0 0
  %1849 = vmatpush1.bf16.msra.mxu0 %v1509
  %1850 = vmatprep.subr.bf16.mxu0 0
  %1851 = vmatpush1.bf16.msra.mxu0 %v1510
  %1852 = vmatprep.subr.bf16.mxu0 0
  %1853 = vmatpush1.bf16.msra.mxu0 %v1511
  %1854 = vmatprep.subr.bf16.mxu0 0
  %1855 = vmatpush1.bf16.msra.mxu0 %v1512
  %1856 = vmatprep.subr.bf16.mxu0 0
  %1857 = vmatpush1.bf16.msra.mxu0 %v1513
  %1858 = vmatprep.subr.bf16.mxu0 0
  %1859 = vmatpush1.bf16.msra.mxu0 %v1514
  %1860 = vmatprep.subr.bf16.mxu0 0
  %1861 = vmatpush1.bf16.msra.mxu0 %v1515
  %1862 = vmatprep.subr.bf16.mxu0 0
  %1863 = vmatpush1.bf16.msra.mxu0 %v1516
  %1864 = vmatprep.subr.bf16.mxu0 0
  %1865 = vmatpush1.bf16.msra.mxu0 %v1517
  %1866 = vmatprep.subr.bf16.mxu0 0
  %1867 = vmatpush1.bf16.msra.mxu0 %v1518
  %1868 = vmatprep.mubr.bf16.mxu0 %v1388
  %1869 = vmatmul.mubr.bf16.gmra.mrb[0].mxu0 %v1387
  %v1870 = vpop.f32.mrb[0].mxu0
  %v1871 = vadd.f32 %v1822, %v1870
  %v1872 = vpop.f32.mrb[0].mxu0
  %v1873 = vpop.f32.mrb[0].mxu0
  %v1874 = vadd.f32 %v1825, %v1873
  %v1875 = vpop.f32.mrb[0].mxu0
  %1876 = vmatprep.mubr.bf16.mxu0 %v1404
  %1877 = vmatmul.mubr.bf16.gmra.mrb[0].mxu0 %v1403
  %v1878 = vpop.f32.mrb[0].mxu0
  %v1879 = vadd.f32 %v1830, %v1878
  %v1880 = vpop.f32.mrb[0].mxu0
  %v1881 = vpop.f32.mrb[0].mxu0
  %v1882 = vadd.f32 %v1833, %v1881
  %v1883 = vpop.f32.mrb[0].mxu0
  %1884 = vdwg.mxu0
  %1885 = vmatprep.subr.bf16.mxu0 0
  %1886 = vmatpush1.bf16.msra.mxu0 %v1519
  %1887 = vmatprep.subr.bf16.mxu0 0
  %1888 = vmatpush1.bf16.msra.mxu0 %v1520
  %1889 = vmatprep.subr.bf16.mxu0 0
  %1890 = vmatpush1.bf16.msra.mxu0 %v1521
  %1891 = vmatprep.subr.bf16.mxu0 0
  %1892 = vmatpush1.bf16.msra.mxu0 %v1522
  %1893 = vmatprep.subr.bf16.mxu0 0
  %1894 = vmatpush1.bf16.msra.mxu0 %v1523
  %1895 = vmatprep.subr.bf16.mxu0 0
  %1896 = vmatpush1.bf16.msra.mxu0 %v1524
  %1897 = vmatprep.subr.bf16.mxu0 0
  %1898 = vmatpush1.bf16.msra.mxu0 %v1525
  %1899 = vmatprep.subr.bf16.mxu0 0
  %1900 = vmatpush1.bf16.msra.mxu0 %v1526
  %1901 = vmatprep.subr.bf16.mxu0 0
  %1902 = vmatpush1.bf16.msra.mxu0 %v1527
  %1903 = vmatprep.subr.bf16.mxu0 0
  %1904 = vmatpush1.bf16.msra.mxu0 %v1528
  %1905 = vmatprep.subr.bf16.mxu0 0
  %1906 = vmatpush1.bf16.msra.mxu0 %v1529
  %1907 = vmatprep.subr.bf16.mxu0 0
  %1908 = vmatpush1.bf16.msra.mxu0 %v1530
  %1909 = vmatprep.subr.bf16.mxu0 0
  %1910 = vmatpush1.bf16.msra.mxu0 %v1531
  %1911 = vmatprep.subr.bf16.mxu0 0
  %1912 = vmatpush1.bf16.msra.mxu0 %v1532
  %1913 = vmatprep.subr.bf16.mxu0 0
  %1914 = vmatpush1.bf16.msra.mxu0 %v1533
  %1915 = vmatprep.subr.bf16.mxu0 0
  %1916 = vmatpush1.bf16.msra.mxu0 %v1534
  %1917 = vmatprep.mubr.bf16.mxu0 %v1390
  %1918 = vmatmul.mubr.bf16.gmra.mrb[0].mxu0 %v1389
  %v1919 = vpop.f32.mrb[0].mxu0
  %v1920 = vadd.f32 %v1871, %v1919
  %v1921 = vpop.f32.mrb[0].mxu0
  %v1922 = vpop.f32.mrb[0].mxu0
  %v1923 = vadd.f32 %v1874, %v1922
  %v1924 = vpop.f32.mrb[0].mxu0
  %1925 = vmatprep.mubr.bf16.mxu0 %v1406
  %1926 = vmatmul.mubr.bf16.gmra.mrb[0].mxu0 %v1405
  %v1927 = vpop.f32.mrb[0].mxu0
  %v1928 = vadd.f32 %v1879, %v1927
  %v1929 = vpop.f32.mrb[0].mxu0
  %v1930 = vpop.f32.mrb[0].mxu0
  %v1931 = vadd.f32 %v1882, %v1930
  %v1932 = vpop.f32.mrb[0].mxu0
  %1933 = vdwg.mxu0
  %v1934 = vmax.f32 %v1920, 0.0
  %v1935 = vmax.f32 %v1923, 0.0
  %v1936 = vmax.f32 %v1928, 0.0
  %v1937 = vmax.f32 %v1931, 0.0
  %v1938 = vld [vmem:[%s8] sm:$0xff]
  %v1939 = vld [vmem:[%s8 + $0x8] sm:$0xff]
  %v1940 = vld [vmem:[%s8 + $0x10] sm:$0xff]
  %v1941 = vld [vmem:[%s8 + $0x18] sm:$0xff]
  %v1942 = vld [vmem:[%s8 + $0x20] sm:$0xff]
  %v1943 = vld [vmem:[%s8 + $0x28] sm:$0xff]
  %v1944 = vld [vmem:[%s8 + $0x30] sm:$0xff]
  %v1945 = vld [vmem:[%s8 + $0x38] sm:$0xff]
  %v1946 = vld [vmem:[%s8 + $0x40] sm:$0xff]
  %v1947 = vld [vmem:[%s8 + $0x48] sm:$0xff]
  %v1948 = vld [vmem:[%s8 + $0x50] sm:$0xff]
  %v1949 = vld [vmem:[%s8 + $0x58] sm:$0xff]
  %v1950 = vld [vmem:[%s8 + $0x60] sm:$0xff]
  %v1951 = vld [vmem:[%s8 + $0x68] sm:$0xff]
  %v1952 = vld [vmem:[%s8 + $0x70] sm:$0xff]
  %v1953 = vld [vmem:[%s8 + $0x78] sm:$0xff]
  %v1954 = vpack.c.bf16 %v1935, %v1934
  %v1955 = vpack.c.bf16 %v1937, %v1936
  %v1956 = vpack.c.bf16 %v1939, %v1938
  %v1957 = vpack.c.bf16 %v1941, %v1940
  %v1958 = vpack.c.bf16 %v1943, %v1942
  %v1959 = vpack.c.bf16 %v1945, %v1944
  %v1960 = vpack.c.bf16 %v1947, %v1946
  %v1961 = vpack.c.bf16 %v1949, %v1948
  %v1962 = vpack.c.bf16 %v1951, %v1950
  %v1963 = vpack.c.bf16 %v1953, %v1952
  %v1964 = vld [vmem:[%s9] sm:$0x1]
  %v1966 = vlaneseq
  %v1967 = vshrl.u32 %v1966, 7
  %v1968 = vsub.s32 0, %v1967
  %v1969 = vrot.slane %v1964, %v1968
  %1971 = vmatprep.subr.bf16.mxu0 0
  %1972 = vmatpush1.bf16.msra.mxu0 %v1956
  %1973 = vmatprep.subr.bf16.mxu0 0
  %1974 = vmatpush1.bf16.msra.mxu0 %v1957
  %1975 = vmatprep.subr.bf16.mxu0 0
  %1976 = vmatpush1.bf16.msra.mxu0 %v1958
  %1977 = vmatprep.subr.bf16.mxu0 0
  %1978 = vmatpush1.bf16.msra.mxu0 %v1959
  %1979 = vmatprep.subr.bf16.mxu0 0
  %1980 = vmatpush1.bf16.msra.mxu0 %v1960
  %1981 = vmatprep.subr.bf16.mxu0 0
  %1982 = vmatpush1.bf16.msra.mxu0 %v1961
  %1983 = vmatprep.subr.bf16.mxu0 0
  %1984 = vmatpush1.bf16.msra.mxu0 %v1962
  %1985 = vmatprep.subr.bf16.mxu0 0
  %1986 = vmatpush1.bf16.msra.mxu0 %v1963
  %1987 = vmatprep.subr.bf16.mxu0 0
  %1988 = vmatpush1.bf16.msra.mxu0 0
  %1989 = vmatprep.subr.bf16.mxu0 0
  %1990 = vmatpush1.bf16.msra.mxu0 0
  %1991 = vmatprep.subr.bf16.mxu0 0
  %1992 = vmatpush1.bf16.msra.mxu0 0
  %1993 = vmatprep.subr.bf16.mxu0 0
  %1994 = vmatpush1.bf16.msra.mxu0 0
  %1995 = vmatprep.subr.bf16.mxu0 0
  %1996 = vmatpush1.bf16.msra.mxu0 0
  %1997 = vmatprep.subr.bf16.mxu0 0
  %1998 = vmatpush1.bf16.msra.mxu0 0
  %1999 = vmatprep.subr.bf16.mxu0 0
  %2000 = vmatpush1.bf16.msra.mxu0 0
  %2001 = vmatprep.subr.bf16.mxu0 0
  %2002 = vmatpush1.bf16.msra.mxu0 0
  %2003 = vmatprep.mubr.bf16.mxu0 0
  %2004 = vmatmul.mubr.bf16.gmra.mrb[0].mxu0 %v1954
  %v2005 = vpop.f32.mrb[0].mxu0
  %v2006 = vadd.f32 %v1969, %v2005
  %v2007 = vpop.f32.mrb[0].mxu0
  %v2008 = vpop.f32.mrb[0].mxu0
  %v2009 = vadd.f32 %v1969, %v2008
  %v2010 = vpop.f32.mrb[0].mxu0
  %2011 = vmatprep.mubr.bf16.mxu0 0
  %2012 = vmatmul.mubr.bf16.gmra.mrb[0].mxu0 %v1955
  %v2013 = vpop.f32.mrb[0].mxu0
  %v2014 = vadd.f32 %v1969, %v2013
  %v2015 = vpop.f32.mrb[0].mxu0
  %v2016 = vpop.f32.mrb[0].mxu0
  %v2017 = vadd.f32 %v1969, %v2016
  %v2018 = vpop.f32.mrb[0].mxu0
  %2019 = vdwg.mxu0
  %v2020 = vlaneseq
  %v2021 = vand.u32 %v2020, 127
  %vm2022 = vcmp.eq.s32.totalorder %v2021, 0
  %v2023 = vxor.u32 %v2006, 2147483648
  %v2024 = vxor.u32 %v2009, 2147483648
  %v2025 = vxor.u32 %v2014, 2147483648
  %v2026 = vxor.u32 %v2017, 2147483648
  %v2027 = vmul.f32 %v2023, 1.442695
  %v2028 = vpow.pop %v2027
  %v2029 = vmul.f32 %v2024, 1.442695
  %v2030 = vpow.pop %v2029
  %v2031 = vmul.f32 %v2025, 1.442695
  %v2032 = vpow.pop %v2031
  %v2033 = vmul.f32 %v2026, 1.442695
  %v2034 = vpow.pop %v2033
  %v2035 = vadd.f32 %v2028, 1.0
  %v2036 = vadd.f32 %v2030, 1.0
  %v2037 = vadd.f32 %v2032, 1.0
  %v2038 = vadd.f32 %v2034, 1.0
  %v2039 = vrcp.pop %v2035
  %v2040 = vmul.f32 1.0, %v2039
  %v2041 = vrcp.pop %v2036
  %v2042 = vmul.f32 1.0, %v2041
  %v2043 = vrcp.pop %v2037
  %v2044 = vmul.f32 1.0, %v2043
  %v2045 = vrcp.pop %v2038
  %v2046 = vmul.f32 1.0, %v2045
  %v2047 = vsel %vm2022, %v2040, %v2006
  %v2048 = vsel %vm2022, %v2042, %v2009
  %v2049 = vsel %vm2022, %v2044, %v2014
  %v2050 = vsel %vm2022, %v2046, %v2017
  %2051 = vst [vmem:[%s10] sm:$0xff] %v2047
  %2052 = vst [vmem:[%s10 + $0x8] sm:$0xff] %v2048
  %2053 = vst [vmem:[%s10 + $0x10] sm:$0xff] %v2049
  %2054 = vst [vmem:[%s10 + $0x18] sm:$0xff] %v2050
  // Predicated region
  $region42: #{detector_forward.4} parent=0 // pred_check
    _
  $region43: #{detector_forward.4} parent=0 // pred_check_branch
    %2056 = sbr.rel (0) target = $region45
  $region44: #{detector_forward.4} parent=0 // pred_region
    _
  $region45: #{detector_forward.4} parent=0 // pred_fallthru
    _
  // Predicated region
  $region46: #{detector_forward.4} parent=0 // pred_check
    _
  $region47: #{detector_forward.4} parent=0 // pred_check_branch
    %2058 = sbr.rel (0) target = $region49
  $region48: #{detector_forward.4} parent=0 // pred_region
    _
  $region49: #{detector_forward.4} parent=0 // pred_fallthru
    _

</llo_original>
